<compile_context>
chip_gen: v5e
topology: v5e:2x2
jax: 0.10.0
libtpu: 0.0.40
codegen_flags: <defaults>
</compile_context>

<pallas_src>
import functools

import jax
import jax.numpy as jnp
from jax import lax
from jax.experimental import pallas as pl
from jax.experimental.pallas import tpu as pltpu


# ----------------------------------------------------------------------------
# small helpers
# ----------------------------------------------------------------------------
def _round_up(v, m):
    return (v + m - 1) // m * m


def _tile_h(ho, wo, depth, coutp, budget=8 << 20):
    """Largest divisor tho of ho whose per-tile VMEM footprint fits the budget."""
    best = 1
    for t in range(1, ho + 1):
        if ho % t:
            continue
        rows = t * wo
        foot = (rows * coutp * 4          # f32 matmul result / stats temp
                + rows * depth * 2        # bf16 concatenated lhs
                + 2 * rows * coutp * 2)   # double-buffered bf16 out block
        if foot <= budget:
            best = t
    return best


def _tile_rows(m, coutp, budget=4 << 20):
    """Largest multiple-of-8 divisor of m (<= 4096 rows) within a VMEM byte budget."""
    if m % 8 != 0:
        return m
    cap = min(m, 4096, max(8, budget // (coutp * 4)))
    best = 8
    t = 8
    while t <= cap:
        if m % t == 0:
            best = t
        t += 8
    return best


def _phase_split(x_nhwc, k, s, p):
    """Pad spatially and split into stride phases (space-to-batch relayout).

    Returns:
      phases: [P, N, Hq, Wq, C]
      taps:   list of (phase_index, row_offset, col_offset) static ints,
              in (kh major, kw minor) order matching the flattened weight rows.
      ho, wo: conv output spatial dims.
    """
    n, h, w, c = x_nhwc.shape
    ho = (h + 2 * p - k) // s + 1
    wo = (w + 2 * p - k) // s + 1
    xp = jnp.pad(x_nhwc, ((0, 0), (p, p), (p, p), (0, 0)))
    hp, wp = h + 2 * p, w + 2 * p
    hq = -(-hp // s)
    wq = -(-wp // s)

    phase_ids = sorted({(kh % s, kw % s) for kh in range(k) for kw in range(k)})
    phase_arrays = []
    for (a, b) in phase_ids:
        ph = xp[:, a::s, b::s, :]
        ph = jnp.pad(ph, ((0, 0), (0, hq - ph.shape[1]), (0, wq - ph.shape[2]), (0, 0)))
        phase_arrays.append(ph)
    phases = jnp.stack(phase_arrays, axis=0)          # (P, N, Hq, Wq, C)

    pid_of = {pb: i for i, pb in enumerate(phase_ids)}
    taps = [(pid_of[(kh % s, kw % s)], kh // s, kw // s)
            for kh in range(k) for kw in range(k)]
    return phases, taps, ho, wo


def _prep_weight(w_oihw, coutp, cinp=None):
    """OIHW -> [k*k*Cin(p), Cout(p)] bf16; row order is (kh, kw, cin) major-to-minor,
    matching the in-kernel channel-concatenation of tap windows."""
    cout, cin, kh, kw = w_oihw.shape
    w = jnp.transpose(w_oihw, (2, 3, 1, 0))                      # (kh, kw, cin, cout)
    if cinp is not None and cinp > cin:
        w = jnp.pad(w, ((0, 0), (0, 0), (0, cinp - cin), (0, 0)))
    cin_eff = w.shape[2]
    if coutp > cout:
        w = jnp.pad(w, ((0, 0), (0, 0), (0, 0), (0, coutp - cout)))
    return w.reshape(kh * kw * cin_eff, coutp).astype(jnp.bfloat16)


# ----------------------------------------------------------------------------
# Pass 1 kernel: conv as ONE deep-contraction MXU matmul per tile
#                (tap windows concatenated along channels in VMEM),
#                plus per-tile per-channel (sum, sum-of-squares) partials.
# ----------------------------------------------------------------------------
def _conv_stats_kernel(taps, tho, wo, x_ref, w_ref, out_ref, stats_ref):
    hb = pl.program_id(1)
    cin = x_ref.shape[-1]
    rows = tho * wo
    depth = len(taps) * cin
    row0 = hb * tho

    wins = [x_ref[ph_idx, 0, pl.ds(row0 + roh, tho), pl.ds(cow, wo), :]
            for (ph_idx, roh, cow) in taps]
    if len(wins) == 1:
        lhs = wins[0]
    elif cin % 128 == 0:
        # Lane-aligned pieces: cheap vreg placement.
        lhs = jnp.concatenate(wins, axis=-1)
    else:
        # Small / unaligned channel count: concatenate in f32 (best-supported
        # relayout path), cast back to bf16 for the MXU.
        lhs = jnp.concatenate([wv.astype(jnp.float32) for wv in wins], axis=-1)
    lhs = lhs.reshape(rows, depth).astype(jnp.bfloat16)

    acc = jnp.dot(lhs, w_ref[...], preferred_element_type=jnp.float32)

    out_ref[0] = acc.astype(out_ref.dtype)

    # BN partials from the f32 accumulator: one (2, coutp) store.
    s1 = jnp.sum(acc, axis=0, keepdims=True)
    s2 = jnp.sum(acc * acc, axis=0, keepdims=True)
    stats_ref[0] = jnp.concatenate([s1, s2], axis=0)


def _conv_pass(phases, taps, w_flat, ho, wo, out_dtype=jnp.bfloat16):
    p_, n, hq, wq, cin = phases.shape
    depth, coutp = w_flat.shape
    assert depth == len(taps) * cin, (depth, len(taps), cin)

    tho = _tile_h(ho, wo, depth, coutp)
    hb_count = ho // tho
    tile_rows = tho * wo
    m = n * ho * wo

    kernel = functools.partial(_conv_stats_kernel, tuple(taps), tho, wo)
    flops = 2 * m * depth * coutp
    bytes_accessed = (int(phases.size) * phases.dtype.itemsize
                      + int(w_flat.size) * 2
                      + m * coutp * jnp.dtype(out_dtype).itemsize
                      + n * hb_count * 2 * coutp * 4)

    conv_out, stats = pl.pallas_call(
        kernel,
        out_shape=(
            jax.ShapeDtypeStruct((n * hb_count, tile_rows, coutp), out_dtype),
            jax.ShapeDtypeStruct((n * hb_count, 2, coutp), jnp.float32),
        ),
        grid=(n, hb_count),
        in_specs=[
            # Whole phase stack for one image; constant across the inner
            # (row-tile) axis so it is DMA'd once per image.
            pl.BlockSpec((p_, 1, hq, wq, cin), lambda i, j: (0, i, 0, 0, 0)),
            pl.BlockSpec((depth, coutp), lambda i, j: (0, 0)),
        ],
        out_specs=(
            pl.BlockSpec((1, tile_rows, coutp), lambda i, j: (i * hb_count + j, 0, 0)),
            pl.BlockSpec((1, 2, coutp), lambda i, j: (i * hb_count + j, 0, 0)),
        ),
        compiler_params=pltpu.CompilerParams(
            # Megacore-shard only the batch axis so v7x cores don't re-DMA the
            # per-image phase stack for row tiles of the same image.
            dimension_semantics=("parallel", "arbitrary"),
            vmem_limit_bytes=40 * 1024 * 1024,
        ),
        cost_estimate=pl.CostEstimate(flops=int(flops), transcendentals=0,
                                      bytes_accessed=int(bytes_accessed)),
    )(phases, w_flat)
    # (n*hb, tile_rows, coutp) collapses contiguously to row-major (m, coutp).
    return conv_out.reshape(m, coutp), stats


def _bn_affine(stats, gamma, beta, m, coutp, eps):
    """Fold batch mean/var (biased, PyTorch training fwd) + gamma/beta into (a, b)."""
    s1 = jnp.sum(stats[:, 0, :], axis=0)
    s2 = jnp.sum(stats[:, 1, :], axis=0)
    mean = s1 / m
    var = jnp.maximum(s2 / m - mean * mean, 0.0)
    g = jnp.pad(gamma.astype(jnp.float32), (0, coutp - gamma.shape[0]))
    b = jnp.pad(beta.astype(jnp.float32), (0, coutp - beta.shape[0]))
    a = g * lax.rsqrt(var + eps)
    off = b - mean * a
    return a.reshape(1, coutp), off.reshape(1, coutp)


# ----------------------------------------------------------------------------
# Pass 2 kernel: y = conv*a + b  [+ res]  or  [+ res*ra + rb], optional ReLU.
# ----------------------------------------------------------------------------
def _bn_apply_kernel(res_mode, relu, conv_ref, a_ref, b_ref, *rest):
    out_ref = rest[-1]
    y = conv_ref[...].astype(jnp.float32) * a_ref[...] + b_ref[...]
    if res_mode == 1:                       # identity residual
        y = y + rest[0][...].astype(jnp.float32)
    elif res_mode == 2:                     # downsample residual with its own BN affine
        y = y + rest[0][...].astype(jnp.float32) * rest[1][...] + rest[2][...]
    if relu:
        y = jnp.maximum(y, 0.0)
    out_ref[...] = y.astype(out_ref.dtype)


def _apply_pass(conv_rows, a, b, residual=None, res_affine=None, relu=True,
                out_dtype=jnp.float32):
    m, coutp = conv_rows.shape
    tm = _tile_rows(m, coutp)
    grid = (m // tm,)

    if residual is None:
        res_mode, extra_in, extra_specs = 0, [], []
    elif res_affine is None:
        res_mode = 1
        extra_in = [residual]
        extra_specs = [pl.BlockSpec((tm, coutp), lambda i: (i, 0))]
    else:
        res_mode = 2
        ra, rb = res_affine
        extra_in = [residual, ra, rb]
        extra_specs = [pl.BlockSpec((tm, coutp), lambda i: (i, 0)),
                       pl.BlockSpec((1, coutp), lambda i: (0, 0)),
                       pl.BlockSpec((1, coutp), lambda i: (0, 0))]

    kernel = functools.partial(_bn_apply_kernel, res_mode, relu)
    nbytes = (int(conv_rows.size) * conv_rows.dtype.itemsize
              + m * coutp * jnp.dtype(out_dtype).itemsize
              + sum(int(e.size) * e.dtype.itemsize for e in extra_in)
              + 2 * coutp * 4)

    return pl.pallas_call(
        kernel,
        out_shape=jax.ShapeDtypeStruct((m, coutp), out_dtype),
        grid=grid,
        in_specs=[pl.BlockSpec((tm, coutp), lambda i: (i, 0)),
                  pl.BlockSpec((1, coutp), lambda i: (0, 0)),
                  pl.BlockSpec((1, coutp), lambda i: (0, 0))] + extra_specs,
        out_specs=pl.BlockSpec((tm, coutp), lambda i: (i, 0)),
        compiler_params=pltpu.CompilerParams(
            dimension_semantics=("parallel",),
            vmem_limit_bytes=32 * 1024 * 1024,
        ),
        cost_estimate=pl.CostEstimate(flops=int(5 * m * coutp), transcendentals=0,
                                      bytes_accessed=int(nbytes)),
    )(conv_rows, a, b, *extra_in)


# ----------------------------------------------------------------------------
# BasicBlock forward built from the Pallas passes.
# ----------------------------------------------------------------------------
def basic_block_forward(x_nchw, params, kernel_size, stride, padding, eps=1e-5):
    n, cin, h, w = x_nchw.shape
    cout = params["w1"].shape[0]
    coutp = _round_up(cout, 128)                    # lane-dense channel padding

    x_nhwc = jnp.transpose(x_nchw, (0, 2, 3, 1))
    x_bf = x_nhwc.astype(jnp.bfloat16)

    # ---- conv1 + bn1 stats ----------------------------------------------------
    ph1, taps1, ho, wo = _phase_split(x_bf, kernel_size, stride, padding)
    w1 = _prep_weight(params["w1"], coutp)
    conv1, stats1 = _conv_pass(ph1, taps1, w1, ho, wo)
    m = n * ho * wo
    a1, b1 = _bn_affine(stats1, params["g1"], params["b1"], m, coutp, eps)
    # y1 = relu(bn1(conv1)), bf16 NHWC rows — stays in row form, no NCHW trip.
    y1 = _apply_pass(conv1, a1, b1, relu=True, out_dtype=jnp.bfloat16)

    # ---- conv2 + bn2 stats (stride 1, bf16 rows fed directly) ------------------
    y1_nhwc = y1.reshape(n, ho, wo, coutp)
    ph2, taps2, ho2, wo2 = _phase_split(y1_nhwc, kernel_size, 1, padding)
    w2 = _prep_weight(params["w2"], coutp, cinp=coutp)
    conv2, stats2 = _conv_pass(ph2, taps2, w2, ho2, wo2)
    m2 = n * ho2 * wo2
    a2, b2 = _bn_affine(stats2, params["g2"], params["b2"], m2, coutp, eps)

    # ---- residual path + final fused BN2 + add + relu --------------------------
    if stride > 1:
        phd, tapsd, hod, wod = _phase_split(x_bf, 1, stride, 0)   # 1x1 stride-s conv
        wd = _prep_weight(params["wd"], coutp)
        convd, statsd = _conv_pass(phd, tapsd, wd, hod, wod)
        ad, bd = _bn_affine(statsd, params["gd"], params["bd"], n * hod * wod, coutp, eps)
        out_rows = _apply_pass(conv2, a2, b2, residual=convd, res_affine=(ad, bd),
                               relu=True, out_dtype=jnp.float32)
    else:
        if cin != cout:
            raise ValueError("stride==1 identity residual requires in_planes == out_planes")
        # bf16 identity residual (channel-padded only; no f32 copy).
        res = jnp.pad(x_bf, ((0, 0), (0, 0), (0, 0), (0, coutp - cin)))
        res = res.reshape(n * h * w, coutp)
        out_rows = _apply_pass(conv2, a2, b2, residual=res, res_affine=None,
                               relu=True, out_dtype=jnp.float32)

    out = out_rows[:, :cout].reshape(n, ho2, wo2, cout)
    return jnp.transpose(out, (0, 3, 1, 2))


# ----------------------------------------------------------------------------
# Pure-JAX reference (f32 lax.conv) to validate kernel semantics.
# ----------------------------------------------------------------------------
def _ref_conv(x, w, stride, padding):
    return lax.conv_general_dilated(
        x, w, (stride, stride), [(padding, padding)] * 2,
        dimension_numbers=("NCHW", "OIHW", "NCHW"))


def _ref_bn(y, g, b, eps=1e-5):
    mean = y.mean(axis=(0, 2, 3), keepdims=True)
    var = ((y - mean) ** 2).mean(axis=(0, 2, 3), keepdims=True)
    return (y - mean) * lax.rsqrt(var + eps) * g[None, :, None, None] + b[None, :, None, None]


def basic_block_reference(x, params, kernel_size, stride, padding):
    out = _ref_conv(x, params["w1"], stride, padding)
    out = jnp.maximum(_ref_bn(out, params["g1"], params["b1"]), 0.0)
    out = _ref_conv(out, params["w2"], 1, padding)
    out = _ref_bn(out, params["g2"], params["b2"])
    if stride > 1:
        residual = _ref_bn(_ref_conv(x, params["wd"], stride, 0), params["gd"], params["bd"])
    else:
        residual = x
    return jnp.maximum(out + residual, 0.0)


if __name__ == "__main__":
    in_planes, out_planes, kernel_size, stride, padding = 4, 8, 3, 2, 1
    key = jax.random.PRNGKey(0)
    ks = jax.random.split(key, 8)

    params = {
        "w1": 0.1 * jax.random.normal(ks[0], (out_planes, in_planes, kernel_size, kernel_size), jnp.float32),
        "w2": 0.1 * jax.random.normal(ks[1], (out_planes, out_planes, kernel_size, kernel_size), jnp.float32),
        "wd": 0.1 * jax.random.normal(ks[2], (out_planes, in_planes, 1, 1), jnp.float32),
        "g1": 1.0 + 0.1 * jax.random.normal(ks[3], (out_planes,), jnp.float32),
        "b1": 0.1 * jax.random.normal(ks[4], (out_planes,), jnp.float32),
        "g2": 1.0 + 0.1 * jax.random.normal(ks[5], (out_planes,), jnp.float32),
        "b2": 0.1 * jax.random.normal(ks[6], (out_planes,), jnp.float32),
        "gd": jnp.ones((out_planes,), jnp.float32),
        "bd": jnp.zeros((out_planes,), jnp.float32),
    }

    x = jax.random.normal(ks[7], (2, in_planes, 16, 16), jnp.float32)  # NCHW

    fwd = jax.jit(functools.partial(basic_block_forward, kernel_size=kernel_size,
                                    stride=stride, padding=padding))
    out = jax.block_until_ready(fwd(x, params))

    ref = basic_block_reference(x, params, kernel_size, stride, padding)
    assert out.shape == ref.shape == (2, out_planes, 8, 8), (out.shape, ref.shape)
    err_max = float(jnp.max(jnp.abs(out - ref)))
    err_mean = float(jnp.mean(jnp.abs(out - ref)))
    # bf16 MXU inputs and bf16 conv intermediates vs f32 reference: small slack.
    assert err_max < 0.15 and err_mean < 0.03, (err_max, err_mean)

    print("KERNEL_OK")
</pallas_src>

<mosaic_0001>
module attributes {stable_mosaic.version = 11 : i64} {
  func.func @_conv_stats_kernel(%arg0: i32, %arg1: i32, %arg2: memref<1x1x8x8x4xbf16, #tpu.memory_space<vmem>>, %arg3: memref<4x128xbf16, #tpu.memory_space<vmem>>, %arg4: memref<1x64x128xbf16, #tpu.memory_space<vmem>>, %arg5: memref<1x2x128xf32, #tpu.memory_space<vmem>>) attributes {dimension_semantics = [#tpu.dimension_semantics<parallel>, #tpu.dimension_semantics<arbitrary>], iteration_bounds = array<i64: 2, 1>, scalar_prefetch = 0 : i64, scratch_operands = 0 : i64, tpu.core_type = #tpu.core_type<tc>, window_params = [{transform_indices = @transform_0, window_bounds = array<i64: 1, 1, 8, 8, 4>}, {pipeline_mode = #tpu.pipeline_mode<synchronous>, transform_indices = @transform_1, window_bounds = array<i64: 4, 128>}, {transform_indices = @transform_2, window_bounds = array<i64: 1, 64, 128>}, {transform_indices = @transform_3, window_bounds = array<i64: 1, 2, 128>}]} {
    %c8_i32 = arith.constant 8 : i32
    %0 = arith.muli %arg1, %c8_i32 : i32
    %c0_i32 = arith.constant 0 : i32
    %1 = arith.addi %0, %c0_i32 : i32
    %c0 = arith.constant 0 : index
    %c0_0 = arith.constant 0 : index
    %2 = arith.index_cast %1 : i32 to index
    %c0_1 = arith.constant 0 : index
    %c0_2 = arith.constant 0 : index
    %3 = vector.load %arg2[%c0, %c0_0, %2, %c0_1, %c0_2] : memref<1x1x8x8x4xbf16, #tpu.memory_space<vmem>>, vector<1x1x8x8x4xbf16>
    %4 = vector.shape_cast %3 : vector<1x1x8x8x4xbf16> to vector<8x8x4xbf16>
    %5 = vector.shape_cast %4 : vector<8x8x4xbf16> to vector<64x4xbf16>
    %c0_3 = arith.constant 0 : index
    %c0_4 = arith.constant 0 : index
    %6 = vector.load %arg3[%c0_3, %c0_4] : memref<4x128xbf16, #tpu.memory_space<vmem>>, vector<4x128xbf16>
    %cst = arith.constant dense<0.000000e+00> : vector<64x128xf32>
    %7 = tpu.matmul %5, %6, %cst {dimension_numbers = #tpu.dot_dimension_numbers<[1], [0], [0], [1], [0, 0, 1, 1], [], []>} : vector<64x4xbf16>, vector<4x128xbf16>, vector<64x128xf32> -> vector<64x128xf32>
    %8 = arith.truncf %7 : vector<64x128xf32> to vector<64x128xbf16>
    %c0_5 = arith.constant 0 : index
    %c0_6 = arith.constant 0 : index
    %c0_7 = arith.constant 0 : index
    %9 = vector.load %arg4[%c0_5, %c0_6, %c0_7] : memref<1x64x128xbf16, #tpu.memory_space<vmem>>, vector<1x64x128xbf16>
    %10 = vector.shape_cast %9 : vector<1x64x128xbf16> to vector<64x128xbf16>
    %11 = vector.shape_cast %8 : vector<64x128xbf16> to vector<1x64x128xbf16>
    tpu.vector_store %arg4[%c0_5, %c0_6, %c0_7], %11 {strides = array<i32>} : memref<1x64x128xbf16, #tpu.memory_space<vmem>>, vector<1x64x128xbf16>,
    %cst_8 = arith.constant dense<0.000000e+00> : vector<128xf32>
    %12 = vector.multi_reduction <add>, %7, %cst_8 [0] : vector<64x128xf32> to vector<128xf32>
    %13 = vector.shape_cast %12 : vector<128xf32> to vector<1x128xf32>
    %14 = arith.mulf %7, %7 : vector<64x128xf32>
    %cst_9 = arith.constant dense<0.000000e+00> : vector<128xf32>
    %15 = vector.multi_reduction <add>, %14, %cst_9 [0] : vector<64x128xf32> to vector<128xf32>
    %16 = vector.shape_cast %15 : vector<128xf32> to vector<1x128xf32>
    %17 = tpu.concatenate %13, %16 in 0 : vector<1x128xf32>, vector<1x128xf32> -> vector<2x128xf32>
    %c0_10 = arith.constant 0 : index
    %c0_11 = arith.constant 0 : index
    %c0_12 = arith.constant 0 : index
    %18 = vector.load %arg5[%c0_10, %c0_11, %c0_12] : memref<1x2x128xf32, #tpu.memory_space<vmem>>, vector<1x2x128xf32>
    %19 = vector.shape_cast %18 : vector<1x2x128xf32> to vector<2x128xf32>
    %20 = vector.shape_cast %17 : vector<2x128xf32> to vector<1x2x128xf32>
    tpu.vector_store %arg5[%c0_10, %c0_11, %c0_12], %20 {strides = array<i32>} : memref<1x2x128xf32, #tpu.memory_space<vmem>>, vector<1x2x128xf32>,
    return
  }
  func.func @transform_0(%arg0: i32, %arg1: i32) -> (i32, i32, i32, i32, i32) {
    %c0_i32 = arith.constant 0 : i32
    %c0_i32_0 = arith.constant 0 : i32
    %c0_i32_1 = arith.constant 0 : i32
    %c0_i32_2 = arith.constant 0 : i32
    %c0_i32_3 = arith.constant 0 : i32
    return %c0_i32, %arg0, %c0_i32_0, %c0_i32_1, %c0_i32_2 : i32, i32, i32, i32, i32
  }
  func.func @transform_1(%arg0: i32, %arg1: i32) -> (i32, i32) {
    %c0_i32 = arith.constant 0 : i32
    %c0_i32_0 = arith.constant 0 : i32
    %c0_i32_1 = arith.constant 0 : i32
    return %c0_i32, %c0_i32_0 : i32, i32
  }
  func.func @transform_2(%arg0: i32, %arg1: i32) -> (i32, i32, i32) {
    %c1_i32 = arith.constant 1 : i32
    %0 = arith.muli %arg0, %c1_i32 : i32
    %1 = arith.addi %0, %arg1 : i32
    %c0_i32 = arith.constant 0 : i32
    %c0_i32_0 = arith.constant 0 : i32
    %c0_i32_1 = arith.constant 0 : i32
    return %1, %c0_i32, %c0_i32_0 : i32, i32, i32
  }
  func.func @transform_3(%arg0: i32, %arg1: i32) -> (i32, i32, i32) {
    %c1_i32 = arith.constant 1 : i32
    %0 = arith.muli %arg0, %c1_i32 : i32
    %1 = arith.addi %0, %arg1 : i32
    %c0_i32 = arith.constant 0 : i32
    %c0_i32_0 = arith.constant 0 : i32
    %c0_i32_1 = arith.constant 0 : i32
    return %1, %c0_i32, %c0_i32_0 : i32, i32, i32
  }
}

module attributes {stable_mosaic.version = 11 : i64} {
  func.func @_conv_stats_kernel(%arg0: i32, %arg1: i32, %arg2: memref<4x1x9x9x4xbf16, #tpu.memory_space<vmem>>, %arg3: memref<36x128xbf16, #tpu.memory_space<vmem>>, %arg4: memref<1x64x128xbf16, #tpu.memory_space<vmem>>, %arg5: memref<1x2x128xf32, #tpu.memory_space<vmem>>) attributes {dimension_semantics = [#tpu.dimension_semantics<parallel>, #tpu.dimension_semantics<arbitrary>], iteration_bounds = array<i64: 2, 1>, scalar_prefetch = 0 : i64, scratch_operands = 0 : i64, tpu.core_type = #tpu.core_type<tc>, window_params = [{transform_indices = @transform_0, window_bounds = array<i64: 4, 1, 9, 9, 4>}, {pipeline_mode = #tpu.pipeline_mode<synchronous>, transform_indices = @transform_1, window_bounds = array<i64: 36, 128>}, {transform_indices = @transform_2, window_bounds = array<i64: 1, 64, 128>}, {transform_indices = @transform_3, window_bounds = array<i64: 1, 2, 128>}]} {
    %c8_i32 = arith.constant 8 : i32
    %0 = arith.muli %arg1, %c8_i32 : i32
    %c0_i32 = arith.constant 0 : i32
    %1 = arith.addi %0, %c0_i32 : i32
    %c0 = arith.constant 0 : index
    %c0_0 = arith.constant 0 : index
    %2 = arith.index_cast %1 : i32 to index
    %c0_1 = arith.constant 0 : index
    %c0_2 = arith.constant 0 : index
    %3 = vector.load %arg2[%c0, %c0_0, %2, %c0_1, %c0_2] : memref<4x1x9x9x4xbf16, #tpu.memory_space<vmem>>, vector<1x1x8x8x4xbf16>
    %4 = vector.shape_cast %3 : vector<1x1x8x8x4xbf16> to vector<8x8x4xbf16>
    %c0_i32_3 = arith.constant 0 : i32
    %5 = arith.addi %0, %c0_i32_3 : i32
    %c1 = arith.constant 1 : index
    %c0_4 = arith.constant 0 : index
    %6 = arith.index_cast %5 : i32 to index
    %c0_5 = arith.constant 0 : index
    %c0_6 = arith.constant 0 : index
    %7 = vector.load %arg2[%c1, %c0_4, %6, %c0_5, %c0_6] : memref<4x1x9x9x4xbf16, #tpu.memory_space<vmem>>, vector<1x1x8x8x4xbf16>
    %8 = vector.shape_cast %7 : vector<1x1x8x8x4xbf16> to vector<8x8x4xbf16>
    %c0_i32_7 = arith.constant 0 : i32
    %9 = arith.addi %0, %c0_i32_7 : i32
    %c0_8 = arith.constant 0 : index
    %c0_9 = arith.constant 0 : index
    %10 = arith.index_cast %9 : i32 to index
    %c1_10 = arith.constant 1 : index
    %c0_11 = arith.constant 0 : index
    %11 = vector.load %arg2[%c0_8, %c0_9, %10, %c1_10, %c0_11] : memref<4x1x9x9x4xbf16, #tpu.memory_space<vmem>>, vector<1x1x8x8x4xbf16>
    %12 = vector.shape_cast %11 : vector<1x1x8x8x4xbf16> to vector<8x8x4xbf16>
    %c0_i32_12 = arith.constant 0 : i32
    %13 = arith.addi %0, %c0_i32_12 : i32
    %c2 = arith.constant 2 : index
    %c0_13 = arith.constant 0 : index
    %14 = arith.index_cast %13 : i32 to index
    %c0_14 = arith.constant 0 : index
    %c0_15 = arith.constant 0 : index
    %15 = vector.load %arg2[%c2, %c0_13, %14, %c0_14, %c0_15] : memref<4x1x9x9x4xbf16, #tpu.memory_space<vmem>>, vector<1x1x8x8x4xbf16>
    %16 = vector.shape_cast %15 : vector<1x1x8x8x4xbf16> to vector<8x8x4xbf16>
    %c0_i32_16 = arith.constant 0 : i32
    %17 = arith.addi %0, %c0_i32_16 : i32
    %c3 = arith.constant 3 : index
    %c0_17 = arith.constant 0 : index
    %18 = arith.index_cast %17 : i32 to index
    %c0_18 = arith.constant 0 : index
    %c0_19 = arith.constant 0 : index
    %19 = vector.load %arg2[%c3, %c0_17, %18, %c0_18, %c0_19] : memref<4x1x9x9x4xbf16, #tpu.memory_space<vmem>>, vector<1x1x8x8x4xbf16>
    %20 = vector.shape_cast %19 : vector<1x1x8x8x4xbf16> to vector<8x8x4xbf16>
    %c0_i32_20 = arith.constant 0 : i32
    %21 = arith.addi %0, %c0_i32_20 : i32
    %c2_21 = arith.constant 2 : index
    %c0_22 = arith.constant 0 : index
    %22 = arith.index_cast %21 : i32 to index
    %c1_23 = arith.constant 1 : index
    %c0_24 = arith.constant 0 : index
    %23 = vector.load %arg2[%c2_21, %c0_22, %22, %c1_23, %c0_24] : memref<4x1x9x9x4xbf16, #tpu.memory_space<vmem>>, vector<1x1x8x8x4xbf16>
    %24 = vector.shape_cast %23 : vector<1x1x8x8x4xbf16> to vector<8x8x4xbf16>
    %c1_i32 = arith.constant 1 : i32
    %25 = arith.addi %0, %c1_i32 : i32
    %c0_25 = arith.constant 0 : index
    %c0_26 = arith.constant 0 : index
    %26 = arith.index_cast %25 : i32 to index
    %c0_27 = arith.constant 0 : index
    %c0_28 = arith.constant 0 : index
    %27 = vector.load %arg2[%c0_25, %c0_26, %26, %c0_27, %c0_28] : memref<4x1x9x9x4xbf16, #tpu.memory_space<vmem>>, vector<1x1x8x8x4xbf16>
    %28 = vector.shape_cast %27 : vector<1x1x8x8x4xbf16> to vector<8x8x4xbf16>
    %c1_i32_29 = arith.constant 1 : i32
    %29 = arith.addi %0, %c1_i32_29 : i32
    %c1_30 = arith.constant 1 : index
    %c0_31 = arith.constant 0 : index
    %30 = arith.index_cast %29 : i32 to index
    %c0_32 = arith.constant 0 : index
    %c0_33 = arith.constant 0 : index
    %31 = vector.load %arg2[%c1_30, %c0_31, %30, %c0_32, %c0_33] : memref<4x1x9x9x4xbf16, #tpu.memory_space<vmem>>, vector<1x1x8x8x4xbf16>
    %32 = vector.shape_cast %31 : vector<1x1x8x8x4xbf16> to vector<8x8x4xbf16>
    %c1_i32_34 = arith.constant 1 : i32
    %33 = arith.addi %0, %c1_i32_34 : i32
    %c0_35 = arith.constant 0 : index
    %c0_36 = arith.constant 0 : index
    %34 = arith.index_cast %33 : i32 to index
    %c1_37 = arith.constant 1 : index
    %c0_38 = arith.constant 0 : index
    %35 = vector.load %arg2[%c0_35, %c0_36, %34, %c1_37, %c0_38] : memref<4x1x9x9x4xbf16, #tpu.memory_space<vmem>>, vector<1x1x8x8x4xbf16>
    %36 = vector.shape_cast %35 : vector<1x1x8x8x4xbf16> to vector<8x8x4xbf16>
    %37 = arith.extf %4 : vector<8x8x4xbf16> to vector<8x8x4xf32>
    %38 = arith.extf %8 : vector<8x8x4xbf16> to vector<8x8x4xf32>
    %39 = arith.extf %12 : vector<8x8x4xbf16> to vector<8x8x4xf32>
    %40 = arith.extf %16 : vector<8x8x4xbf16> to vector<8x8x4xf32>
    %41 = arith.extf %20 : vector<8x8x4xbf16> to vector<8x8x4xf32>
    %42 = arith.extf %24 : vector<8x8x4xbf16> to vector<8x8x4xf32>
    %43 = arith.extf %28 : vector<8x8x4xbf16> to vector<8x8x4xf32>
    %44 = arith.extf %32 : vector<8x8x4xbf16> to vector<8x8x4xf32>
    %45 = arith.extf %36 : vector<8x8x4xbf16> to vector<8x8x4xf32>
    %46 = tpu.concatenate %37, %38, %39, %40, %41, %42, %43, %44, %45 in 2 : vector<8x8x4xf32>, vector<8x8x4xf32>, vector<8x8x4xf32>, vector<8x8x4xf32>, vector<8x8x4xf32>, vector<8x8x4xf32>, vector<8x8x4xf32>, vector<8x8x4xf32>, vector<8x8x4xf32> -> vector<8x8x36xf32>
    %47 = vector.shape_cast %46 : vector<8x8x36xf32> to vector<64x36xf32>
    %48 = arith.truncf %47 : vector<64x36xf32> to vector<64x36xbf16>
    %c0_39 = arith.constant 0 : index
    %c0_40 = arith.constant 0 : index
    %49 = vector.load %arg3[%c0_39, %c0_40] : memref<36x128xbf16, #tpu.memory_space<vmem>>, vector<36x128xbf16>
    %cst = arith.constant dense<0.000000e+00> : vector<64x128xf32>
    %50 = tpu.matmul %48, %49, %cst {dimension_numbers = #tpu.dot_dimension_numbers<[1], [0], [0], [1], [0, 0, 1, 1], [], []>} : vector<64x36xbf16>, vector<36x128xbf16>, vector<64x128xf32> -> vector<64x128xf32>
    %51 = arith.truncf %50 : vector<64x128xf32> to vector<64x128xbf16>
    %c0_41 = arith.constant 0 : index
    %c0_42 = arith.constant 0 : index
    %c0_43 = arith.constant 0 : index
    %52 = vector.load %arg4[%c0_41, %c0_42, %c0_43] : memref<1x64x128xbf16, #tpu.memory_space<vmem>>, vector<1x64x128xbf16>
    %53 = vector.shape_cast %52 : vector<1x64x128xbf16> to vector<64x128xbf16>
    %54 = vector.shape_cast %51 : vector<64x128xbf16> to vector<1x64x128xbf16>
    tpu.vector_store %arg4[%c0_41, %c0_42, %c0_43], %54 {strides = array<i32>} : memref<1x64x128xbf16, #tpu.memory_space<vmem>>, vector<1x64x128xbf16>,
    %cst_44 = arith.constant dense<0.000000e+00> : vector<128xf32>
    %55 = vector.multi_reduction <add>, %50, %cst_44 [0] : vector<64x128xf32> to vector<128xf32>
    %56 = vector.shape_cast %55 : vector<128xf32> to vector<1x128xf32>
    %57 = arith.mulf %50, %50 : vector<64x128xf32>
    %cst_45 = arith.constant dense<0.000000e+00> : vector<128xf32>
    %58 = vector.multi_reduction <add>, %57, %cst_45 [0] : vector<64x128xf32> to vector<128xf32>
    %59 = vector.shape_cast %58 : vector<128xf32> to vector<1x128xf32>
    %60 = tpu.concatenate %56, %59 in 0 : vector<1x128xf32>, vector<1x128xf32> -> vector<2x128xf32>
    %c0_46 = arith.constant 0 : index
    %c0_47 = arith.constant 0 : index
    %c0_48 = arith.constant 0 : index
    %61 = vector.load %arg5[%c0_46, %c0_47, %c0_48] : memref<1x2x128xf32, #tpu.memory_space<vmem>>, vector<1x2x128xf32>
    %62 = vector.shape_cast %61 : vector<1x2x128xf32> to vector<2x128xf32>
    %63 = vector.shape_cast %60 : vector<2x128xf32> to vector<1x2x128xf32>
    tpu.vector_store %arg5[%c0_46, %c0_47, %c0_48], %63 {strides = array<i32>} : memref<1x2x128xf32, #tpu.memory_space<vmem>>, vector<1x2x128xf32>,
    return
  }
  func.func @transform_0(%arg0: i32, %arg1: i32) -> (i32, i32, i32, i32, i32) {
    %c0_i32 = arith.constant 0 : i32
    %c0_i32_0 = arith.constant 0 : i32
    %c0_i32_1 = arith.constant 0 : i32
    %c0_i32_2 = arith.constant 0 : i32
    %c0_i32_3 = arith.constant 0 : i32
    return %c0_i32, %arg0, %c0_i32_0, %c0_i32_1, %c0_i32_2 : i32, i32, i32, i32, i32
  }
  func.func @transform_1(%arg0: i32, %arg1: i32) -> (i32, i32) {
    %c0_i32 = arith.constant 0 : i32
    %c0_i32_0 = arith.constant 0 : i32
    %c0_i32_1 = arith.constant 0 : i32
    return %c0_i32, %c0_i32_0 : i32, i32
  }
  func.func @transform_2(%arg0: i32, %arg1: i32) -> (i32, i32, i32) {
    %c1_i32 = arith.constant 1 : i32
    %0 = arith.muli %arg0, %c1_i32 : i32
    %1 = arith.addi %0, %arg1 : i32
    %c0_i32 = arith.constant 0 : i32
    %c0_i32_0 = arith.constant 0 : i32
    %c0_i32_1 = arith.constant 0 : i32
    return %1, %c0_i32, %c0_i32_0 : i32, i32, i32
  }
  func.func @transform_3(%arg0: i32, %arg1: i32) -> (i32, i32, i32) {
    %c1_i32 = arith.constant 1 : i32
    %0 = arith.muli %arg0, %c1_i32 : i32
    %1 = arith.addi %0, %arg1 : i32
    %c0_i32 = arith.constant 0 : i32
    %c0_i32_0 = arith.constant 0 : i32
    %c0_i32_1 = arith.constant 0 : i32
    return %1, %c0_i32, %c0_i32_0 : i32, i32, i32
  }
}

module attributes {stable_mosaic.version = 11 : i64} {
  func.func @_bn_apply_kernel(%arg0: i32, %arg1: memref<128x128xbf16, #tpu.memory_space<vmem>>, %arg2: memref<1x128xf32, #tpu.memory_space<vmem>>, %arg3: memref<1x128xf32, #tpu.memory_space<vmem>>, %arg4: memref<128x128xbf16, #tpu.memory_space<vmem>>) attributes {dimension_semantics = [#tpu.dimension_semantics<parallel>], iteration_bounds = array<i64: 1>, scalar_prefetch = 0 : i64, scratch_operands = 0 : i64, tpu.core_type = #tpu.core_type<tc>, window_params = [{transform_indices = @transform_0, window_bounds = array<i64: 128, 128>}, {pipeline_mode = #tpu.pipeline_mode<synchronous>, transform_indices = @transform_1, window_bounds = array<i64: 1, 128>}, {pipeline_mode = #tpu.pipeline_mode<synchronous>, transform_indices = @transform_2, window_bounds = array<i64: 1, 128>}, {transform_indices = @transform_3, window_bounds = array<i64: 128, 128>}]} {
    %c0 = arith.constant 0 : index
    %c0_0 = arith.constant 0 : index
    %0 = vector.load %arg1[%c0, %c0_0] : memref<128x128xbf16, #tpu.memory_space<vmem>>, vector<128x128xbf16>
    %1 = arith.extf %0 : vector<128x128xbf16> to vector<128x128xf32>
    %c0_1 = arith.constant 0 : index
    %c0_2 = arith.constant 0 : index
    %2 = vector.load %arg2[%c0_1, %c0_2] : memref<1x128xf32, #tpu.memory_space<vmem>>, vector<1x128xf32>
    %3 = vector.broadcast %2 : vector<1x128xf32> to vector<128x128xf32>
    %4 = arith.mulf %1, %3 : vector<128x128xf32>
    %c0_3 = arith.constant 0 : index
    %c0_4 = arith.constant 0 : index
    %5 = vector.load %arg3[%c0_3, %c0_4] : memref<1x128xf32, #tpu.memory_space<vmem>>, vector<1x128xf32>
    %6 = vector.broadcast %5 : vector<1x128xf32> to vector<128x128xf32>
    %7 = arith.addf %4, %6 : vector<128x128xf32>
    %cst = arith.constant 0.000000e+00 : f32
    %8 = vector.broadcast %cst : f32 to vector<128x128xf32>
    %9 = arith.maximumf %7, %8 : vector<128x128xf32>
    %10 = arith.truncf %9 : vector<128x128xf32> to vector<128x128xbf16>
    %c0_5 = arith.constant 0 : index
    %c0_6 = arith.constant 0 : index
    %11 = vector.load %arg4[%c0_5, %c0_6] : memref<128x128xbf16, #tpu.memory_space<vmem>>, vector<128x128xbf16>
    tpu.vector_store %arg4[%c0_5, %c0_6], %10 {strides = array<i32>} : memref<128x128xbf16, #tpu.memory_space<vmem>>, vector<128x128xbf16>,
    return
  }
  func.func @transform_0(%arg0: i32) -> (i32, i32) {
    %c0_i32 = arith.constant 0 : i32
    %c0_i32_0 = arith.constant 0 : i32
    return %arg0, %c0_i32 : i32, i32
  }
  func.func @transform_1(%arg0: i32) -> (i32, i32) {
    %c0_i32 = arith.constant 0 : i32
    %c0_i32_0 = arith.constant 0 : i32
    %c0_i32_1 = arith.constant 0 : i32
    return %c0_i32, %c0_i32_0 : i32, i32
  }
  func.func @transform_2(%arg0: i32) -> (i32, i32) {
    %c0_i32 = arith.constant 0 : i32
    %c0_i32_0 = arith.constant 0 : i32
    %c0_i32_1 = arith.constant 0 : i32
    return %c0_i32, %c0_i32_0 : i32, i32
  }
  func.func @transform_3(%arg0: i32) -> (i32, i32) {
    %c0_i32 = arith.constant 0 : i32
    %c0_i32_0 = arith.constant 0 : i32
    return %arg0, %c0_i32 : i32, i32
  }
}

module attributes {stable_mosaic.version = 11 : i64} {
  func.func @_conv_stats_kernel(%arg0: i32, %arg1: i32, %arg2: memref<1x1x10x10x128xbf16, #tpu.memory_space<vmem>>, %arg3: memref<1152x128xbf16, #tpu.memory_space<vmem>>, %arg4: memref<1x64x128xbf16, #tpu.memory_space<vmem>>, %arg5: memref<1x2x128xf32, #tpu.memory_space<vmem>>) attributes {dimension_semantics = [#tpu.dimension_semantics<parallel>, #tpu.dimension_semantics<arbitrary>], iteration_bounds = array<i64: 2, 1>, scalar_prefetch = 0 : i64, scratch_operands = 0 : i64, tpu.core_type = #tpu.core_type<tc>, window_params = [{transform_indices = @transform_0, window_bounds = array<i64: 1, 1, 10, 10, 128>}, {pipeline_mode = #tpu.pipeline_mode<synchronous>, transform_indices = @transform_1, window_bounds = array<i64: 1152, 128>}, {transform_indices = @transform_2, window_bounds = array<i64: 1, 64, 128>}, {transform_indices = @transform_3, window_bounds = array<i64: 1, 2, 128>}]} {
    %c8_i32 = arith.constant 8 : i32
    %0 = arith.muli %arg1, %c8_i32 : i32
    %c0_i32 = arith.constant 0 : i32
    %1 = arith.addi %0, %c0_i32 : i32
    %c0 = arith.constant 0 : index
    %c0_0 = arith.constant 0 : index
    %2 = arith.index_cast %1 : i32 to index
    %c0_1 = arith.constant 0 : index
    %c0_2 = arith.constant 0 : index
    %3 = vector.load %arg2[%c0, %c0_0, %2, %c0_1, %c0_2] : memref<1x1x10x10x128xbf16, #tpu.memory_space<vmem>>, vector<1x1x8x8x128xbf16>
    %4 = vector.shape_cast %3 : vector<1x1x8x8x128xbf16> to vector<8x8x128xbf16>
    %c0_i32_3 = arith.constant 0 : i32
    %5 = arith.addi %0, %c0_i32_3 : i32
    %c0_4 = arith.constant 0 : index
    %c0_5 = arith.constant 0 : index
    %6 = arith.index_cast %5 : i32 to index
    %c1 = arith.constant 1 : index
    %c0_6 = arith.constant 0 : index
    %7 = vector.load %arg2[%c0_4, %c0_5, %6, %c1, %c0_6] : memref<1x1x10x10x128xbf16, #tpu.memory_space<vmem>>, vector<1x1x8x8x128xbf16>
    %8 = vector.shape_cast %7 : vector<1x1x8x8x128xbf16> to vector<8x8x128xbf16>
    %c0_i32_7 = arith.constant 0 : i32
    %9 = arith.addi %0, %c0_i32_7 : i32
    %c0_8 = arith.constant 0 : index
    %c0_9 = arith.constant 0 : index
    %10 = arith.index_cast %9 : i32 to index
    %c2 = arith.constant 2 : index
    %c0_10 = arith.constant 0 : index
    %11 = vector.load %arg2[%c0_8, %c0_9, %10, %c2, %c0_10] : memref<1x1x10x10x128xbf16, #tpu.memory_space<vmem>>, vector<1x1x8x8x128xbf16>
    %12 = vector.shape_cast %11 : vector<1x1x8x8x128xbf16> to vector<8x8x128xbf16>
    %c1_i32 = arith.constant 1 : i32
    %13 = arith.addi %0, %c1_i32 : i32
    %c0_11 = arith.constant 0 : index
    %c0_12 = arith.constant 0 : index
    %14 = arith.index_cast %13 : i32 to index
    %c0_13 = arith.constant 0 : index
    %c0_14 = arith.constant 0 : index
    %15 = vector.load %arg2[%c0_11, %c0_12, %14, %c0_13, %c0_14] : memref<1x1x10x10x128xbf16, #tpu.memory_space<vmem>>, vector<1x1x8x8x128xbf16>
    %16 = vector.shape_cast %15 : vector<1x1x8x8x128xbf16> to vector<8x8x128xbf16>
    %c1_i32_15 = arith.constant 1 : i32
    %17 = arith.addi %0, %c1_i32_15 : i32
    %c0_16 = arith.constant 0 : index
    %c0_17 = arith.constant 0 : index
    %18 = arith.index_cast %17 : i32 to index
    %c1_18 = arith.constant 1 : index
    %c0_19 = arith.constant 0 : index
    %19 = vector.load %arg2[%c0_16, %c0_17, %18, %c1_18, %c0_19] : memref<1x1x10x10x128xbf16, #tpu.memory_space<vmem>>, vector<1x1x8x8x128xbf16>
    %20 = vector.shape_cast %19 : vector<1x1x8x8x128xbf16> to vector<8x8x128xbf16>
    %c1_i32_20 = arith.constant 1 : i32
    %21 = arith.addi %0, %c1_i32_20 : i32
    %c0_21 = arith.constant 0 : index
    %c0_22 = arith.constant 0 : index
    %22 = arith.index_cast %21 : i32 to index
    %c2_23 = arith.constant 2 : index
    %c0_24 = arith.constant 0 : index
    %23 = vector.load %arg2[%c0_21, %c0_22, %22, %c2_23, %c0_24] : memref<1x1x10x10x128xbf16, #tpu.memory_space<vmem>>, vector<1x1x8x8x128xbf16>
    %24 = vector.shape_cast %23 : vector<1x1x8x8x128xbf16> to vector<8x8x128xbf16>
    %c2_i32 = arith.constant 2 : i32
    %25 = arith.addi %0, %c2_i32 : i32
    %c0_25 = arith.constant 0 : index
    %c0_26 = arith.constant 0 : index
    %26 = arith.index_cast %25 : i32 to index
    %c0_27 = arith.constant 0 : index
    %c0_28 = arith.constant 0 : index
    %27 = vector.load %arg2[%c0_25, %c0_26, %26, %c0_27, %c0_28] : memref<1x1x10x10x128xbf16, #tpu.memory_space<vmem>>, vector<1x1x8x8x128xbf16>
    %28 = vector.shape_cast %27 : vector<1x1x8x8x128xbf16> to vector<8x8x128xbf16>
    %c2_i32_29 = arith.constant 2 : i32
    %29 = arith.addi %0, %c2_i32_29 : i32
    %c0_30 = arith.constant 0 : index
    %c0_31 = arith.constant 0 : index
    %30 = arith.index_cast %29 : i32 to index
    %c1_32 = arith.constant 1 : index
    %c0_33 = arith.constant 0 : index
    %31 = vector.load %arg2[%c0_30, %c0_31, %30, %c1_32, %c0_33] : memref<1x1x10x10x128xbf16, #tpu.memory_space<vmem>>, vector<1x1x8x8x128xbf16>
    %32 = vector.shape_cast %31 : vector<1x1x8x8x128xbf16> to vector<8x8x128xbf16>
    %c2_i32_34 = arith.constant 2 : i32
    %33 = arith.addi %0, %c2_i32_34 : i32
    %c0_35 = arith.constant 0 : index
    %c0_36 = arith.constant 0 : index
    %34 = arith.index_cast %33 : i32 to index
    %c2_37 = arith.constant 2 : index
    %c0_38 = arith.constant 0 : index
    %35 = vector.load %arg2[%c0_35, %c0_36, %34, %c2_37, %c0_38] : memref<1x1x10x10x128xbf16, #tpu.memory_space<vmem>>, vector<1x1x8x8x128xbf16>
    %36 = vector.shape_cast %35 : vector<1x1x8x8x128xbf16> to vector<8x8x128xbf16>
    %37 = tpu.concatenate %4, %8, %12, %16, %20, %24, %28, %32, %36 in 2 : vector<8x8x128xbf16>, vector<8x8x128xbf16>, vector<8x8x128xbf16>, vector<8x8x128xbf16>, vector<8x8x128xbf16>, vector<8x8x128xbf16>, vector<8x8x128xbf16>, vector<8x8x128xbf16>, vector<8x8x128xbf16> -> vector<8x8x1152xbf16>
    %38 = vector.shape_cast %37 : vector<8x8x1152xbf16> to vector<64x1152xbf16>
    %c0_39 = arith.constant 0 : index
    %c0_40 = arith.constant 0 : index
    %39 = vector.load %arg3[%c0_39, %c0_40] : memref<1152x128xbf16, #tpu.memory_space<vmem>>, vector<1152x128xbf16>
    %cst = arith.constant dense<0.000000e+00> : vector<64x128xf32>
    %40 = tpu.matmul %38, %39, %cst {dimension_numbers = #tpu.dot_dimension_numbers<[1], [0], [0], [1], [0, 0, 1, 1], [], []>} : vector<64x1152xbf16>, vector<1152x128xbf16>, vector<64x128xf32> -> vector<64x128xf32>
    %41 = arith.truncf %40 : vector<64x128xf32> to vector<64x128xbf16>
    %c0_41 = arith.constant 0 : index
    %c0_42 = arith.constant 0 : index
    %c0_43 = arith.constant 0 : index
    %42 = vector.load %arg4[%c0_41, %c0_42, %c0_43] : memref<1x64x128xbf16, #tpu.memory_space<vmem>>, vector<1x64x128xbf16>
    %43 = vector.shape_cast %42 : vector<1x64x128xbf16> to vector<64x128xbf16>
    %44 = vector.shape_cast %41 : vector<64x128xbf16> to vector<1x64x128xbf16>
    tpu.vector_store %arg4[%c0_41, %c0_42, %c0_43], %44 {strides = array<i32>} : memref<1x64x128xbf16, #tpu.memory_space<vmem>>, vector<1x64x128xbf16>,
    %cst_44 = arith.constant dense<0.000000e+00> : vector<128xf32>
    %45 = vector.multi_reduction <add>, %40, %cst_44 [0] : vector<64x128xf32> to vector<128xf32>
    %46 = vector.shape_cast %45 : vector<128xf32> to vector<1x128xf32>
    %47 = arith.mulf %40, %40 : vector<64x128xf32>
    %cst_45 = arith.constant dense<0.000000e+00> : vector<128xf32>
    %48 = vector.multi_reduction <add>, %47, %cst_45 [0] : vector<64x128xf32> to vector<128xf32>
    %49 = vector.shape_cast %48 : vector<128xf32> to vector<1x128xf32>
    %50 = tpu.concatenate %46, %49 in 0 : vector<1x128xf32>, vector<1x128xf32> -> vector<2x128xf32>
    %c0_46 = arith.constant 0 : index
    %c0_47 = arith.constant 0 : index
    %c0_48 = arith.constant 0 : index
    %51 = vector.load %arg5[%c0_46, %c0_47, %c0_48] : memref<1x2x128xf32, #tpu.memory_space<vmem>>, vector<1x2x128xf32>
    %52 = vector.shape_cast %51 : vector<1x2x128xf32> to vector<2x128xf32>
    %53 = vector.shape_cast %50 : vector<2x128xf32> to vector<1x2x128xf32>
    tpu.vector_store %arg5[%c0_46, %c0_47, %c0_48], %53 {strides = array<i32>} : memref<1x2x128xf32, #tpu.memory_space<vmem>>, vector<1x2x128xf32>,
    return
  }
  func.func @transform_0(%arg0: i32, %arg1: i32) -> (i32, i32, i32, i32, i32) {
    %c0_i32 = arith.constant 0 : i32
    %c0_i32_0 = arith.constant 0 : i32
    %c0_i32_1 = arith.constant 0 : i32
    %c0_i32_2 = arith.constant 0 : i32
    %c0_i32_3 = arith.constant 0 : i32
    return %c0_i32, %arg0, %c0_i32_0, %c0_i32_1, %c0_i32_2 : i32, i32, i32, i32, i32
  }
  func.func @transform_1(%arg0: i32, %arg1: i32) -> (i32, i32) {
    %c0_i32 = arith.constant 0 : i32
    %c0_i32_0 = arith.constant 0 : i32
    %c0_i32_1 = arith.constant 0 : i32
    return %c0_i32, %c0_i32_0 : i32, i32
  }
  func.func @transform_2(%arg0: i32, %arg1: i32) -> (i32, i32, i32) {
    %c1_i32 = arith.constant 1 : i32
    %0 = arith.muli %arg0, %c1_i32 : i32
    %1 = arith.addi %0, %arg1 : i32
    %c0_i32 = arith.constant 0 : i32
    %c0_i32_0 = arith.constant 0 : i32
    %c0_i32_1 = arith.constant 0 : i32
    return %1, %c0_i32, %c0_i32_0 : i32, i32, i32
  }
  func.func @transform_3(%arg0: i32, %arg1: i32) -> (i32, i32, i32) {
    %c1_i32 = arith.constant 1 : i32
    %0 = arith.muli %arg0, %c1_i32 : i32
    %1 = arith.addi %0, %arg1 : i32
    %c0_i32 = arith.constant 0 : i32
    %c0_i32_0 = arith.constant 0 : i32
    %c0_i32_1 = arith.constant 0 : i32
    return %1, %c0_i32, %c0_i32_0 : i32, i32, i32
  }
}

module attributes {stable_mosaic.version = 11 : i64} {
  func.func @_bn_apply_kernel(%arg0: i32, %arg1: memref<128x128xbf16, #tpu.memory_space<vmem>>, %arg2: memref<1x128xf32, #tpu.memory_space<vmem>>, %arg3: memref<1x128xf32, #tpu.memory_space<vmem>>, %arg4: memref<128x128xbf16, #tpu.memory_space<vmem>>, %arg5: memref<1x128xf32, #tpu.memory_space<vmem>>, %arg6: memref<1x128xf32, #tpu.memory_space<vmem>>, %arg7: memref<128x128xf32, #tpu.memory_space<vmem>>) attributes {dimension_semantics = [#tpu.dimension_semantics<parallel>], iteration_bounds = array<i64: 1>, scalar_prefetch = 0 : i64, scratch_operands = 0 : i64, tpu.core_type = #tpu.core_type<tc>, window_params = [{transform_indices = @transform_0, window_bounds = array<i64: 128, 128>}, {pipeline_mode = #tpu.pipeline_mode<synchronous>, transform_indices = @transform_1, window_bounds = array<i64: 1, 128>}, {pipeline_mode = #tpu.pipeline_mode<synchronous>, transform_indices = @transform_2, window_bounds = array<i64: 1, 128>}, {transform_indices = @transform_3, window_bounds = array<i64: 128, 128>}, {pipeline_mode = #tpu.pipeline_mode<synchronous>, transform_indices = @transform_4, window_bounds = array<i64: 1, 128>}, {pipeline_mode = #tpu.pipeline_mode<synchronous>, transform_indices = @transform_5, window_bounds = array<i64: 1, 128>}, {transform_indices = @transform_6, window_bounds = array<i64: 128, 128>}]} {
    %c0 = arith.constant 0 : index
    %c0_0 = arith.constant 0 : index
    %0 = vector.load %arg1[%c0, %c0_0] : memref<128x128xbf16, #tpu.memory_space<vmem>>, vector<128x128xbf16>
    %1 = arith.extf %0 : vector<128x128xbf16> to vector<128x128xf32>
    %c0_1 = arith.constant 0 : index
    %c0_2 = arith.constant 0 : index
    %2 = vector.load %arg2[%c0_1, %c0_2] : memref<1x128xf32, #tpu.memory_space<vmem>>, vector<1x128xf32>
    %3 = vector.broadcast %2 : vector<1x128xf32> to vector<128x128xf32>
    %4 = arith.mulf %1, %3 : vector<128x128xf32>
    %c0_3 = arith.constant 0 : index
    %c0_4 = arith.constant 0 : index
    %5 = vector.load %arg3[%c0_3, %c0_4] : memref<1x128xf32, #tpu.memory_space<vmem>>, vector<1x128xf32>
    %6 = vector.broadcast %5 : vector<1x128xf32> to vector<128x128xf32>
    %7 = arith.addf %4, %6 : vector<128x128xf32>
    %c0_5 = arith.constant 0 : index
    %c0_6 = arith.constant 0 : index
    %8 = vector.load %arg4[%c0_5, %c0_6] : memref<128x128xbf16, #tpu.memory_space<vmem>>, vector<128x128xbf16>
    %9 = arith.extf %8 : vector<128x128xbf16> to vector<128x128xf32>
    %c0_7 = arith.constant 0 : index
    %c0_8 = arith.constant 0 : index
    %10 = vector.load %arg5[%c0_7, %c0_8] : memref<1x128xf32, #tpu.memory_space<vmem>>, vector<1x128xf32>
    %11 = vector.broadcast %10 : vector<1x128xf32> to vector<128x128xf32>
    %12 = arith.mulf %9, %11 : vector<128x128xf32>
    %13 = arith.addf %7, %12 : vector<128x128xf32>
    %c0_9 = arith.constant 0 : index
    %c0_10 = arith.constant 0 : index
    %14 = vector.load %arg6[%c0_9, %c0_10] : memref<1x128xf32, #tpu.memory_space<vmem>>, vector<1x128xf32>
    %15 = vector.broadcast %14 : vector<1x128xf32> to vector<128x128xf32>
    %16 = arith.addf %13, %15 : vector<128x128xf32>
    %cst = arith.constant 0.000000e+00 : f32
    %17 = vector.broadcast %cst : f32 to vector<128x128xf32>
    %18 = arith.maximumf %16, %17 : vector<128x128xf32>
    %c0_11 = arith.constant 0 : index
    %c0_12 = arith.constant 0 : index
    %19 = vector.load %arg7[%c0_11, %c0_12] : memref<128x128xf32, #tpu.memory_space<vmem>>, vector<128x128xf32>
    tpu.vector_store %arg7[%c0_11, %c0_12], %18 {strides = array<i32>} : memref<128x128xf32, #tpu.memory_space<vmem>>, vector<128x128xf32>,
    return
  }
  func.func @transform_0(%arg0: i32) -> (i32, i32) {
    %c0_i32 = arith.constant 0 : i32
    %c0_i32_0 = arith.constant 0 : i32
    return %arg0, %c0_i32 : i32, i32
  }
  func.func @transform_1(%arg0: i32) -> (i32, i32) {
    %c0_i32 = arith.constant 0 : i32
    %c0_i32_0 = arith.constant 0 : i32
    %c0_i32_1 = arith.constant 0 : i32
    return %c0_i32, %c0_i32_0 : i32, i32
  }
  func.func @transform_2(%arg0: i32) -> (i32, i32) {
    %c0_i32 = arith.constant 0 : i32
    %c0_i32_0 = arith.constant 0 : i32
    %c0_i32_1 = arith.constant 0 : i32
    return %c0_i32, %c0_i32_0 : i32, i32
  }
  func.func @transform_3(%arg0: i32) -> (i32, i32) {
    %c0_i32 = arith.constant 0 : i32
    %c0_i32_0 = arith.constant 0 : i32
    return %arg0, %c0_i32 : i32, i32
  }
  func.func @transform_4(%arg0: i32) -> (i32, i32) {
    %c0_i32 = arith.constant 0 : i32
    %c0_i32_0 = arith.constant 0 : i32
    %c0_i32_1 = arith.constant 0 : i32
    return %c0_i32, %c0_i32_0 : i32, i32
  }
  func.func @transform_5(%arg0: i32) -> (i32, i32) {
    %c0_i32 = arith.constant 0 : i32
    %c0_i32_0 = arith.constant 0 : i32
    %c0_i32_1 = arith.constant 0 : i32
    return %c0_i32, %c0_i32_0 : i32, i32
  }
  func.func @transform_6(%arg0: i32) -> (i32, i32) {
    %c0_i32 = arith.constant 0 : i32
    %c0_i32_0 = arith.constant 0 : i32
    return %arg0, %c0_i32 : i32, i32
  }
}

</mosaic_0001>

<llo_original>
// kernel: basic_block_forward.8
$region0: #{basic_block_forward.8}
  #allocation0 [shape = 'u32[]', space=smem, size = 0x4, offset = 0x4, fixed_abs, tag = 'smem constant byte address 0x4 - core index']
  #allocation1 [shape = 'u32[72,128]{1,0:T(1,128)}', space=vmem, size = 0x9000, scoped, tag = 'internal scratch']
  %s0 = inlined_call_operand.vmem [shape: bf16[1,2,8,8,4], index: 0, kind: input, shape index: {}]
  %s1 = inlined_call_operand.vmem [shape: bf16[4,128], index: 1, kind: input, shape index: {}]
  %s2 = inlined_call_operand.vmem [shape: bf16[2,64,128], index: 2, kind: output, shape index: {0}]
  %s3 = inlined_call_operand.vmem [shape: f32[2,2,128], index: 3, kind: output, shape index: {1}]
  %4 = xla_tuple %s2, %s3
  %s5 = sld [smem:[#allocation0]]
  $region49: #{basic_block_forward.8} parent=0
    _
  %s7 = ssub.s32 1, %s5
  %s8 = scalar_select 0, %s7, %s5
  loop: start=0, step=1, limit=4
  $region2: #{basic_block_forward.8} parent=0 // loop_pre_header
    _
  $region3: #{basic_block_forward.8} parent=0 // loop_header
    %s10 = sphi 0, %s14
    %p11 = scmp.ge.s32.totalorder %s10, 4
    %s17 = sphi 0, %s29
    %s18 = sphi 0, %s25
    %s19 = sphi 0, %s17
    %s20 = sphi 0, %s18
    %s21 = sphi 0, %s19
    %s22 = sphi 0, %s20
    %s32 = sphi 0, %s34
    %s35 = sphi 0, %s32
    %s36 = sphi 0, %s35
    %s52 = sphi 0, %s36
    %s56 = sphi 0, %s56
    %s58 = sphi 0, %s56
    %s59 = sphi 0, %s58
    %s73 = sphi 0, %s59
    %s81 = sphi 0, %s83
    %s84 = sphi 0, %s81
    %s85 = sphi 0, %s84
    %s101 = sphi 0, %s85
    %s109 = sphi 0, %s111
    %s112 = sphi 0, %s109
    %s113 = sphi 0, %s112
    %s129 = sphi 0, %s113
  $region4: #{basic_block_forward.8} parent=0 // loop_header_branch
    %13 = sbr.rel (%p11) target = $region8
  $region5: #{basic_block_forward.8} parent=0 // loop_body
    %s15 = ssub.s32 %s10, 1
    %s16 = ssub.s32 %s10, 2
    %s23 = sadd.s32 1, %s18
    %p24 = scmp.ge.s32.totalorder %s23, 1
    %s25 = scalar_select %p24, 0, %s23
    %s26 = sadd.s32 1, %s17
    %s27 = scalar_select %p24, %s26, %s17
    %p28 = scmp.ge.s32.totalorder %s27, 2
    %s29 = scalar_select %p28, 0, %s27
    %s30 = ssub.s32 %s17, %s29
    %p31 = scmp.eq.s32.totalorder %s30, 0
    %s33 = sadd.s32 %s32, 1
    %s34 = scalar_select %p31, %s32, %s33
    %p37 = pneg %p31
    %p38 = scmp.eq.s32.totalorder %s10, 1
    %p39 = por %p37, %p38
    %p40 = scmp.ne.s32.totalorder %s32, %s35
    %p41 = scmp.eq.s32.totalorder %s10, 0
    %p42 = por %p40, %p41
    %p43 = scmp.ne.s32.totalorder %s32, %s35
    %p44 = scmp.eq.s32.totalorder %s15, 1
    %p45 = por %p43, %p44
    %p46 = scmp.ne.s32.totalorder %s35, %s36
    %p47 = scmp.eq.s32.totalorder %s15, 0
    %p48 = por %p46, %p47
    %p49 = scmp.ne.s32.totalorder %s35, %s36
    %p50 = scmp.eq.s32.totalorder %s16, 1
    %p51 = por %p49, %p50
    %p53 = scmp.ne.s32.totalorder %s36, %s52
    %p54 = scmp.eq.s32.totalorder %s16, 0
    %p55 = por %p53, %p54
    %s57 = sadd.s32 %s56, 1
    %p60 = scmp.eq.s32.totalorder %s10, 1
    %p61 = scmp.ne.s32.totalorder %s56, %s58
    %p62 = scmp.eq.s32.totalorder %s10, 0
    %p63 = por %p61, %p62
    %p64 = scmp.ne.s32.totalorder %s56, %s58
    %p65 = scmp.eq.s32.totalorder %s15, 1
    %p66 = por %p64, %p65
    %p67 = scmp.ne.s32.totalorder %s58, %s59
    %p68 = scmp.eq.s32.totalorder %s15, 0
    %p69 = por %p67, %p68
    %p70 = scmp.ne.s32.totalorder %s58, %s59
    %p71 = scmp.eq.s32.totalorder %s16, 1
    %p72 = por %p70, %p71
    %p74 = scmp.ne.s32.totalorder %s59, %s73
    %p75 = scmp.eq.s32.totalorder %s16, 0
    %p76 = por %p74, %p75
    %s77 = sadd.s32 %s17, %s18
    %s78 = sadd.s32 %s29, %s25
    %s79 = ssub.s32 %s77, %s78
    %p80 = scmp.eq.s32.totalorder %s79, 0
    %s82 = sadd.s32 %s81, 1
    %s83 = scalar_select %p80, %s81, %s82
    %p86 = pneg %p80
    %p87 = scmp.eq.s32.totalorder %s10, 1
    %p88 = por %p86, %p87
    %p89 = scmp.ne.s32.totalorder %s81, %s84
    %p90 = scmp.eq.s32.totalorder %s10, 0
    %p91 = por %p89, %p90
    %p92 = scmp.ne.s32.totalorder %s81, %s84
    %p93 = scmp.eq.s32.totalorder %s15, 1
    %p94 = por %p92, %p93
    %p95 = scmp.ne.s32.totalorder %s84, %s85
    %p96 = scmp.eq.s32.totalorder %s15, 0
    %p97 = por %p95, %p96
    %p98 = scmp.ne.s32.totalorder %s84, %s85
    %p99 = scmp.eq.s32.totalorder %s16, 1
    %p100 = por %p98, %p99
    %p102 = scmp.ne.s32.totalorder %s85, %s101
    %p103 = scmp.eq.s32.totalorder %s16, 0
    %p104 = por %p102, %p103
    %s105 = sadd.s32 %s17, %s18
    %s106 = sadd.s32 %s29, %s25
    %s107 = ssub.s32 %s105, %s106
    %p108 = scmp.eq.s32.totalorder %s107, 0
    %s110 = sadd.s32 %s109, 1
    %s111 = scalar_select %p108, %s109, %s110
    %p114 = pneg %p108
    %p115 = scmp.eq.s32.totalorder %s10, 1
    %p116 = por %p114, %p115
    %p117 = scmp.ne.s32.totalorder %s109, %s112
    %p118 = scmp.eq.s32.totalorder %s10, 0
    %p119 = por %p117, %p118
    %p120 = scmp.ne.s32.totalorder %s109, %s112
    %p121 = scmp.eq.s32.totalorder %s15, 1
    %p122 = por %p120, %p121
    %p123 = scmp.ne.s32.totalorder %s112, %s113
    %p124 = scmp.eq.s32.totalorder %s15, 0
    %p125 = por %p123, %p124
    %p126 = scmp.ne.s32.totalorder %s112, %s113
    %p127 = scmp.eq.s32.totalorder %s16, 1
    %p128 = por %p126, %p127
    %p130 = scmp.ne.s32.totalorder %s113, %s129
    %p131 = scmp.eq.s32.totalorder %s16, 0
    %p132 = por %p130, %p131
    %p133 = scmp.le.s32.totalorder 1, %s10
    %p134 = scmp.lt.s32.totalorder %s10, 3
    %p135 = pnand %p133, %p134
    %p136 = pneg %p135
    // Predicated region
    $region9: #{basic_block_forward.8} parent=5 // pred_check
      _
    $region10: #{basic_block_forward.8} parent=5 // pred_check_branch
      %138 = sbr.rel (%p135) target = $region12
    $region11: #{basic_block_forward.8} parent=5 // pred_region
      %s139 = ssub.s32 %s10, 1
      // Predicated region
      $region13: #{basic_block_forward.8} parent=11 // pred_check
        %p140 = pneg %p69
      $region14: #{basic_block_forward.8} parent=11 // pred_check_branch
        %142 = sbr.rel (%p140) target = $region16
      $region15: #{basic_block_forward.8} parent=11 // pred_region
        _
      $region16: #{basic_block_forward.8} parent=11 // pred_fallthru
        _
    $region12: #{basic_block_forward.8} parent=5 // pred_fallthru
      _
    %p143 = scmp.lt.s32.totalorder %s10, 2
    // Predicated region
    $region17: #{basic_block_forward.8} parent=5 // pred_check
      %p144 = pneg %p143
    $region18: #{basic_block_forward.8} parent=5 // pred_check_branch
      %146 = sbr.rel (%p144) target = $region20
    $region19: #{basic_block_forward.8} parent=5 // pred_region
      // Predicated region
      $region21: #{basic_block_forward.8} parent=19 // pred_check
        %p147 = pneg %p42
      $region22: #{basic_block_forward.8} parent=19 // pred_check_branch
        %149 = sbr.rel (%p147) target = $region24
      $region23: #{basic_block_forward.8} parent=19 // pred_region
        %p150 = scmp.lt.s32.totalorder %s17, 1
        %s151 = scalar_select %p150, %s17, 1
        %s152 = smul.addr %s151, 8
        %s153 = smul.addr %s152, 4
        %s154 = scalar_lea.vmem %s0, %s153
      $region24: #{basic_block_forward.8} parent=19 // pred_fallthru
        _
    $region20: #{basic_block_forward.8} parent=5 // pred_fallthru
      _
    %p155 = scmp.le.s32.totalorder 1, %s10
    %p156 = scmp.lt.s32.totalorder %s10, 3
    %p157 = pnand %p155, %p156
    %p158 = pneg %p157
    // Predicated region
    $region25: #{basic_block_forward.8} parent=5 // pred_check
      _
    $region26: #{basic_block_forward.8} parent=5 // pred_check_branch
      %160 = sbr.rel (%p157) target = $region28
    $region27: #{basic_block_forward.8} parent=5 // pred_region
      %s161 = ssub.s32 %s10, 1
      %p162 = scmp.lt.s32.totalorder %s19, 1
      %s163 = scalar_select %p162, %s19, 1
      %s164 = smul.addr %s163, 8
      %s165 = smul.addr %s164, 4
      %s166 = scalar_lea.vmem %s0, %s165
      %p167 = pneg %p48
      %p168 = pneg %p45
      %p169 = pneg %p69
      %p170 = pneg %p66
      %p171 = pneg %p97
      %p172 = pneg %p94
      %s173 = sadd.s32 %s19, %s20
      %p174 = scmp.lt.s32.totalorder %s173, 1
      %s175 = scalar_select %p174, %s173, 1
      %s176 = smul.addr %s175, 8
      %s177 = smul.addr %s176, 4
      %s178 = scalar_lea.vmem %s2, %s177
      %p179 = pneg %p125
      %p180 = pneg %p122
      %s181 = sadd.s32 %s19, %s20
      %p182 = scmp.lt.s32.totalorder %s181, 1
      %s183 = scalar_select %p182, %s181, 1
      %s184 = smul.addr %s183, 2
      %s185 = scalar_lea.vmem %s3, %s184
      %p186 = scmp.lt.s32.totalorder %s19, 1
      %s187 = scalar_select %p186, %s19, 1
      %s188 = smul.addr %s187, 8
      %s189 = smul.addr %s188, 4
      %s190 = scalar_lea.vmem %s0, %s189
      %s191 = sadd.s32 %s19, %s20
      %p192 = scmp.lt.s32.totalorder %s191, 1
      %s193 = scalar_select %p192, %s191, 1
      %s194 = smul.addr %s193, 8
      %s195 = smul.addr %s194, 4
      %s196 = scalar_lea.vmem %s2, %s195
      %s197 = sadd.s32 %s19, %s20
      %s198 = sadd.s32 %s19, %s20
      %p199 = scmp.lt.s32.totalorder %s198, 1
      %s200 = scalar_select %p199, %s198, 1
      %s201 = smul.addr %s200, 2
      %s202 = scalar_lea.vmem %s3, %s201
      %s203 = sadd.s32 %s19, %s20
      %s205 = smul.u32 %s20, 8
      %s206 = smul.addr %s205, 4
      %s207 = scalar_lea.vmem %s190, %s206
      %v208 = vld [vmem:[%s207] sm:$0xf]
      %v209 = vld [vmem:[%s207 + $0x4] sm:$0xf]
      %v210 = vld [vmem:[%s207 + $0x8] sm:$0xf]
      %v211 = vld [vmem:[%s207 + $0xc] sm:$0xf]
      %v212 = vld [vmem:[%s207 + $0x10] sm:$0xf]
      %v213 = vld [vmem:[%s207 + $0x14] sm:$0xf]
      %v214 = vld [vmem:[%s207 + $0x18] sm:$0xf]
      %v215 = vld [vmem:[%s207 + $0x1c] sm:$0xf]
      %v216 = vld [vmem:[%s1] sm:$0x3]
      %v225 = vunpack.c.l.b16 %v208
      %v226 = vunpack.c.l.b16 %v209
      %v227 = vunpack.c.l.b16 %v210
      %v228 = vunpack.c.l.b16 %v211
      %v229 = vunpack.c.l.b16 %v212
      %v230 = vunpack.c.l.b16 %v213
      %v231 = vunpack.c.l.b16 %v214
      %v232 = vunpack.c.l.b16 %v215
      %v233 = vpack.c.b16 %v226, %v225
      %v234 = vpack.c.b16 %v228, %v227
      %v235 = vpack.c.b16 %v230, %v229
      %v236 = vpack.c.b16 %v232, %v231
      %vm237 = vcmask 31744
      %v239 = vsel %vm237, %v233, 0
      %v242 = vsel %vm237, %v234, 0
      %v245 = vsel %vm237, %v235, 0
      %v248 = vsel %vm237, %v236, 0
      %vm250 = vcmask 1041408
      %v252 = vsel %vm250, %v216, 0
      %254 = vmatpush.bf16.msra.mxu0 0
      %255 = vmatpush.bf16.msra.mxu0 0
      %256 = vmatpush.bf16.msra.mxu0 0
      %257 = vmatpush.bf16.msra.mxu0 0
      %258 = vmatpush.bf16.msra.mxu0 0
      %259 = vmatpush.bf16.msra.mxu0 0
      %260 = vmatpush.bf16.msra.mxu0 0
      %261 = vmatpush.bf16.msra.mxu0 %v252
      %262 = vmatmul.bf16.gmra.mxu0 %v239
      %v263 = vpop.f32.mrf.mxu0
      %v264 = vadd.f32 0.0, %v263
      %v265 = vpop.f32.mrf.mxu0
      %v266 = vadd.f32 0.0, %v265
      %267 = vmatmul.bf16.gmra.mxu0 %v242
      %v268 = vpop.f32.mrf.mxu0
      %v269 = vadd.f32 0.0, %v268
      %v270 = vpop.f32.mrf.mxu0
      %v271 = vadd.f32 0.0, %v270
      %272 = vmatmul.bf16.gmra.mxu0 %v245
      %v273 = vpop.f32.mrf.mxu0
      %v274 = vadd.f32 0.0, %v273
      %v275 = vpop.f32.mrf.mxu0
      %v276 = vadd.f32 0.0, %v275
      %277 = vmatmul.bf16.gmra.mxu0 %v248
      %v278 = vpop.f32.mrf.mxu0
      %v279 = vadd.f32 0.0, %v278
      %v280 = vpop.f32.mrf.mxu0
      %v281 = vadd.f32 0.0, %v280
      %282 = vdwg.mxu0
      %v283 = vpack.c.bf16 %v264, %v264
      %v284 = vpack.c.bf16 %v266, %v266
      %v285 = vpack.c.bf16 %v269, %v269
      %v286 = vpack.c.bf16 %v271, %v271
      %v287 = vpack.c.bf16 %v274, %v274
      %v288 = vpack.c.bf16 %v276, %v276
      %v289 = vpack.c.bf16 %v279, %v279
      %v290 = vpack.c.bf16 %v281, %v281
      %291 = vst [vmem:[%s196] sm:$0xf] %v283
      %292 = vst [vmem:[%s196 + $0x4] sm:$0xf] %v284
      %293 = vst [vmem:[%s196 + $0x8] sm:$0xf] %v285
      %294 = vst [vmem:[%s196 + $0xc] sm:$0xf] %v286
      %295 = vst [vmem:[%s196 + $0x10] sm:$0xf] %v287
      %296 = vst [vmem:[%s196 + $0x14] sm:$0xf] %v288
      %297 = vst [vmem:[%s196 + $0x18] sm:$0xf] %v289
      %298 = vst [vmem:[%s196 + $0x1c] sm:$0xf] %v290
      %v299 = vadd.f32 %v264, %v266
      %v300 = vadd.f32 %v299, %v269
      %v301 = vadd.f32 %v300, %v271
      %v302 = vadd.f32 %v301, %v274
      %v303 = vadd.f32 %v302, %v276
      %v304 = vadd.f32 %v303, %v279
      %v305 = vadd.f32 %v304, %v281
      %v306 = vrot.slane %v305, 4
      %v307 = vadd.f32 %v305, %v306
      %v308 = vrot.slane %v307, 2
      %v309 = vadd.f32 %v307, %v308
      %v310 = vrot.slane %v309, 1
      %v311 = vadd.f32 %v309, %v310
      %v312 = vmul.f32 %v264, %v264
      %v313 = vmul.f32 %v266, %v266
      %v314 = vmul.f32 %v269, %v269
      %v315 = vmul.f32 %v271, %v271
      %v316 = vmul.f32 %v274, %v274
      %v317 = vmul.f32 %v276, %v276
      %v318 = vmul.f32 %v279, %v279
      %v319 = vmul.f32 %v281, %v281
      %v320 = vadd.f32 %v312, %v313
      %v321 = vadd.f32 %v320, %v314
      %v322 = vadd.f32 %v321, %v315
      %v323 = vadd.f32 %v322, %v316
      %v324 = vadd.f32 %v323, %v317
      %v325 = vadd.f32 %v324, %v318
      %v326 = vadd.f32 %v325, %v319
      %v327 = vrot.slane %v326, 4
      %v328 = vadd.f32 %v326, %v327
      %v329 = vrot.slane %v328, 2
      %v330 = vadd.f32 %v328, %v329
      %v331 = vrot.slane %v330, 1
      %v332 = vadd.f32 %v330, %v331
      %vm333 = vcmask 1040384
      %v334 = vsel %vm333, %v311, %v332
      %335 = vst [vmem:[%s202] sm:$0x3] %v334
      %s336 = sadd.s32 %s19, %s20
      %p337 = scmp.lt.s32.totalorder %s336, 1
      %s338 = scalar_select %p337, %s336, 1
      %s339 = smul.addr %s338, 8
      %s340 = smul.addr %s339, 4
      %s341 = scalar_lea.vmem %s2, %s340
      %s342 = sadd.s32 %s19, %s20
      %p343 = scmp.lt.s32.totalorder %s342, 1
      %s344 = scalar_select %p343, %s342, 1
      %s345 = smul.addr %s344, 2
      %s346 = scalar_lea.vmem %s3, %s345
      // Predicated region
      $region29: #{basic_block_forward.8} parent=27 // pred_check
        %p347 = pneg %p94
      $region30: #{basic_block_forward.8} parent=27 // pred_check_branch
        %349 = sbr.rel (%p347) target = $region32
      $region31: #{basic_block_forward.8} parent=27 // pred_region
        %s350 = sadd.s32 %s19, %s20
      $region32: #{basic_block_forward.8} parent=27 // pred_fallthru
        _
      // Predicated region
      $region33: #{basic_block_forward.8} parent=27 // pred_check
        %p351 = pneg %p122
      $region34: #{basic_block_forward.8} parent=27 // pred_check_branch
        %353 = sbr.rel (%p351) target = $region36
      $region35: #{basic_block_forward.8} parent=27 // pred_region
        %s354 = sadd.s32 %s19, %s20
      $region36: #{basic_block_forward.8} parent=27 // pred_fallthru
        _
    $region28: #{basic_block_forward.8} parent=5 // pred_fallthru
      _
    %p355 = scmp.le.s32.totalorder 2, %s10
    // Predicated region
    $region37: #{basic_block_forward.8} parent=5 // pred_check
      %p356 = pneg %p355
    $region38: #{basic_block_forward.8} parent=5 // pred_check_branch
      %358 = sbr.rel (%p356) target = $region40
    $region39: #{basic_block_forward.8} parent=5 // pred_region
      %s359 = ssub.s32 %s10, 2
      // Predicated region
      $region41: #{basic_block_forward.8} parent=39 // pred_check
        %p360 = pneg %p100
      $region42: #{basic_block_forward.8} parent=39 // pred_check_branch
        %362 = sbr.rel (%p360) target = $region44
      $region43: #{basic_block_forward.8} parent=39 // pred_region
        %s363 = sadd.s32 %s21, %s22
        %p364 = scmp.lt.s32.totalorder %s363, 1
        %s365 = scalar_select %p364, %s363, 1
        %s366 = smul.addr %s365, 8
        %s367 = smul.addr %s366, 4
        %s368 = scalar_lea.vmem %s2, %s367
      $region44: #{basic_block_forward.8} parent=39 // pred_fallthru
        _
      // Predicated region
      $region45: #{basic_block_forward.8} parent=39 // pred_check
        %p369 = pneg %p128
      $region46: #{basic_block_forward.8} parent=39 // pred_check_branch
        %371 = sbr.rel (%p369) target = $region48
      $region47: #{basic_block_forward.8} parent=39 // pred_region
        %s372 = sadd.s32 %s21, %s22
        %p373 = scmp.lt.s32.totalorder %s372, 1
        %s374 = scalar_select %p373, %s372, 1
        %s375 = smul.addr %s374, 2
        %s376 = scalar_lea.vmem %s3, %s375
      $region48: #{basic_block_forward.8} parent=39 // pred_fallthru
        _
    $region40: #{basic_block_forward.8} parent=5 // pred_fallthru
      _
  $region6: #{basic_block_forward.8} parent=0 // loop_footer
    %s14 = sadd.s32 1, %s10
  $region7: #{basic_block_forward.8} parent=0 // loop_footer_branch
    %9 = sbr.rel target = $region3
  $region8: #{basic_block_forward.8} parent=0 // loop_exit
    _

// kernel: basic_block_forward.6
$region0: #{basic_block_forward.6}
  #allocation0 [shape = 'u32[]', space=smem, size = 0x4, offset = 0x4, fixed_abs, tag = 'smem constant byte address 0x4 - core index']
  #allocation1 [shape = 'u32[72,128]{1,0:T(1,128)}', space=vmem, size = 0x9000, scoped, tag = 'internal scratch']
  %s0 = inlined_call_operand.vmem [shape: bf16[128,128], index: 0, kind: input, shape index: {}]
  %s1 = inlined_call_operand.vmem [shape: f32[1,128], index: 1, kind: input, shape index: {}]
  %s2 = inlined_call_operand.vmem [shape: f32[1,128], index: 2, kind: input, shape index: {}]
  %s3 = inlined_call_operand.vmem [shape: bf16[128,128], index: 3, kind: output, shape index: {}]
  %s4 = sld [smem:[#allocation0]]
  $region22: #{basic_block_forward.6} parent=0
    _
  %s6 = ssub.s32 1, %s4
  %s7 = scalar_select 0, %s6, %s4
  // Predicated region
  $region2: #{basic_block_forward.6} parent=0 // pred_check
    _
  $region3: #{basic_block_forward.6} parent=0 // pred_check_branch
    %9 = sbr.rel (0) target = $region5
  $region4: #{basic_block_forward.6} parent=0 // pred_region
    _
  $region5: #{basic_block_forward.6} parent=0 // pred_fallthru
    _
  // Predicated region
  $region6: #{basic_block_forward.6} parent=0 // pred_check
    _
  $region7: #{basic_block_forward.6} parent=0 // pred_check_branch
    %11 = sbr.rel (0) target = $region9
  $region8: #{basic_block_forward.6} parent=0 // pred_region
    _
  $region9: #{basic_block_forward.6} parent=0 // pred_fallthru
    _
  // Predicated region
  $region10: #{basic_block_forward.6} parent=0 // pred_check
    _
  $region11: #{basic_block_forward.6} parent=0 // pred_check_branch
    %13 = sbr.rel (0) target = $region13
  $region12: #{basic_block_forward.6} parent=0 // pred_region
    _
  $region13: #{basic_block_forward.6} parent=0 // pred_fallthru
    _
  %v14 = vld [vmem:[%s0] sm:$0xf]
  %v15 = vld [vmem:[%s0 + $0x4] sm:$0xf]
  %v16 = vld [vmem:[%s0 + $0x8] sm:$0xf]
  %v17 = vld [vmem:[%s0 + $0xc] sm:$0xf]
  %v18 = vld [vmem:[%s0 + $0x10] sm:$0xf]
  %v19 = vld [vmem:[%s0 + $0x14] sm:$0xf]
  %v20 = vld [vmem:[%s0 + $0x18] sm:$0xf]
  %v21 = vld [vmem:[%s0 + $0x1c] sm:$0xf]
  %v22 = vld [vmem:[%s0 + $0x20] sm:$0xf]
  %v23 = vld [vmem:[%s0 + $0x24] sm:$0xf]
  %v24 = vld [vmem:[%s0 + $0x28] sm:$0xf]
  %v25 = vld [vmem:[%s0 + $0x2c] sm:$0xf]
  %v26 = vld [vmem:[%s0 + $0x30] sm:$0xf]
  %v27 = vld [vmem:[%s0 + $0x34] sm:$0xf]
  %v28 = vld [vmem:[%s0 + $0x38] sm:$0xf]
  %v29 = vld [vmem:[%s0 + $0x3c] sm:$0xf]
  %v30 = vunpack.c.l.bf16 %v14
  %v31 = vunpack.c.l.bf16 %v15
  %v32 = vunpack.c.l.bf16 %v16
  %v33 = vunpack.c.l.bf16 %v17
  %v34 = vunpack.c.l.bf16 %v18
  %v35 = vunpack.c.l.bf16 %v19
  %v36 = vunpack.c.l.bf16 %v20
  %v37 = vunpack.c.l.bf16 %v21
  %v38 = vunpack.c.l.bf16 %v22
  %v39 = vunpack.c.l.bf16 %v23
  %v40 = vunpack.c.l.bf16 %v24
  %v41 = vunpack.c.l.bf16 %v25
  %v42 = vunpack.c.l.bf16 %v26
  %v43 = vunpack.c.l.bf16 %v27
  %v44 = vunpack.c.l.bf16 %v28
  %v45 = vunpack.c.l.bf16 %v29
  %v46 = vld [vmem:[%s1] sm:$0x1]
  %v48 = vperm.slane %v46, 0
  %v50 = vmul.f32 %v30, %v48
  %v51 = vmul.f32 %v31, %v48
  %v52 = vmul.f32 %v32, %v48
  %v53 = vmul.f32 %v33, %v48
  %v54 = vmul.f32 %v34, %v48
  %v55 = vmul.f32 %v35, %v48
  %v56 = vmul.f32 %v36, %v48
  %v57 = vmul.f32 %v37, %v48
  %v58 = vmul.f32 %v38, %v48
  %v59 = vmul.f32 %v39, %v48
  %v60 = vmul.f32 %v40, %v48
  %v61 = vmul.f32 %v41, %v48
  %v62 = vmul.f32 %v42, %v48
  %v63 = vmul.f32 %v43, %v48
  %v64 = vmul.f32 %v44, %v48
  %v65 = vmul.f32 %v45, %v48
  %v66 = vld [vmem:[%s2] sm:$0x1]
  %v68 = vperm.slane %v66, 0
  %v70 = vadd.f32 %v50, %v68
  %v71 = vadd.f32 %v51, %v68
  %v72 = vadd.f32 %v52, %v68
  %v73 = vadd.f32 %v53, %v68
  %v74 = vadd.f32 %v54, %v68
  %v75 = vadd.f32 %v55, %v68
  %v76 = vadd.f32 %v56, %v68
  %v77 = vadd.f32 %v57, %v68
  %v78 = vadd.f32 %v58, %v68
  %v79 = vadd.f32 %v59, %v68
  %v80 = vadd.f32 %v60, %v68
  %v81 = vadd.f32 %v61, %v68
  %v82 = vadd.f32 %v62, %v68
  %v83 = vadd.f32 %v63, %v68
  %v84 = vadd.f32 %v64, %v68
  %v85 = vadd.f32 %v65, %v68
  %v86 = vmax.f32 %v70, 0.0
  %v87 = vmax.f32 %v71, 0.0
  %v88 = vmax.f32 %v72, 0.0
  %v89 = vmax.f32 %v73, 0.0
  %v90 = vmax.f32 %v74, 0.0
  %v91 = vmax.f32 %v75, 0.0
  %v92 = vmax.f32 %v76, 0.0
  %v93 = vmax.f32 %v77, 0.0
  %v94 = vmax.f32 %v78, 0.0
  %v95 = vmax.f32 %v79, 0.0
  %v96 = vmax.f32 %v80, 0.0
  %v97 = vmax.f32 %v81, 0.0
  %v98 = vmax.f32 %v82, 0.0
  %v99 = vmax.f32 %v83, 0.0
  %v100 = vmax.f32 %v84, 0.0
  %v101 = vmax.f32 %v85, 0.0
  %v102 = vpack.c.bf16 %v86, %v86
  %v103 = vpack.c.bf16 %v87, %v87
  %v104 = vpack.c.bf16 %v88, %v88
  %v105 = vpack.c.bf16 %v89, %v89
  %v106 = vpack.c.bf16 %v90, %v90
  %v107 = vpack.c.bf16 %v91, %v91
  %v108 = vpack.c.bf16 %v92, %v92
  %v109 = vpack.c.bf16 %v93, %v93
  %v110 = vpack.c.bf16 %v94, %v94
  %v111 = vpack.c.bf16 %v95, %v95
  %v112 = vpack.c.bf16 %v96, %v96
  %v113 = vpack.c.bf16 %v97, %v97
  %v114 = vpack.c.bf16 %v98, %v98
  %v115 = vpack.c.bf16 %v99, %v99
  %v116 = vpack.c.bf16 %v100, %v100
  %v117 = vpack.c.bf16 %v101, %v101
  %118 = vst [vmem:[%s3] sm:$0xf] %v102
  %119 = vst [vmem:[%s3 + $0x4] sm:$0xf] %v103
  %120 = vst [vmem:[%s3 + $0x8] sm:$0xf] %v104
  %121 = vst [vmem:[%s3 + $0xc] sm:$0xf] %v105
  %122 = vst [vmem:[%s3 + $0x10] sm:$0xf] %v106
  %123 = vst [vmem:[%s3 + $0x14] sm:$0xf] %v107
  %124 = vst [vmem:[%s3 + $0x18] sm:$0xf] %v108
  %125 = vst [vmem:[%s3 + $0x1c] sm:$0xf] %v109
  %126 = vst [vmem:[%s3 + $0x20] sm:$0xf] %v110
  %127 = vst [vmem:[%s3 + $0x24] sm:$0xf] %v111
  %128 = vst [vmem:[%s3 + $0x28] sm:$0xf] %v112
  %129 = vst [vmem:[%s3 + $0x2c] sm:$0xf] %v113
  %130 = vst [vmem:[%s3 + $0x30] sm:$0xf] %v114
  %131 = vst [vmem:[%s3 + $0x34] sm:$0xf] %v115
  %132 = vst [vmem:[%s3 + $0x38] sm:$0xf] %v116
  %133 = vst [vmem:[%s3 + $0x3c] sm:$0xf] %v117
  // Predicated region
  $region14: #{basic_block_forward.6} parent=0 // pred_check
    _
  $region15: #{basic_block_forward.6} parent=0 // pred_check_branch
    %135 = sbr.rel (0) target = $region17
  $region16: #{basic_block_forward.6} parent=0 // pred_region
    _
  $region17: #{basic_block_forward.6} parent=0 // pred_fallthru
    _
  // Predicated region
  $region18: #{basic_block_forward.6} parent=0 // pred_check
    _
  $region19: #{basic_block_forward.6} parent=0 // pred_check_branch
    %137 = sbr.rel (0) target = $region21
  $region20: #{basic_block_forward.6} parent=0 // pred_region
    _
  $region21: #{basic_block_forward.6} parent=0 // pred_fallthru
    _

// kernel: basic_block_forward.5
$region0: #{basic_block_forward.5}
  #allocation0 [shape = 'u32[]', space=smem, size = 0x4, offset = 0x4, fixed_abs, tag = 'smem constant byte address 0x4 - core index']
  #allocation1 [shape = 'u32[72,128]{1,0:T(1,128)}', space=vmem, size = 0x9000, scoped, tag = 'internal scratch']
  %s0 = inlined_call_operand.vmem [shape: bf16[4,2,9,9,4], index: 0, kind: input, shape index: {}]
  %s1 = inlined_call_operand.vmem [shape: bf16[36,128], index: 1, kind: input, shape index: {}]
  %s2 = inlined_call_operand.vmem [shape: bf16[2,64,128], index: 2, kind: output, shape index: {0}]
  %s3 = inlined_call_operand.vmem [shape: f32[2,2,128], index: 3, kind: output, shape index: {1}]
  %4 = xla_tuple %s2, %s3
  %s5 = sld [smem:[#allocation0]]
  $region90: #{basic_block_forward.5} parent=0
    _
  %s7 = ssub.s32 1, %s5
  %s8 = scalar_select 0, %s7, %s5
  $region1: #{basic_block_forward.5} parent=0
    #allocation2 [shape = 'u8[294912]{0}', space=vmem, size = 0x48000, scoped, tag = 'input window, operand 0']
    loop: start=0, step=1, limit=4
    $region2: #{basic_block_forward.5} parent=1 // loop_pre_header
      _
    $region3: #{basic_block_forward.5} parent=1 // loop_header
      %s10 = sphi 0, %s14
      %p11 = scmp.ge.s32.totalorder %s10, 4
      %s17 = sphi 0, %s29
      %s18 = sphi 0, %s25
      %s19 = sphi 0, %s17
      %s20 = sphi 0, %s18
      %s21 = sphi 0, %s19
      %s22 = sphi 0, %s20
      %s32 = sphi 0, %s34
      %s35 = sphi 0, %s32
      %s36 = sphi 0, %s35
      %s52 = sphi 0, %s36
      %s56 = sphi 0, %s56
      %s58 = sphi 0, %s56
      %s59 = sphi 0, %s58
      %s73 = sphi 0, %s59
      %s81 = sphi 0, %s83
      %s84 = sphi 0, %s81
      %s85 = sphi 0, %s84
      %s101 = sphi 0, %s85
      %s109 = sphi 0, %s111
      %s112 = sphi 0, %s109
      %s113 = sphi 0, %s112
      %s129 = sphi 0, %s113
    $region4: #{basic_block_forward.5} parent=1 // loop_header_branch
      %13 = sbr.rel (%p11) target = $region8
    $region5: #{basic_block_forward.5} parent=1 // loop_body
      %s15 = ssub.s32 %s10, 1
      %s16 = ssub.s32 %s10, 2
      %s23 = sadd.s32 1, %s18
      %p24 = scmp.ge.s32.totalorder %s23, 1
      %s25 = scalar_select %p24, 0, %s23
      %s26 = sadd.s32 1, %s17
      %s27 = scalar_select %p24, %s26, %s17
      %p28 = scmp.ge.s32.totalorder %s27, 2
      %s29 = scalar_select %p28, 0, %s27
      %s30 = ssub.s32 %s17, %s29
      %p31 = scmp.eq.s32.totalorder %s30, 0
      %s33 = sadd.s32 %s32, 1
      %s34 = scalar_select %p31, %s32, %s33
      %p37 = pneg %p31
      %p38 = scmp.eq.s32.totalorder %s10, 1
      %p39 = por %p37, %p38
      %p40 = scmp.ne.s32.totalorder %s32, %s35
      %p41 = scmp.eq.s32.totalorder %s10, 0
      %p42 = por %p40, %p41
      %p43 = scmp.ne.s32.totalorder %s32, %s35
      %p44 = scmp.eq.s32.totalorder %s15, 1
      %p45 = por %p43, %p44
      %p46 = scmp.ne.s32.totalorder %s35, %s36
      %p47 = scmp.eq.s32.totalorder %s15, 0
      %p48 = por %p46, %p47
      %p49 = scmp.ne.s32.totalorder %s35, %s36
      %p50 = scmp.eq.s32.totalorder %s16, 1
      %p51 = por %p49, %p50
      %p53 = scmp.ne.s32.totalorder %s36, %s52
      %p54 = scmp.eq.s32.totalorder %s16, 0
      %p55 = por %p53, %p54
      %s57 = sadd.s32 %s56, 1
      %p60 = scmp.eq.s32.totalorder %s10, 1
      %p61 = scmp.ne.s32.totalorder %s56, %s58
      %p62 = scmp.eq.s32.totalorder %s10, 0
      %p63 = por %p61, %p62
      %p64 = scmp.ne.s32.totalorder %s56, %s58
      %p65 = scmp.eq.s32.totalorder %s15, 1
      %p66 = por %p64, %p65
      %p67 = scmp.ne.s32.totalorder %s58, %s59
      %p68 = scmp.eq.s32.totalorder %s15, 0
      %p69 = por %p67, %p68
      %p70 = scmp.ne.s32.totalorder %s58, %s59
      %p71 = scmp.eq.s32.totalorder %s16, 1
      %p72 = por %p70, %p71
      %p74 = scmp.ne.s32.totalorder %s59, %s73
      %p75 = scmp.eq.s32.totalorder %s16, 0
      %p76 = por %p74, %p75
      %s77 = sadd.s32 %s17, %s18
      %s78 = sadd.s32 %s29, %s25
      %s79 = ssub.s32 %s77, %s78
      %p80 = scmp.eq.s32.totalorder %s79, 0
      %s82 = sadd.s32 %s81, 1
      %s83 = scalar_select %p80, %s81, %s82
      %p86 = pneg %p80
      %p87 = scmp.eq.s32.totalorder %s10, 1
      %p88 = por %p86, %p87
      %p89 = scmp.ne.s32.totalorder %s81, %s84
      %p90 = scmp.eq.s32.totalorder %s10, 0
      %p91 = por %p89, %p90
      %p92 = scmp.ne.s32.totalorder %s81, %s84
      %p93 = scmp.eq.s32.totalorder %s15, 1
      %p94 = por %p92, %p93
      %p95 = scmp.ne.s32.totalorder %s84, %s85
      %p96 = scmp.eq.s32.totalorder %s15, 0
      %p97 = por %p95, %p96
      %p98 = scmp.ne.s32.totalorder %s84, %s85
      %p99 = scmp.eq.s32.totalorder %s16, 1
      %p100 = por %p98, %p99
      %p102 = scmp.ne.s32.totalorder %s85, %s101
      %p103 = scmp.eq.s32.totalorder %s16, 0
      %p104 = por %p102, %p103
      %s105 = sadd.s32 %s17, %s18
      %s106 = sadd.s32 %s29, %s25
      %s107 = ssub.s32 %s105, %s106
      %p108 = scmp.eq.s32.totalorder %s107, 0
      %s110 = sadd.s32 %s109, 1
      %s111 = scalar_select %p108, %s109, %s110
      %p114 = pneg %p108
      %p115 = scmp.eq.s32.totalorder %s10, 1
      %p116 = por %p114, %p115
      %p117 = scmp.ne.s32.totalorder %s109, %s112
      %p118 = scmp.eq.s32.totalorder %s10, 0
      %p119 = por %p117, %p118
      %p120 = scmp.ne.s32.totalorder %s109, %s112
      %p121 = scmp.eq.s32.totalorder %s15, 1
      %p122 = por %p120, %p121
      %p123 = scmp.ne.s32.totalorder %s112, %s113
      %p124 = scmp.eq.s32.totalorder %s15, 0
      %p125 = por %p123, %p124
      %p126 = scmp.ne.s32.totalorder %s112, %s113
      %p127 = scmp.eq.s32.totalorder %s16, 1
      %p128 = por %p126, %p127
      %p130 = scmp.ne.s32.totalorder %s113, %s129
      %p131 = scmp.eq.s32.totalorder %s16, 0
      %p132 = por %p130, %p131
      %p133 = scmp.le.s32.totalorder 1, %s10
      %p134 = scmp.lt.s32.totalorder %s10, 3
      %p135 = pnand %p133, %p134
      %p136 = pneg %p135
      // Predicated region
      $region9: #{basic_block_forward.5} parent=5 // pred_check
        _
      $region10: #{basic_block_forward.5} parent=5 // pred_check_branch
        %138 = sbr.rel (%p135) target = $region12
      $region11: #{basic_block_forward.5} parent=5 // pred_region
        %s139 = ssub.s32 %s10, 1
        // Predicated region
        $region13: #{basic_block_forward.5} parent=11 // pred_check
          %p140 = pneg %p69
        $region14: #{basic_block_forward.5} parent=11 // pred_check_branch
          %142 = sbr.rel (%p140) target = $region16
        $region15: #{basic_block_forward.5} parent=11 // pred_region
          _
        $region16: #{basic_block_forward.5} parent=11 // pred_fallthru
          _
      $region12: #{basic_block_forward.5} parent=5 // pred_fallthru
        _
      %p143 = scmp.lt.s32.totalorder %s10, 2
      // Predicated region
      $region17: #{basic_block_forward.5} parent=5 // pred_check
        %p144 = pneg %p143
      $region18: #{basic_block_forward.5} parent=5 // pred_check_branch
        %146 = sbr.rel (%p144) target = $region20
      $region19: #{basic_block_forward.5} parent=5 // pred_region
        // Predicated region
        $region21: #{basic_block_forward.5} parent=19 // pred_check
          %p147 = pneg %p42
        $region22: #{basic_block_forward.5} parent=19 // pred_check_branch
          %149 = sbr.rel (%p147) target = $region24
        $region23: #{basic_block_forward.5} parent=19 // pred_region
          %s150 = sand.u32 %s32, 1
          %s151 = sand.u32 %s32, 1
          %s152 = smul.addr %s151, 288
          %s153 = scalar_lea.vmem [#allocation2], %s152
          %s154 = smul.addr %s17, 18
          %s155 = smul.addr %s154, 4
          %s156 = scalar_lea.vmem %s0, %s155
          // Predicated region
          $region25: #{basic_block_forward.5} parent=23 // pred_check
            _
          $region26: #{basic_block_forward.5} parent=23 // pred_check_branch
            %158 = sbr.rel (0) target = $region28
          $region27: #{basic_block_forward.5} parent=23 // pred_region
            // Predicated region
            $region29: #{basic_block_forward.5} parent=27 // pred_check
              _
            $region30: #{basic_block_forward.5} parent=27 // pred_check_branch
              %160 = sbr.rel target = $region32
            $region31: #{basic_block_forward.5} parent=27 // pred_region
              // Predicated region
              $region44: #{basic_block_forward.5} parent=31 // pred_check
                _
              $region45: #{basic_block_forward.5} parent=31 // pred_check_branch
                %318 = sbr.rel (0) target = $region47
              $region46: #{basic_block_forward.5} parent=31 // pred_region
                loop: start=0, step=1, limit=1
                $region48: #{basic_block_forward.5} parent=46 // loop_pre_header
                  _
                $region49: #{basic_block_forward.5} parent=46 // loop_header
                  %s320 = sphi 0, %s324
                  %p321 = scmp.ge.s32.totalorder %s320, 1
                  %s325 = sphi %s156, %s156
                  %s326 = sphi %s153, %s153
                $region50: #{basic_block_forward.5} parent=46 // loop_header_branch
                  %323 = sbr.rel (%p321) target = $region54
                $region51: #{basic_block_forward.5} parent=46 // loop_body
                  _
                $region52: #{basic_block_forward.5} parent=46 // loop_footer
                  %s324 = sadd.s32 1, %s320
                $region53: #{basic_block_forward.5} parent=46 // loop_footer_branch
                  %319 = sbr.rel target = $region49
                $region54: #{basic_block_forward.5} parent=46 // loop_exit
                  _
                %s328 = ssub.s32 16, 1
                loop: start=0, step=1, limit=1
                $region55: #{basic_block_forward.5} parent=46 // loop_pre_header
                  _
                $region56: #{basic_block_forward.5} parent=46 // loop_header
                  %s330 = sphi 0, %s334
                  %p331 = scmp.ge.s32.totalorder %s330, 1
                  %s335 = sphi %s156, %s156
                  %s336 = sphi %s153, %s153
                $region57: #{basic_block_forward.5} parent=46 // loop_header_branch
                  %333 = sbr.rel (%p331) target = $region61
                $region58: #{basic_block_forward.5} parent=46 // loop_body
                  %v337 = vld [vmem:[%s335] sm:%s328]
                  %338 = vst [vmem:[%s336] sm:%s328] %v337
                  %v339 = vld [vmem:[%s335 + $0x4] sm:%s328]
                  %340 = vst [vmem:[%s336 + $0x4] sm:%s328] %v339
                  %v341 = vld [vmem:[%s335 + $0x8] sm:%s328]
                  %342 = vst [vmem:[%s336 + $0x8] sm:%s328] %v341
                  %v343 = vld [vmem:[%s335 + $0xc] sm:%s328]
                  %344 = vst [vmem:[%s336 + $0xc] sm:%s328] %v343
                  %v345 = vld [vmem:[%s335 + $0x10] sm:%s328]
                  %346 = vst [vmem:[%s336 + $0x10] sm:%s328] %v345
                  %v347 = vld [vmem:[%s335 + $0x14] sm:%s328]
                  %348 = vst [vmem:[%s336 + $0x14] sm:%s328] %v347
                  %v349 = vld [vmem:[%s335 + $0x18] sm:%s328]
                  %350 = vst [vmem:[%s336 + $0x18] sm:%s328] %v349
                  %v351 = vld [vmem:[%s335 + $0x1c] sm:%s328]
                  %352 = vst [vmem:[%s336 + $0x1c] sm:%s328] %v351
                  %v353 = vld [vmem:[%s335 + $0x20] sm:%s328]
                  %354 = vst [vmem:[%s336 + $0x20] sm:%s328] %v353
                  %v355 = vld [vmem:[%s335 + $0x24] sm:%s328]
                  %356 = vst [vmem:[%s336 + $0x24] sm:%s328] %v355
                  %v357 = vld [vmem:[%s335 + $0x28] sm:%s328]
                  %358 = vst [vmem:[%s336 + $0x28] sm:%s328] %v357
                  %v359 = vld [vmem:[%s335 + $0x2c] sm:%s328]
                  %360 = vst [vmem:[%s336 + $0x2c] sm:%s328] %v359
                  %v361 = vld [vmem:[%s335 + $0x30] sm:%s328]
                  %362 = vst [vmem:[%s336 + $0x30] sm:%s328] %v361
                  %v363 = vld [vmem:[%s335 + $0x34] sm:%s328]
                  %364 = vst [vmem:[%s336 + $0x34] sm:%s328] %v363
                  %v365 = vld [vmem:[%s335 + $0x38] sm:%s328]
                  %366 = vst [vmem:[%s336 + $0x38] sm:%s328] %v365
                  %v367 = vld [vmem:[%s335 + $0x3c] sm:%s328]
                  %368 = vst [vmem:[%s336 + $0x3c] sm:%s328] %v367
                  %v369 = vld [vmem:[%s335 + $0x40] sm:%s328]
                  %370 = vst [vmem:[%s336 + $0x40] sm:%s328] %v369
                  %v371 = vld [vmem:[%s335 + $0x44] sm:%s328]
                  %372 = vst [vmem:[%s336 + $0x44] sm:%s328] %v371
                  %v373 = vld [vmem:[%s335 + $0x90] sm:%s328]
                  %374 = vst [vmem:[%s336 + $0x48] sm:%s328] %v373
                  %v375 = vld [vmem:[%s335 + $0x94] sm:%s328]
                  %376 = vst [vmem:[%s336 + $0x4c] sm:%s328] %v375
                  %v377 = vld [vmem:[%s335 + $0x98] sm:%s328]
                  %378 = vst [vmem:[%s336 + $0x50] sm:%s328] %v377
                  %v379 = vld [vmem:[%s335 + $0x9c] sm:%s328]
                  %380 = vst [vmem:[%s336 + $0x54] sm:%s328] %v379
                  %v381 = vld [vmem:[%s335 + $0xa0] sm:%s328]
                  %382 = vst [vmem:[%s336 + $0x58] sm:%s328] %v381
                  %v383 = vld [vmem:[%s335 + $0xa4] sm:%s328]
                  %384 = vst [vmem:[%s336 + $0x5c] sm:%s328] %v383
                  %v385 = vld [vmem:[%s335 + $0xa8] sm:%s328]
                  %386 = vst [vmem:[%s336 + $0x60] sm:%s328] %v385
                  %v387 = vld [vmem:[%s335 + $0xac] sm:%s328]
                  %388 = vst [vmem:[%s336 + $0x64] sm:%s328] %v387
                  %v389 = vld [vmem:[%s335 + $0xb0] sm:%s328]
                  %390 = vst [vmem:[%s336 + $0x68] sm:%s328] %v389
                  %v391 = vld [vmem:[%s335 + $0xb4] sm:%s328]
                  %392 = vst [vmem:[%s336 + $0x6c] sm:%s328] %v391
                  %v393 = vld [vmem:[%s335 + $0xb8] sm:%s328]
                  %394 = vst [vmem:[%s336 + $0x70] sm:%s328] %v393
                  %v395 = vld [vmem:[%s335 + $0xbc] sm:%s328]
                  %396 = vst [vmem:[%s336 + $0x74] sm:%s328] %v395
                  %v397 = vld [vmem:[%s335 + $0xc0] sm:%s328]
                  %398 = vst [vmem:[%s336 + $0x78] sm:%s328] %v397
                  %v399 = vld [vmem:[%s335 + $0xc4] sm:%s328]
                  %400 = vst [vmem:[%s336 + $0x7c] sm:%s328] %v399
                  %v401 = vld [vmem:[%s335 + $0xc8] sm:%s328]
                  %402 = vst [vmem:[%s336 + $0x80] sm:%s328] %v401
                  %v403 = vld [vmem:[%s335 + $0xcc] sm:%s328]
                  %404 = vst [vmem:[%s336 + $0x84] sm:%s328] %v403
                  %v405 = vld [vmem:[%s335 + $0xd0] sm:%s328]
                  %406 = vst [vmem:[%s336 + $0x88] sm:%s328] %v405
                  %v407 = vld [vmem:[%s335 + $0xd4] sm:%s328]
                  %408 = vst [vmem:[%s336 + $0x8c] sm:%s328] %v407
                  %v409 = vld [vmem:[%s335 + $0x120] sm:%s328]
                  %410 = vst [vmem:[%s336 + $0x90] sm:%s328] %v409
                  %v411 = vld [vmem:[%s335 + $0x124] sm:%s328]
                  %412 = vst [vmem:[%s336 + $0x94] sm:%s328] %v411
                  %v413 = vld [vmem:[%s335 + $0x128] sm:%s328]
                  %414 = vst [vmem:[%s336 + $0x98] sm:%s328] %v413
                  %v415 = vld [vmem:[%s335 + $0x12c] sm:%s328]
                  %416 = vst [vmem:[%s336 + $0x9c] sm:%s328] %v415
                  %v417 = vld [vmem:[%s335 + $0x130] sm:%s328]
                  %418 = vst [vmem:[%s336 + $0xa0] sm:%s328] %v417
                  %v419 = vld [vmem:[%s335 + $0x134] sm:%s328]
                  %420 = vst [vmem:[%s336 + $0xa4] sm:%s328] %v419
                  %v421 = vld [vmem:[%s335 + $0x138] sm:%s328]
                  %422 = vst [vmem:[%s336 + $0xa8] sm:%s328] %v421
                  %v423 = vld [vmem:[%s335 + $0x13c] sm:%s328]
                  %424 = vst [vmem:[%s336 + $0xac] sm:%s328] %v423
                  %v425 = vld [vmem:[%s335 + $0x140] sm:%s328]
                  %426 = vst [vmem:[%s336 + $0xb0] sm:%s328] %v425
                  %v427 = vld [vmem:[%s335 + $0x144] sm:%s328]
                  %428 = vst [vmem:[%s336 + $0xb4] sm:%s328] %v427
                  %v429 = vld [vmem:[%s335 + $0x148] sm:%s328]
                  %430 = vst [vmem:[%s336 + $0xb8] sm:%s328] %v429
                  %v431 = vld [vmem:[%s335 + $0x14c] sm:%s328]
                  %432 = vst [vmem:[%s336 + $0xbc] sm:%s328] %v431
                  %v433 = vld [vmem:[%s335 + $0x150] sm:%s328]
                  %434 = vst [vmem:[%s336 + $0xc0] sm:%s328] %v433
                  %v435 = vld [vmem:[%s335 + $0x154] sm:%s328]
                  %436 = vst [vmem:[%s336 + $0xc4] sm:%s328] %v435
                  %v437 = vld [vmem:[%s335 + $0x158] sm:%s328]
                  %438 = vst [vmem:[%s336 + $0xc8] sm:%s328] %v437
                  %v439 = vld [vmem:[%s335 + $0x15c] sm:%s328]
                  %440 = vst [vmem:[%s336 + $0xcc] sm:%s328] %v439
                  %v441 = vld [vmem:[%s335 + $0x160] sm:%s328]
                  %442 = vst [vmem:[%s336 + $0xd0] sm:%s328] %v441
                  %v443 = vld [vmem:[%s335 + $0x164] sm:%s328]
                  %444 = vst [vmem:[%s336 + $0xd4] sm:%s328] %v443
                  %v445 = vld [vmem:[%s335 + $0x1b0] sm:%s328]
                  %446 = vst [vmem:[%s336 + $0xd8] sm:%s328] %v445
                  %v447 = vld [vmem:[%s335 + $0x1b4] sm:%s328]
                  %448 = vst [vmem:[%s336 + $0xdc] sm:%s328] %v447
                  %v449 = vld [vmem:[%s335 + $0x1b8] sm:%s328]
                  %450 = vst [vmem:[%s336 + $0xe0] sm:%s328] %v449
                  %v451 = vld [vmem:[%s335 + $0x1bc] sm:%s328]
                  %452 = vst [vmem:[%s336 + $0xe4] sm:%s328] %v451
                  %v453 = vld [vmem:[%s335 + $0x1c0] sm:%s328]
                  %454 = vst [vmem:[%s336 + $0xe8] sm:%s328] %v453
                  %v455 = vld [vmem:[%s335 + $0x1c4] sm:%s328]
                  %456 = vst [vmem:[%s336 + $0xec] sm:%s328] %v455
                  %v457 = vld [vmem:[%s335 + $0x1c8] sm:%s328]
                  %458 = vst [vmem:[%s336 + $0xf0] sm:%s328] %v457
                  %v459 = vld [vmem:[%s335 + $0x1cc] sm:%s328]
                  %460 = vst [vmem:[%s336 + $0xf4] sm:%s328] %v459
                  %v461 = vld [vmem:[%s335 + $0x1d0] sm:%s328]
                  %462 = vst [vmem:[%s336 + $0xf8] sm:%s328] %v461
                  %v463 = vld [vmem:[%s335 + $0x1d4] sm:%s328]
                  %464 = vst [vmem:[%s336 + $0xfc] sm:%s328] %v463
                  %v465 = vld [vmem:[%s335 + $0x1d8] sm:%s328]
                  %466 = vst [vmem:[%s336 + $0x100] sm:%s328] %v465
                  %v467 = vld [vmem:[%s335 + $0x1dc] sm:%s328]
                  %468 = vst [vmem:[%s336 + $0x104] sm:%s328] %v467
                  %v469 = vld [vmem:[%s335 + $0x1e0] sm:%s328]
                  %470 = vst [vmem:[%s336 + $0x108] sm:%s328] %v469
                  %v471 = vld [vmem:[%s335 + $0x1e4] sm:%s328]
                  %472 = vst [vmem:[%s336 + $0x10c] sm:%s328] %v471
                  %v473 = vld [vmem:[%s335 + $0x1e8] sm:%s328]
                  %474 = vst [vmem:[%s336 + $0x110] sm:%s328] %v473
                  %v475 = vld [vmem:[%s335 + $0x1ec] sm:%s328]
                  %476 = vst [vmem:[%s336 + $0x114] sm:%s328] %v475
                  %v477 = vld [vmem:[%s335 + $0x1f0] sm:%s328]
                  %478 = vst [vmem:[%s336 + $0x118] sm:%s328] %v477
                  %v479 = vld [vmem:[%s335 + $0x1f4] sm:%s328]
                  %480 = vst [vmem:[%s336 + $0x11c] sm:%s328] %v479
                $region59: #{basic_block_forward.5} parent=46 // loop_footer
                  %s334 = sadd.s32 1, %s330
                $region60: #{basic_block_forward.5} parent=46 // loop_footer_branch
                  %329 = sbr.rel target = $region56
                $region61: #{basic_block_forward.5} parent=46 // loop_exit
                  _
              $region47: #{basic_block_forward.5} parent=31 // pred_fallthru
                _
            $region32: #{basic_block_forward.5} parent=27 // pred_fallthru
              _
            // Predicated region
            $region33: #{basic_block_forward.5} parent=27 // pred_check
              _
            $region34: #{basic_block_forward.5} parent=27 // pred_check_branch
              %162 = sbr.rel (0) target = $region36
            $region35: #{basic_block_forward.5} parent=27 // pred_region
              %s164 = ssub.s32 16, 1
              loop: start=0, step=1, limit=1
              $region37: #{basic_block_forward.5} parent=35 // loop_pre_header
                _
              $region38: #{basic_block_forward.5} parent=35 // loop_header
                %s166 = sphi 0, %s170
                %p167 = scmp.ge.s32.totalorder %s166, 1
                %s171 = sphi %s156, %s156
                %s172 = sphi %s153, %s153
              $region39: #{basic_block_forward.5} parent=35 // loop_header_branch
                %169 = sbr.rel (%p167) target = $region43
              $region40: #{basic_block_forward.5} parent=35 // loop_body
                %v173 = vld [vmem:[%s171] sm:%s164]
                %174 = vst [vmem:[%s172] sm:%s164] %v173
                %v175 = vld [vmem:[%s171 + $0x4] sm:%s164]
                %176 = vst [vmem:[%s172 + $0x4] sm:%s164] %v175
                %v177 = vld [vmem:[%s171 + $0x8] sm:%s164]
                %178 = vst [vmem:[%s172 + $0x8] sm:%s164] %v177
                %v179 = vld [vmem:[%s171 + $0xc] sm:%s164]
                %180 = vst [vmem:[%s172 + $0xc] sm:%s164] %v179
                %v181 = vld [vmem:[%s171 + $0x10] sm:%s164]
                %182 = vst [vmem:[%s172 + $0x10] sm:%s164] %v181
                %v183 = vld [vmem:[%s171 + $0x14] sm:%s164]
                %184 = vst [vmem:[%s172 + $0x14] sm:%s164] %v183
                %v185 = vld [vmem:[%s171 + $0x18] sm:%s164]
                %186 = vst [vmem:[%s172 + $0x18] sm:%s164] %v185
                %v187 = vld [vmem:[%s171 + $0x1c] sm:%s164]
                %188 = vst [vmem:[%s172 + $0x1c] sm:%s164] %v187
                %v189 = vld [vmem:[%s171 + $0x20] sm:%s164]
                %190 = vst [vmem:[%s172 + $0x20] sm:%s164] %v189
                %v191 = vld [vmem:[%s171 + $0x24] sm:%s164]
                %192 = vst [vmem:[%s172 + $0x24] sm:%s164] %v191
                %v193 = vld [vmem:[%s171 + $0x28] sm:%s164]
                %194 = vst [vmem:[%s172 + $0x28] sm:%s164] %v193
                %v195 = vld [vmem:[%s171 + $0x2c] sm:%s164]
                %196 = vst [vmem:[%s172 + $0x2c] sm:%s164] %v195
                %v197 = vld [vmem:[%s171 + $0x30] sm:%s164]
                %198 = vst [vmem:[%s172 + $0x30] sm:%s164] %v197
                %v199 = vld [vmem:[%s171 + $0x34] sm:%s164]
                %200 = vst [vmem:[%s172 + $0x34] sm:%s164] %v199
                %v201 = vld [vmem:[%s171 + $0x38] sm:%s164]
                %202 = vst [vmem:[%s172 + $0x38] sm:%s164] %v201
                %v203 = vld [vmem:[%s171 + $0x3c] sm:%s164]
                %204 = vst [vmem:[%s172 + $0x3c] sm:%s164] %v203
                %v205 = vld [vmem:[%s171 + $0x40] sm:%s164]
                %206 = vst [vmem:[%s172 + $0x40] sm:%s164] %v205
                %v207 = vld [vmem:[%s171 + $0x44] sm:%s164]
                %208 = vst [vmem:[%s172 + $0x44] sm:%s164] %v207
                %v209 = vld [vmem:[%s171 + $0x90] sm:%s164]
                %210 = vst [vmem:[%s172 + $0x48] sm:%s164] %v209
                %v211 = vld [vmem:[%s171 + $0x94] sm:%s164]
                %212 = vst [vmem:[%s172 + $0x4c] sm:%s164] %v211
                %v213 = vld [vmem:[%s171 + $0x98] sm:%s164]
                %214 = vst [vmem:[%s172 + $0x50] sm:%s164] %v213
                %v215 = vld [vmem:[%s171 + $0x9c] sm:%s164]
                %216 = vst [vmem:[%s172 + $0x54] sm:%s164] %v215
                %v217 = vld [vmem:[%s171 + $0xa0] sm:%s164]
                %218 = vst [vmem:[%s172 + $0x58] sm:%s164] %v217
                %v219 = vld [vmem:[%s171 + $0xa4] sm:%s164]
                %220 = vst [vmem:[%s172 + $0x5c] sm:%s164] %v219
                %v221 = vld [vmem:[%s171 + $0xa8] sm:%s164]
                %222 = vst [vmem:[%s172 + $0x60] sm:%s164] %v221
                %v223 = vld [vmem:[%s171 + $0xac] sm:%s164]
                %224 = vst [vmem:[%s172 + $0x64] sm:%s164] %v223
                %v225 = vld [vmem:[%s171 + $0xb0] sm:%s164]
                %226 = vst [vmem:[%s172 + $0x68] sm:%s164] %v225
                %v227 = vld [vmem:[%s171 + $0xb4] sm:%s164]
                %228 = vst [vmem:[%s172 + $0x6c] sm:%s164] %v227
                %v229 = vld [vmem:[%s171 + $0xb8] sm:%s164]
                %230 = vst [vmem:[%s172 + $0x70] sm:%s164] %v229
                %v231 = vld [vmem:[%s171 + $0xbc] sm:%s164]
                %232 = vst [vmem:[%s172 + $0x74] sm:%s164] %v231
                %v233 = vld [vmem:[%s171 + $0xc0] sm:%s164]
                %234 = vst [vmem:[%s172 + $0x78] sm:%s164] %v233
                %v235 = vld [vmem:[%s171 + $0xc4] sm:%s164]
                %236 = vst [vmem:[%s172 + $0x7c] sm:%s164] %v235
                %v237 = vld [vmem:[%s171 + $0xc8] sm:%s164]
                %238 = vst [vmem:[%s172 + $0x80] sm:%s164] %v237
                %v239 = vld [vmem:[%s171 + $0xcc] sm:%s164]
                %240 = vst [vmem:[%s172 + $0x84] sm:%s164] %v239
                %v241 = vld [vmem:[%s171 + $0xd0] sm:%s164]
                %242 = vst [vmem:[%s172 + $0x88] sm:%s164] %v241
                %v243 = vld [vmem:[%s171 + $0xd4] sm:%s164]
                %244 = vst [vmem:[%s172 + $0x8c] sm:%s164] %v243
                %v245 = vld [vmem:[%s171 + $0x120] sm:%s164]
                %246 = vst [vmem:[%s172 + $0x90] sm:%s164] %v245
                %v247 = vld [vmem:[%s171 + $0x124] sm:%s164]
                %248 = vst [vmem:[%s172 + $0x94] sm:%s164] %v247
                %v249 = vld [vmem:[%s171 + $0x128] sm:%s164]
                %250 = vst [vmem:[%s172 + $0x98] sm:%s164] %v249
                %v251 = vld [vmem:[%s171 + $0x12c] sm:%s164]
                %252 = vst [vmem:[%s172 + $0x9c] sm:%s164] %v251
                %v253 = vld [vmem:[%s171 + $0x130] sm:%s164]
                %254 = vst [vmem:[%s172 + $0xa0] sm:%s164] %v253
                %v255 = vld [vmem:[%s171 + $0x134] sm:%s164]
                %256 = vst [vmem:[%s172 + $0xa4] sm:%s164] %v255
                %v257 = vld [vmem:[%s171 + $0x138] sm:%s164]
                %258 = vst [vmem:[%s172 + $0xa8] sm:%s164] %v257
                %v259 = vld [vmem:[%s171 + $0x13c] sm:%s164]
                %260 = vst [vmem:[%s172 + $0xac] sm:%s164] %v259
                %v261 = vld [vmem:[%s171 + $0x140] sm:%s164]
                %262 = vst [vmem:[%s172 + $0xb0] sm:%s164] %v261
                %v263 = vld [vmem:[%s171 + $0x144] sm:%s164]
                %264 = vst [vmem:[%s172 + $0xb4] sm:%s164] %v263
                %v265 = vld [vmem:[%s171 + $0x148] sm:%s164]
                %266 = vst [vmem:[%s172 + $0xb8] sm:%s164] %v265
                %v267 = vld [vmem:[%s171 + $0x14c] sm:%s164]
                %268 = vst [vmem:[%s172 + $0xbc] sm:%s164] %v267
                %v269 = vld [vmem:[%s171 + $0x150] sm:%s164]
                %270 = vst [vmem:[%s172 + $0xc0] sm:%s164] %v269
                %v271 = vld [vmem:[%s171 + $0x154] sm:%s164]
                %272 = vst [vmem:[%s172 + $0xc4] sm:%s164] %v271
                %v273 = vld [vmem:[%s171 + $0x158] sm:%s164]
                %274 = vst [vmem:[%s172 + $0xc8] sm:%s164] %v273
                %v275 = vld [vmem:[%s171 + $0x15c] sm:%s164]
                %276 = vst [vmem:[%s172 + $0xcc] sm:%s164] %v275
                %v277 = vld [vmem:[%s171 + $0x160] sm:%s164]
                %278 = vst [vmem:[%s172 + $0xd0] sm:%s164] %v277
                %v279 = vld [vmem:[%s171 + $0x164] sm:%s164]
                %280 = vst [vmem:[%s172 + $0xd4] sm:%s164] %v279
                %v281 = vld [vmem:[%s171 + $0x1b0] sm:%s164]
                %282 = vst [vmem:[%s172 + $0xd8] sm:%s164] %v281
                %v283 = vld [vmem:[%s171 + $0x1b4] sm:%s164]
                %284 = vst [vmem:[%s172 + $0xdc] sm:%s164] %v283
                %v285 = vld [vmem:[%s171 + $0x1b8] sm:%s164]
                %286 = vst [vmem:[%s172 + $0xe0] sm:%s164] %v285
                %v287 = vld [vmem:[%s171 + $0x1bc] sm:%s164]
                %288 = vst [vmem:[%s172 + $0xe4] sm:%s164] %v287
                %v289 = vld [vmem:[%s171 + $0x1c0] sm:%s164]
                %290 = vst [vmem:[%s172 + $0xe8] sm:%s164] %v289
                %v291 = vld [vmem:[%s171 + $0x1c4] sm:%s164]
                %292 = vst [vmem:[%s172 + $0xec] sm:%s164] %v291
                %v293 = vld [vmem:[%s171 + $0x1c8] sm:%s164]
                %294 = vst [vmem:[%s172 + $0xf0] sm:%s164] %v293
                %v295 = vld [vmem:[%s171 + $0x1cc] sm:%s164]
                %296 = vst [vmem:[%s172 + $0xf4] sm:%s164] %v295
                %v297 = vld [vmem:[%s171 + $0x1d0] sm:%s164]
                %298 = vst [vmem:[%s172 + $0xf8] sm:%s164] %v297
                %v299 = vld [vmem:[%s171 + $0x1d4] sm:%s164]
                %300 = vst [vmem:[%s172 + $0xfc] sm:%s164] %v299
                %v301 = vld [vmem:[%s171 + $0x1d8] sm:%s164]
                %302 = vst [vmem:[%s172 + $0x100] sm:%s164] %v301
                %v303 = vld [vmem:[%s171 + $0x1dc] sm:%s164]
                %304 = vst [vmem:[%s172 + $0x104] sm:%s164] %v303
                %v305 = vld [vmem:[%s171 + $0x1e0] sm:%s164]
                %306 = vst [vmem:[%s172 + $0x108] sm:%s164] %v305
                %v307 = vld [vmem:[%s171 + $0x1e4] sm:%s164]
                %308 = vst [vmem:[%s172 + $0x10c] sm:%s164] %v307
                %v309 = vld [vmem:[%s171 + $0x1e8] sm:%s164]
                %310 = vst [vmem:[%s172 + $0x110] sm:%s164] %v309
                %v311 = vld [vmem:[%s171 + $0x1ec] sm:%s164]
                %312 = vst [vmem:[%s172 + $0x114] sm:%s164] %v311
                %v313 = vld [vmem:[%s171 + $0x1f0] sm:%s164]
                %314 = vst [vmem:[%s172 + $0x118] sm:%s164] %v313
                %v315 = vld [vmem:[%s171 + $0x1f4] sm:%s164]
                %316 = vst [vmem:[%s172 + $0x11c] sm:%s164] %v315
              $region41: #{basic_block_forward.5} parent=35 // loop_footer
                %s170 = sadd.s32 1, %s166
              $region42: #{basic_block_forward.5} parent=35 // loop_footer_branch
                %165 = sbr.rel target = $region38
              $region43: #{basic_block_forward.5} parent=35 // loop_exit
                _
            $region36: #{basic_block_forward.5} parent=27 // pred_fallthru
              _
          $region28: #{basic_block_forward.5} parent=23 // pred_fallthru
            _
          %481 = vnop
        $region24: #{basic_block_forward.5} parent=19 // pred_fallthru
          _
      $region20: #{basic_block_forward.5} parent=5 // pred_fallthru
        _
      %p482 = scmp.le.s32.totalorder 1, %s10
      %p483 = scmp.lt.s32.totalorder %s10, 3
      %p484 = pnand %p482, %p483
      %p485 = pneg %p484
      // Predicated region
      $region62: #{basic_block_forward.5} parent=5 // pred_check
        _
      $region63: #{basic_block_forward.5} parent=5 // pred_check_branch
        %487 = sbr.rel (%p484) target = $region65
      $region64: #{basic_block_forward.5} parent=5 // pred_region
        %s488 = ssub.s32 %s10, 1
        %s489 = sand.u32 %s35, 1
        %s490 = sand.u32 %s35, 1
        %s491 = smul.addr %s490, 288
        %s492 = scalar_lea.vmem [#allocation2], %s491
        // Predicated region
        $region66: #{basic_block_forward.5} parent=64 // pred_check
          %p493 = pneg %p48
        $region67: #{basic_block_forward.5} parent=64 // pred_check_branch
          %495 = sbr.rel (%p493) target = $region69
        $region68: #{basic_block_forward.5} parent=64 // pred_region
          _
        $region69: #{basic_block_forward.5} parent=64 // pred_fallthru
          _
        %s496 = sand.u32 %s35, 1
        %s497 = sand.u32 %s35, 1
        %s498 = smul.addr %s497, 288
        %s499 = scalar_lea.vmem [#allocation2], %s498
        %p500 = pneg %p48
        %p501 = pneg %p45
        %p502 = pneg %p69
        %p503 = pneg %p66
        %p504 = pneg %p97
        %p505 = pneg %p94
        %s506 = sadd.s32 %s19, %s20
        %p507 = scmp.lt.s32.totalorder %s506, 1
        %s508 = scalar_select %p507, %s506, 1
        %s509 = smul.addr %s508, 8
        %s510 = smul.addr %s509, 4
        %s511 = scalar_lea.vmem %s2, %s510
        %p512 = pneg %p125
        %p513 = pneg %p122
        %s514 = sadd.s32 %s19, %s20
        %p515 = scmp.lt.s32.totalorder %s514, 1
        %s516 = scalar_select %p515, %s514, 1
        %s517 = smul.addr %s516, 2
        %s518 = scalar_lea.vmem %s3, %s517
        %s519 = sadd.s32 %s19, %s20
        %p520 = scmp.lt.s32.totalorder %s519, 1
        %s521 = scalar_select %p520, %s519, 1
        %s522 = smul.addr %s521, 8
        %s523 = smul.addr %s522, 4
        %s524 = scalar_lea.vmem %s2, %s523
        %s525 = sadd.s32 %s19, %s20
        %s526 = sadd.s32 %s19, %s20
        %p527 = scmp.lt.s32.totalorder %s526, 1
        %s528 = scalar_select %p527, %s526, 1
        %s529 = smul.addr %s528, 2
        %s530 = scalar_lea.vmem %s3, %s529
        %s531 = sadd.s32 %s19, %s20
        %s533 = smul.u32 %s20, 8
        %s534 = smul.u32 %s533, 2
        %s535 = smul.addr %s534, 4
        %s536 = scalar_lea.vmem %s492, %s535 [#allocation2]
        %v537 = vld [vmem:[%s536] sm:$0xf]
        %v538 = vld [vmem:[%s536 + $0x8] sm:$0xf]
        %v539 = vld [vmem:[%s536 + $0x10] sm:$0xf]
        %v540 = vld [vmem:[%s536 + $0x18] sm:$0xf]
        %v541 = vld [vmem:[%s536 + $0x20] sm:$0xf]
        %v542 = vld [vmem:[%s536 + $0x28] sm:$0xf]
        %v543 = vld [vmem:[%s536 + $0x30] sm:$0xf]
        %v544 = vld [vmem:[%s536 + $0x38] sm:$0xf]
        %s545 = sadd.s32 %s534, 18
        %s546 = smul.addr %s545, 4
        %s547 = scalar_lea.vmem %s492, %s546 [#allocation2]
        %v548 = vld [vmem:[%s547] sm:$0xf]
        %v549 = vld [vmem:[%s547 + $0x8] sm:$0xf]
        %v550 = vld [vmem:[%s547 + $0x10] sm:$0xf]
        %v551 = vld [vmem:[%s547 + $0x18] sm:$0xf]
        %v552 = vld [vmem:[%s547 + $0x20] sm:$0xf]
        %v553 = vld [vmem:[%s547 + $0x28] sm:$0xf]
        %v554 = vld [vmem:[%s547 + $0x30] sm:$0xf]
        %v555 = vld [vmem:[%s547 + $0x38] sm:$0xf]
        %v556 = vld [vmem:[%s536 + $0x4] sm:$0x1]
        %v557 = vld [vmem:[%s536 + $0xc] sm:$0x1]
        %v558 = vld [vmem:[%s536 + $0x14] sm:$0x1]
        %v559 = vld [vmem:[%s536 + $0x1c] sm:$0x1]
        %v560 = vld [vmem:[%s536 + $0x24] sm:$0x1]
        %v561 = vld [vmem:[%s536 + $0x2c] sm:$0x1]
        %v562 = vld [vmem:[%s536 + $0x34] sm:$0x1]
        %v563 = vld [vmem:[%s536 + $0x3c] sm:$0x1]
        %s564 = sadd.s32 %s534, 36
        %s565 = smul.addr %s564, 4
        %s566 = scalar_lea.vmem %s492, %s565 [#allocation2]
        %v567 = vld [vmem:[%s566] sm:$0xf]
        %v568 = vld [vmem:[%s566 + $0x8] sm:$0xf]
        %v569 = vld [vmem:[%s566 + $0x10] sm:$0xf]
        %v570 = vld [vmem:[%s566 + $0x18] sm:$0xf]
        %v571 = vld [vmem:[%s566 + $0x20] sm:$0xf]
        %v572 = vld [vmem:[%s566 + $0x28] sm:$0xf]
        %v573 = vld [vmem:[%s566 + $0x30] sm:$0xf]
        %v574 = vld [vmem:[%s566 + $0x38] sm:$0xf]
        %s575 = sadd.s32 %s534, 54
        %s576 = smul.addr %s575, 4
        %s577 = scalar_lea.vmem %s492, %s576 [#allocation2]
        %v578 = vld [vmem:[%s577] sm:$0xf]
        %v579 = vld [vmem:[%s577 + $0x8] sm:$0xf]
        %v580 = vld [vmem:[%s577 + $0x10] sm:$0xf]
        %v581 = vld [vmem:[%s577 + $0x18] sm:$0xf]
        %v582 = vld [vmem:[%s577 + $0x20] sm:$0xf]
        %v583 = vld [vmem:[%s577 + $0x28] sm:$0xf]
        %v584 = vld [vmem:[%s577 + $0x30] sm:$0xf]
        %v585 = vld [vmem:[%s577 + $0x38] sm:$0xf]
        %v586 = vld [vmem:[%s566 + $0x4] sm:$0x1]
        %v587 = vld [vmem:[%s566 + $0xc] sm:$0x1]
        %v588 = vld [vmem:[%s566 + $0x14] sm:$0x1]
        %v589 = vld [vmem:[%s566 + $0x1c] sm:$0x1]
        %v590 = vld [vmem:[%s566 + $0x24] sm:$0x1]
        %v591 = vld [vmem:[%s566 + $0x2c] sm:$0x1]
        %v592 = vld [vmem:[%s566 + $0x34] sm:$0x1]
        %v593 = vld [vmem:[%s566 + $0x3c] sm:$0x1]
        %s594 = sadd.s32 %s533, 1
        %s595 = smul.u32 %s594, 2
        %s596 = smul.addr %s595, 4
        %s597 = scalar_lea.vmem %s492, %s596 [#allocation2]
        %v598 = vld [vmem:[%s597] sm:$0xf]
        %v599 = vld [vmem:[%s597 + $0x8] sm:$0xf]
        %v600 = vld [vmem:[%s597 + $0x10] sm:$0xf]
        %v601 = vld [vmem:[%s597 + $0x18] sm:$0xf]
        %v602 = vld [vmem:[%s597 + $0x20] sm:$0xf]
        %v603 = vld [vmem:[%s597 + $0x28] sm:$0xf]
        %v604 = vld [vmem:[%s597 + $0x30] sm:$0xf]
        %v605 = vld [vmem:[%s597 + $0x38] sm:$0xf]
        %s606 = sadd.s32 %s595, 18
        %s607 = smul.addr %s606, 4
        %s608 = scalar_lea.vmem %s492, %s607 [#allocation2]
        %v609 = vld [vmem:[%s608] sm:$0xf]
        %v610 = vld [vmem:[%s608 + $0x8] sm:$0xf]
        %v611 = vld [vmem:[%s608 + $0x10] sm:$0xf]
        %v612 = vld [vmem:[%s608 + $0x18] sm:$0xf]
        %v613 = vld [vmem:[%s608 + $0x20] sm:$0xf]
        %v614 = vld [vmem:[%s608 + $0x28] sm:$0xf]
        %v615 = vld [vmem:[%s608 + $0x30] sm:$0xf]
        %v616 = vld [vmem:[%s608 + $0x38] sm:$0xf]
        %v617 = vld [vmem:[%s597 + $0x4] sm:$0x1]
        %v618 = vld [vmem:[%s597 + $0xc] sm:$0x1]
        %v619 = vld [vmem:[%s597 + $0x14] sm:$0x1]
        %v620 = vld [vmem:[%s597 + $0x1c] sm:$0x1]
        %v621 = vld [vmem:[%s597 + $0x24] sm:$0x1]
        %v622 = vld [vmem:[%s597 + $0x2c] sm:$0x1]
        %v623 = vld [vmem:[%s597 + $0x34] sm:$0x1]
        %v624 = vld [vmem:[%s597 + $0x3c] sm:$0x1]
        %v625 = vunpack.c.l.bf16 %v537
        %v626 = vunpack.c.l.bf16 %v538
        %v627 = vunpack.c.l.bf16 %v539
        %v628 = vunpack.c.l.bf16 %v540
        %v629 = vunpack.c.l.bf16 %v541
        %v630 = vunpack.c.l.bf16 %v542
        %v631 = vunpack.c.l.bf16 %v543
        %v632 = vunpack.c.l.bf16 %v544
        %v633 = vunpack.c.l.bf16 %v548
        %v634 = vunpack.c.l.bf16 %v549
        %v635 = vunpack.c.l.bf16 %v550
        %v636 = vunpack.c.l.bf16 %v551
        %v637 = vunpack.c.l.bf16 %v552
        %v638 = vunpack.c.l.bf16 %v553
        %v639 = vunpack.c.l.bf16 %v554
        %v640 = vunpack.c.l.bf16 %v555
        %v641 = vunpack.c.l.bf16 %v556
        %v642 = vunpack.c.l.bf16 %v557
        %v643 = vunpack.c.l.bf16 %v558
        %v644 = vunpack.c.l.bf16 %v559
        %v645 = vunpack.c.l.bf16 %v560
        %v646 = vunpack.c.l.bf16 %v561
        %v647 = vunpack.c.l.bf16 %v562
        %v648 = vunpack.c.l.bf16 %v563
        %v649 = vunpack.c.l.bf16 %v567
        %v650 = vunpack.c.l.bf16 %v568
        %v651 = vunpack.c.l.bf16 %v569
        %v652 = vunpack.c.l.bf16 %v570
        %v653 = vunpack.c.l.bf16 %v571
        %v654 = vunpack.c.l.bf16 %v572
        %v655 = vunpack.c.l.bf16 %v573
        %v656 = vunpack.c.l.bf16 %v574
        %v657 = vunpack.c.l.bf16 %v578
        %v658 = vunpack.c.l.bf16 %v579
        %v659 = vunpack.c.l.bf16 %v580
        %v660 = vunpack.c.l.bf16 %v581
        %v661 = vunpack.c.l.bf16 %v582
        %v662 = vunpack.c.l.bf16 %v583
        %v663 = vunpack.c.l.bf16 %v584
        %v664 = vunpack.c.l.bf16 %v585
        %v665 = vunpack.c.l.bf16 %v586
        %v666 = vunpack.c.l.bf16 %v587
        %v667 = vunpack.c.l.bf16 %v588
        %v668 = vunpack.c.l.bf16 %v589
        %v669 = vunpack.c.l.bf16 %v590
        %v670 = vunpack.c.l.bf16 %v591
        %v671 = vunpack.c.l.bf16 %v592
        %v672 = vunpack.c.l.bf16 %v593
        %v673 = vunpack.c.l.bf16 %v598
        %v674 = vunpack.c.l.bf16 %v599
        %v675 = vunpack.c.l.bf16 %v600
        %v676 = vunpack.c.l.bf16 %v601
        %v677 = vunpack.c.l.bf16 %v602
        %v678 = vunpack.c.l.bf16 %v603
        %v679 = vunpack.c.l.bf16 %v604
        %v680 = vunpack.c.l.bf16 %v605
        %v681 = vunpack.c.l.bf16 %v609
        %v682 = vunpack.c.l.bf16 %v610
        %v683 = vunpack.c.l.bf16 %v611
        %v684 = vunpack.c.l.bf16 %v612
        %v685 = vunpack.c.l.bf16 %v613
        %v686 = vunpack.c.l.bf16 %v614
        %v687 = vunpack.c.l.bf16 %v615
        %v688 = vunpack.c.l.bf16 %v616
        %v689 = vunpack.c.l.bf16 %v617
        %v690 = vunpack.c.l.bf16 %v618
        %v691 = vunpack.c.l.bf16 %v619
        %v692 = vunpack.c.l.bf16 %v620
        %v693 = vunpack.c.l.bf16 %v621
        %v694 = vunpack.c.l.bf16 %v622
        %v695 = vunpack.c.l.bf16 %v623
        %v696 = vunpack.c.l.bf16 %v624
        %705 = vrot.lane.b32.xlu0 %v633, 4
        %v706 = vpop.permute.xlu0 %705
        %707 = vrot.lane.b32.xlu0 %v634, 4
        %v708 = vpop.permute.xlu0 %707
        %709 = vrot.lane.b32.xlu0 %v635, 4
        %v710 = vpop.permute.xlu0 %709
        %711 = vrot.lane.b32.xlu0 %v636, 4
        %v712 = vpop.permute.xlu0 %711
        %713 = vrot.lane.b32.xlu0 %v637, 4
        %v714 = vpop.permute.xlu0 %713
        %715 = vrot.lane.b32.xlu0 %v638, 4
        %v716 = vpop.permute.xlu0 %715
        %717 = vrot.lane.b32.xlu0 %v639, 4
        %v718 = vpop.permute.xlu0 %717
        %719 = vrot.lane.b32.xlu0 %v640, 4
        %v720 = vpop.permute.xlu0 %719
        %vm745 = vcmask 1046528
        %v746 = vrot.slane %v625, 1
        %v747 = vrot.slane %v641, 1
        %v748 = vsel %vm745, %v746, %v747
        %v749 = vrot.slane %v626, 1
        %v750 = vrot.slane %v642, 1
        %v751 = vsel %vm745, %v749, %v750
        %v752 = vrot.slane %v627, 1
        %v753 = vrot.slane %v643, 1
        %v754 = vsel %vm745, %v752, %v753
        %v755 = vrot.slane %v628, 1
        %v756 = vrot.slane %v644, 1
        %v757 = vsel %vm745, %v755, %v756
        %v758 = vrot.slane %v629, 1
        %v759 = vrot.slane %v645, 1
        %v760 = vsel %vm745, %v758, %v759
        %v761 = vrot.slane %v630, 1
        %v762 = vrot.slane %v646, 1
        %v763 = vsel %vm745, %v761, %v762
        %v764 = vrot.slane %v631, 1
        %v765 = vrot.slane %v647, 1
        %v766 = vsel %vm745, %v764, %v765
        %v767 = vrot.slane %v632, 1
        %v768 = vrot.slane %v648, 1
        %v769 = vsel %vm745, %v767, %v768
        %770 = vrot.lane.b32.xlu0 %v748, 8
        %v771 = vpop.permute.xlu0 %770
        %772 = vrot.lane.b32.xlu0 %v751, 8
        %v773 = vpop.permute.xlu0 %772
        %774 = vrot.lane.b32.xlu0 %v754, 8
        %v775 = vpop.permute.xlu0 %774
        %776 = vrot.lane.b32.xlu0 %v757, 8
        %v777 = vpop.permute.xlu0 %776
        %778 = vrot.lane.b32.xlu0 %v760, 8
        %v779 = vpop.permute.xlu0 %778
        %780 = vrot.lane.b32.xlu0 %v763, 8
        %v781 = vpop.permute.xlu0 %780
        %782 = vrot.lane.b32.xlu0 %v766, 8
        %v783 = vpop.permute.xlu0 %782
        %784 = vrot.lane.b32.xlu0 %v769, 8
        %v785 = vpop.permute.xlu0 %784
        %802 = vrot.lane.b32.xlu0 %v649, 12
        %v803 = vpop.permute.xlu0 %802
        %804 = vrot.lane.b32.xlu0 %v650, 12
        %v805 = vpop.permute.xlu0 %804
        %806 = vrot.lane.b32.xlu0 %v651, 12
        %v807 = vpop.permute.xlu0 %806
        %808 = vrot.lane.b32.xlu0 %v652, 12
        %v809 = vpop.permute.xlu0 %808
        %810 = vrot.lane.b32.xlu0 %v653, 12
        %v811 = vpop.permute.xlu0 %810
        %812 = vrot.lane.b32.xlu0 %v654, 12
        %v813 = vpop.permute.xlu0 %812
        %814 = vrot.lane.b32.xlu0 %v655, 12
        %v815 = vpop.permute.xlu0 %814
        %816 = vrot.lane.b32.xlu0 %v656, 12
        %v817 = vpop.permute.xlu0 %816
        %834 = vrot.lane.b32.xlu0 %v657, 16
        %v835 = vpop.permute.xlu0 %834
        %836 = vrot.lane.b32.xlu0 %v658, 16
        %v837 = vpop.permute.xlu0 %836
        %838 = vrot.lane.b32.xlu0 %v659, 16
        %v839 = vpop.permute.xlu0 %838
        %840 = vrot.lane.b32.xlu0 %v660, 16
        %v841 = vpop.permute.xlu0 %840
        %842 = vrot.lane.b32.xlu0 %v661, 16
        %v843 = vpop.permute.xlu0 %842
        %844 = vrot.lane.b32.xlu0 %v662, 16
        %v845 = vpop.permute.xlu0 %844
        %846 = vrot.lane.b32.xlu0 %v663, 16
        %v847 = vpop.permute.xlu0 %846
        %848 = vrot.lane.b32.xlu0 %v664, 16
        %v849 = vpop.permute.xlu0 %848
        %v866 = vrot.slane %v649, 1
        %v867 = vrot.slane %v665, 1
        %v868 = vsel %vm745, %v866, %v867
        %v869 = vrot.slane %v650, 1
        %v870 = vrot.slane %v666, 1
        %v871 = vsel %vm745, %v869, %v870
        %v872 = vrot.slane %v651, 1
        %v873 = vrot.slane %v667, 1
        %v874 = vsel %vm745, %v872, %v873
        %v875 = vrot.slane %v652, 1
        %v876 = vrot.slane %v668, 1
        %v877 = vsel %vm745, %v875, %v876
        %v878 = vrot.slane %v653, 1
        %v879 = vrot.slane %v669, 1
        %v880 = vsel %vm745, %v878, %v879
        %v881 = vrot.slane %v654, 1
        %v882 = vrot.slane %v670, 1
        %v883 = vsel %vm745, %v881, %v882
        %v884 = vrot.slane %v655, 1
        %v885 = vrot.slane %v671, 1
        %v886 = vsel %vm745, %v884, %v885
        %v887 = vrot.slane %v656, 1
        %v888 = vrot.slane %v672, 1
        %v889 = vsel %vm745, %v887, %v888
        %890 = vrot.lane.b32.xlu0 %v868, 20
        %v891 = vpop.permute.xlu0 %890
        %892 = vrot.lane.b32.xlu0 %v871, 20
        %v893 = vpop.permute.xlu0 %892
        %894 = vrot.lane.b32.xlu0 %v874, 20
        %v895 = vpop.permute.xlu0 %894
        %896 = vrot.lane.b32.xlu0 %v877, 20
        %v897 = vpop.permute.xlu0 %896
        %898 = vrot.lane.b32.xlu0 %v880, 20
        %v899 = vpop.permute.xlu0 %898
        %900 = vrot.lane.b32.xlu0 %v883, 20
        %v901 = vpop.permute.xlu0 %900
        %902 = vrot.lane.b32.xlu0 %v886, 20
        %v903 = vpop.permute.xlu0 %902
        %904 = vrot.lane.b32.xlu0 %v889, 20
        %v905 = vpop.permute.xlu0 %904
        %922 = vrot.lane.b32.xlu0 %v673, 24
        %v923 = vpop.permute.xlu0 %922
        %924 = vrot.lane.b32.xlu0 %v674, 24
        %v925 = vpop.permute.xlu0 %924
        %926 = vrot.lane.b32.xlu0 %v675, 24
        %v927 = vpop.permute.xlu0 %926
        %928 = vrot.lane.b32.xlu0 %v676, 24
        %v929 = vpop.permute.xlu0 %928
        %930 = vrot.lane.b32.xlu0 %v677, 24
        %v931 = vpop.permute.xlu0 %930
        %932 = vrot.lane.b32.xlu0 %v678, 24
        %v933 = vpop.permute.xlu0 %932
        %934 = vrot.lane.b32.xlu0 %v679, 24
        %v935 = vpop.permute.xlu0 %934
        %936 = vrot.lane.b32.xlu0 %v680, 24
        %v937 = vpop.permute.xlu0 %936
        %954 = vrot.lane.b32.xlu0 %v681, 28
        %v955 = vpop.permute.xlu0 %954
        %956 = vrot.lane.b32.xlu0 %v682, 28
        %v957 = vpop.permute.xlu0 %956
        %958 = vrot.lane.b32.xlu0 %v683, 28
        %v959 = vpop.permute.xlu0 %958
        %960 = vrot.lane.b32.xlu0 %v684, 28
        %v961 = vpop.permute.xlu0 %960
        %962 = vrot.lane.b32.xlu0 %v685, 28
        %v963 = vpop.permute.xlu0 %962
        %964 = vrot.lane.b32.xlu0 %v686, 28
        %v965 = vpop.permute.xlu0 %964
        %966 = vrot.lane.b32.xlu0 %v687, 28
        %v967 = vpop.permute.xlu0 %966
        %968 = vrot.lane.b32.xlu0 %v688, 28
        %v969 = vpop.permute.xlu0 %968
        %v986 = vrot.slane %v673, 1
        %v987 = vrot.slane %v689, 1
        %v988 = vsel %vm745, %v986, %v987
        %v989 = vrot.slane %v674, 1
        %v990 = vrot.slane %v690, 1
        %v991 = vsel %vm745, %v989, %v990
        %v992 = vrot.slane %v675, 1
        %v993 = vrot.slane %v691, 1
        %v994 = vsel %vm745, %v992, %v993
        %v995 = vrot.slane %v676, 1
        %v996 = vrot.slane %v692, 1
        %v997 = vsel %vm745, %v995, %v996
        %v998 = vrot.slane %v677, 1
        %v999 = vrot.slane %v693, 1
        %v1000 = vsel %vm745, %v998, %v999
        %v1001 = vrot.slane %v678, 1
        %v1002 = vrot.slane %v694, 1
        %v1003 = vsel %vm745, %v1001, %v1002
        %v1004 = vrot.slane %v679, 1
        %v1005 = vrot.slane %v695, 1
        %v1006 = vsel %vm745, %v1004, %v1005
        %v1007 = vrot.slane %v680, 1
        %v1008 = vrot.slane %v696, 1
        %v1009 = vsel %vm745, %v1007, %v1008
        %1010 = vrot.lane.b32.xlu0 %v988, 32
        %v1011 = vpop.permute.xlu0 %1010
        %1012 = vrot.lane.b32.xlu0 %v991, 32
        %v1013 = vpop.permute.xlu0 %1012
        %1014 = vrot.lane.b32.xlu0 %v994, 32
        %v1015 = vpop.permute.xlu0 %1014
        %1016 = vrot.lane.b32.xlu0 %v997, 32
        %v1017 = vpop.permute.xlu0 %1016
        %1018 = vrot.lane.b32.xlu0 %v1000, 32
        %v1019 = vpop.permute.xlu0 %1018
        %1020 = vrot.lane.b32.xlu0 %v1003, 32
        %v1021 = vpop.permute.xlu0 %1020
        %1022 = vrot.lane.b32.xlu0 %v1006, 32
        %v1023 = vpop.permute.xlu0 %1022
        %1024 = vrot.lane.b32.xlu0 %v1009, 32
        %v1025 = vpop.permute.xlu0 %1024
        %vm1034 = vcmask 31744
        %v1035 = vsel %vm1034, %v625, %v706
        %v1036 = vsel %vm1034, %v626, %v708
        %v1037 = vsel %vm1034, %v627, %v710
        %v1038 = vsel %vm1034, %v628, %v712
        %v1039 = vsel %vm1034, %v629, %v714
        %v1040 = vsel %vm1034, %v630, %v716
        %v1041 = vsel %vm1034, %v631, %v718
        %v1042 = vsel %vm1034, %v632, %v720
        %vm1043 = vcmask 64512
        %v1044 = vsel %vm1043, %v1035, %v771
        %v1045 = vsel %vm1043, %v1036, %v773
        %v1046 = vsel %vm1043, %v1037, %v775
        %v1047 = vsel %vm1043, %v1038, %v777
        %v1048 = vsel %vm1043, %v1039, %v779
        %v1049 = vsel %vm1043, %v1040, %v781
        %v1050 = vsel %vm1043, %v1041, %v783
        %v1051 = vsel %vm1043, %v1042, %v785
        %vm1052 = vcmask 97280
        %v1053 = vsel %vm1052, %v1044, %v803
        %v1054 = vsel %vm1052, %v1045, %v805
        %v1055 = vsel %vm1052, %v1046, %v807
        %v1056 = vsel %vm1052, %v1047, %v809
        %v1057 = vsel %vm1052, %v1048, %v811
        %v1058 = vsel %vm1052, %v1049, %v813
        %v1059 = vsel %vm1052, %v1050, %v815
        %v1060 = vsel %vm1052, %v1051, %v817
        %vm1061 = vcmask 130048
        %v1062 = vsel %vm1061, %v1053, %v835
        %v1063 = vsel %vm1061, %v1054, %v837
        %v1064 = vsel %vm1061, %v1055, %v839
        %v1065 = vsel %vm1061, %v1056, %v841
        %v1066 = vsel %vm1061, %v1057, %v843
        %v1067 = vsel %vm1061, %v1058, %v845
        %v1068 = vsel %vm1061, %v1059, %v847
        %v1069 = vsel %vm1061, %v1060, %v849
        %vm1070 = vcmask 162816
        %v1071 = vsel %vm1070, %v1062, %v891
        %v1072 = vsel %vm1070, %v1063, %v893
        %v1073 = vsel %vm1070, %v1064, %v895
        %v1074 = vsel %vm1070, %v1065, %v897
        %v1075 = vsel %vm1070, %v1066, %v899
        %v1076 = vsel %vm1070, %v1067, %v901
        %v1077 = vsel %vm1070, %v1068, %v903
        %v1078 = vsel %vm1070, %v1069, %v905
        %vm1079 = vcmask 195584
        %v1080 = vsel %vm1079, %v1071, %v923
        %v1081 = vsel %vm1079, %v1072, %v925
        %v1082 = vsel %vm1079, %v1073, %v927
        %v1083 = vsel %vm1079, %v1074, %v929
        %v1084 = vsel %vm1079, %v1075, %v931
        %v1085 = vsel %vm1079, %v1076, %v933
        %v1086 = vsel %vm1079, %v1077, %v935
        %v1087 = vsel %vm1079, %v1078, %v937
        %vm1088 = vcmask 228352
        %v1089 = vsel %vm1088, %v1080, %v955
        %v1090 = vsel %vm1088, %v1081, %v957
        %v1091 = vsel %vm1088, %v1082, %v959
        %v1092 = vsel %vm1088, %v1083, %v961
        %v1093 = vsel %vm1088, %v1084, %v963
        %v1094 = vsel %vm1088, %v1085, %v965
        %v1095 = vsel %vm1088, %v1086, %v967
        %v1096 = vsel %vm1088, %v1087, %v969
        %vm1097 = vcmask 261120
        %v1098 = vsel %vm1097, %v1089, %v1011
        %v1099 = vsel %vm1097, %v1090, %v1013
        %v1100 = vsel %vm1097, %v1091, %v1015
        %v1101 = vsel %vm1097, %v1092, %v1017
        %v1102 = vsel %vm1097, %v1093, %v1019
        %v1103 = vsel %vm1097, %v1094, %v1021
        %v1104 = vsel %vm1097, %v1095, %v1023
        %v1105 = vsel %vm1097, %v1096, %v1025
        %v1106 = vpack.c.bf16 %v1099, %v1098
        %v1107 = vpack.c.bf16 %v1101, %v1100
        %v1108 = vpack.c.bf16 %v1103, %v1102
        %v1109 = vpack.c.bf16 %v1105, %v1104
        %v1110 = vld [vmem:[%s1] sm:$0xf]
        %v1111 = vld [vmem:[%s1 + $0x4] sm:$0xf]
        %v1112 = vld [vmem:[%s1 + $0x8] sm:$0xf]
        %v1113 = vld [vmem:[%s1 + $0xc] sm:$0xf]
        %v1114 = vld [vmem:[%s1 + $0x10] sm:$0x3]
        %v1120 = vunpack.c.l.b16 %v1110
        %v1121 = vunpack.c.l.b16 %v1111
        %v1122 = vunpack.c.l.b16 %v1112
        %v1123 = vunpack.c.l.b16 %v1113
        %v1124 = vunpack.c.l.b16 %v1114
        %v1125 = vpack.c.b16 %v1121, %v1120
        %v1126 = vpack.c.b16 %v1123, %v1122
        %v1127 = vpack.c.b16 %v1124, %v1124
        %vm1130 = vcmask 293888
        %v1132 = vsel %vm1130, %v1106, 0
        %v1135 = vsel %vm1130, %v1107, 0
        %v1138 = vsel %vm1130, %v1108, 0
        %v1141 = vsel %vm1130, %v1109, 0
        %vm1143 = vcmask 1041408
        %v1145 = vsel %vm1143, %v1127, 0
        %1147 = vmatpush.bf16.msra.mxu0 0
        %1148 = vmatpush.bf16.msra.mxu0 0
        %1149 = vmatpush.bf16.msra.mxu0 0
        %1150 = vmatpush.bf16.msra.mxu0 0
        %1151 = vmatpush.bf16.msra.mxu0 0
        %1152 = vmatpush.bf16.msra.mxu0 %v1145
        %1153 = vmatpush.bf16.msra.mxu0 %v1126
        %1154 = vmatpush.bf16.msra.mxu0 %v1125
        %1155 = vmatmul.bf16.gmra.mxu0 %v1132
        %v1156 = vpop.f32.mrf.mxu0
        %v1157 = vadd.f32 0.0, %v1156
        %v1158 = vpop.f32.mrf.mxu0
        %v1159 = vadd.f32 0.0, %v1158
        %1160 = vmatmul.bf16.gmra.mxu0 %v1135
        %v1161 = vpop.f32.mrf.mxu0
        %v1162 = vadd.f32 0.0, %v1161
        %v1163 = vpop.f32.mrf.mxu0
        %v1164 = vadd.f32 0.0, %v1163
        %1165 = vmatmul.bf16.gmra.mxu0 %v1138
        %v1166 = vpop.f32.mrf.mxu0
        %v1167 = vadd.f32 0.0, %v1166
        %v1168 = vpop.f32.mrf.mxu0
        %v1169 = vadd.f32 0.0, %v1168
        %1170 = vmatmul.bf16.gmra.mxu0 %v1141
        %v1171 = vpop.f32.mrf.mxu0
        %v1172 = vadd.f32 0.0, %v1171
        %v1173 = vpop.f32.mrf.mxu0
        %v1174 = vadd.f32 0.0, %v1173
        %1175 = vdwg.mxu0
        %v1176 = vpack.c.bf16 %v1157, %v1157
        %v1177 = vpack.c.bf16 %v1159, %v1159
        %v1178 = vpack.c.bf16 %v1162, %v1162
        %v1179 = vpack.c.bf16 %v1164, %v1164
        %v1180 = vpack.c.bf16 %v1167, %v1167
        %v1181 = vpack.c.bf16 %v1169, %v1169
        %v1182 = vpack.c.bf16 %v1172, %v1172
        %v1183 = vpack.c.bf16 %v1174, %v1174
        %1184 = vst [vmem:[%s524] sm:$0xf] %v1176
        %1185 = vst [vmem:[%s524 + $0x4] sm:$0xf] %v1177
        %1186 = vst [vmem:[%s524 + $0x8] sm:$0xf] %v1178
        %1187 = vst [vmem:[%s524 + $0xc] sm:$0xf] %v1179
        %1188 = vst [vmem:[%s524 + $0x10] sm:$0xf] %v1180
        %1189 = vst [vmem:[%s524 + $0x14] sm:$0xf] %v1181
        %1190 = vst [vmem:[%s524 + $0x18] sm:$0xf] %v1182
        %1191 = vst [vmem:[%s524 + $0x1c] sm:$0xf] %v1183
        %v1192 = vadd.f32 %v1157, %v1159
        %v1193 = vadd.f32 %v1192, %v1162
        %v1194 = vadd.f32 %v1193, %v1164
        %v1195 = vadd.f32 %v1194, %v1167
        %v1196 = vadd.f32 %v1195, %v1169
        %v1197 = vadd.f32 %v1196, %v1172
        %v1198 = vadd.f32 %v1197, %v1174
        %v1199 = vrot.slane %v1198, 4
        %v1200 = vadd.f32 %v1198, %v1199
        %v1201 = vrot.slane %v1200, 2
        %v1202 = vadd.f32 %v1200, %v1201
        %v1203 = vrot.slane %v1202, 1
        %v1204 = vadd.f32 %v1202, %v1203
        %v1205 = vmul.f32 %v1157, %v1157
        %v1206 = vmul.f32 %v1159, %v1159
        %v1207 = vmul.f32 %v1162, %v1162
        %v1208 = vmul.f32 %v1164, %v1164
        %v1209 = vmul.f32 %v1167, %v1167
        %v1210 = vmul.f32 %v1169, %v1169
        %v1211 = vmul.f32 %v1172, %v1172
        %v1212 = vmul.f32 %v1174, %v1174
        %v1213 = vadd.f32 %v1205, %v1206
        %v1214 = vadd.f32 %v1213, %v1207
        %v1215 = vadd.f32 %v1214, %v1208
        %v1216 = vadd.f32 %v1215, %v1209
        %v1217 = vadd.f32 %v1216, %v1210
        %v1218 = vadd.f32 %v1217, %v1211
        %v1219 = vadd.f32 %v1218, %v1212
        %v1220 = vrot.slane %v1219, 4
        %v1221 = vadd.f32 %v1219, %v1220
        %v1222 = vrot.slane %v1221, 2
        %v1223 = vadd.f32 %v1221, %v1222
        %v1224 = vrot.slane %v1223, 1
        %v1225 = vadd.f32 %v1223, %v1224
        %vm1226 = vcmask 1040384
        %v1227 = vsel %vm1226, %v1204, %v1225
        %1228 = vst [vmem:[%s530] sm:$0x3] %v1227
        %s1229 = sadd.s32 %s19, %s20
        %p1230 = scmp.lt.s32.totalorder %s1229, 1
        %s1231 = scalar_select %p1230, %s1229, 1
        %s1232 = smul.addr %s1231, 8
        %s1233 = smul.addr %s1232, 4
        %s1234 = scalar_lea.vmem %s2, %s1233
        %s1235 = sadd.s32 %s19, %s20
        %p1236 = scmp.lt.s32.totalorder %s1235, 1
        %s1237 = scalar_select %p1236, %s1235, 1
        %s1238 = smul.addr %s1237, 2
        %s1239 = scalar_lea.vmem %s3, %s1238
        // Predicated region
        $region70: #{basic_block_forward.5} parent=64 // pred_check
          %p1240 = pneg %p94
        $region71: #{basic_block_forward.5} parent=64 // pred_check_branch
          %1242 = sbr.rel (%p1240) target = $region73
        $region72: #{basic_block_forward.5} parent=64 // pred_region
          %s1243 = sadd.s32 %s19, %s20
        $region73: #{basic_block_forward.5} parent=64 // pred_fallthru
          _
        // Predicated region
        $region74: #{basic_block_forward.5} parent=64 // pred_check
          %p1244 = pneg %p122
        $region75: #{basic_block_forward.5} parent=64 // pred_check_branch
          %1246 = sbr.rel (%p1244) target = $region77
        $region76: #{basic_block_forward.5} parent=64 // pred_region
          %s1247 = sadd.s32 %s19, %s20
        $region77: #{basic_block_forward.5} parent=64 // pred_fallthru
          _
      $region65: #{basic_block_forward.5} parent=5 // pred_fallthru
        _
      %p1248 = scmp.le.s32.totalorder 2, %s10
      // Predicated region
      $region78: #{basic_block_forward.5} parent=5 // pred_check
        %p1249 = pneg %p1248
      $region79: #{basic_block_forward.5} parent=5 // pred_check_branch
        %1251 = sbr.rel (%p1249) target = $region81
      $region80: #{basic_block_forward.5} parent=5 // pred_region
        %s1252 = ssub.s32 %s10, 2
        // Predicated region
        $region82: #{basic_block_forward.5} parent=80 // pred_check
          %p1253 = pneg %p100
        $region83: #{basic_block_forward.5} parent=80 // pred_check_branch
          %1255 = sbr.rel (%p1253) target = $region85
        $region84: #{basic_block_forward.5} parent=80 // pred_region
          %s1256 = sadd.s32 %s21, %s22
          %p1257 = scmp.lt.s32.totalorder %s1256, 1
          %s1258 = scalar_select %p1257, %s1256, 1
          %s1259 = smul.addr %s1258, 8
          %s1260 = smul.addr %s1259, 4
          %s1261 = scalar_lea.vmem %s2, %s1260
        $region85: #{basic_block_forward.5} parent=80 // pred_fallthru
          _
        // Predicated region
        $region86: #{basic_block_forward.5} parent=80 // pred_check
          %p1262 = pneg %p128
        $region87: #{basic_block_forward.5} parent=80 // pred_check_branch
          %1264 = sbr.rel (%p1262) target = $region89
        $region88: #{basic_block_forward.5} parent=80 // pred_region
          %s1265 = sadd.s32 %s21, %s22
          %p1266 = scmp.lt.s32.totalorder %s1265, 1
          %s1267 = scalar_select %p1266, %s1265, 1
          %s1268 = smul.addr %s1267, 2
          %s1269 = scalar_lea.vmem %s3, %s1268
        $region89: #{basic_block_forward.5} parent=80 // pred_fallthru
          _
      $region81: #{basic_block_forward.5} parent=5 // pred_fallthru
        _
    $region6: #{basic_block_forward.5} parent=1 // loop_footer
      %s14 = sadd.s32 1, %s10
    $region7: #{basic_block_forward.5} parent=1 // loop_footer_branch
      %9 = sbr.rel target = $region3
    $region8: #{basic_block_forward.5} parent=1 // loop_exit
      _

// kernel: basic_block_forward.9
$region0: #{basic_block_forward.9}
  #allocation0 [shape = 'u32[]', space=smem, size = 0x4, offset = 0x4, fixed_abs, tag = 'smem constant byte address 0x4 - core index']
  #allocation1 [shape = 'u32[72,128]{1,0:T(1,128)}', space=vmem, size = 0x9000, scoped, tag = 'internal scratch']
  %s0 = inlined_call_operand.vmem [shape: bf16[128,128], index: 0, kind: input, shape index: {}]
  %s1 = inlined_call_operand.vmem [shape: f32[1,128], index: 1, kind: input, shape index: {}]
  %s2 = inlined_call_operand.vmem [shape: f32[1,128], index: 2, kind: input, shape index: {}]
  %s3 = inlined_call_operand.vmem [shape: bf16[128,128], index: 3, kind: input, shape index: {}]
  %s4 = inlined_call_operand.vmem [shape: f32[1,128], index: 4, kind: input, shape index: {}]
  %s5 = inlined_call_operand.vmem [shape: f32[1,128], index: 5, kind: input, shape index: {}]
  %s6 = inlined_call_operand.vmem [shape: f32[128,128], index: 6, kind: output, shape index: {}]
  %s7 = sld [smem:[#allocation0]]
  $region34: #{basic_block_forward.9} parent=0
    _
  %s9 = ssub.s32 1, %s7
  %s10 = scalar_select 0, %s9, %s7
  // Predicated region
  $region2: #{basic_block_forward.9} parent=0 // pred_check
    _
  $region3: #{basic_block_forward.9} parent=0 // pred_check_branch
    %12 = sbr.rel (0) target = $region5
  $region4: #{basic_block_forward.9} parent=0 // pred_region
    _
  $region5: #{basic_block_forward.9} parent=0 // pred_fallthru
    _
  // Predicated region
  $region6: #{basic_block_forward.9} parent=0 // pred_check
    _
  $region7: #{basic_block_forward.9} parent=0 // pred_check_branch
    %14 = sbr.rel (0) target = $region9
  $region8: #{basic_block_forward.9} parent=0 // pred_region
    _
  $region9: #{basic_block_forward.9} parent=0 // pred_fallthru
    _
  // Predicated region
  $region10: #{basic_block_forward.9} parent=0 // pred_check
    _
  $region11: #{basic_block_forward.9} parent=0 // pred_check_branch
    %16 = sbr.rel (0) target = $region13
  $region12: #{basic_block_forward.9} parent=0 // pred_region
    _
  $region13: #{basic_block_forward.9} parent=0 // pred_fallthru
    _
  // Predicated region
  $region14: #{basic_block_forward.9} parent=0 // pred_check
    _
  $region15: #{basic_block_forward.9} parent=0 // pred_check_branch
    %18 = sbr.rel (0) target = $region17
  $region16: #{basic_block_forward.9} parent=0 // pred_region
    _
  $region17: #{basic_block_forward.9} parent=0 // pred_fallthru
    _
  // Predicated region
  $region18: #{basic_block_forward.9} parent=0 // pred_check
    _
  $region19: #{basic_block_forward.9} parent=0 // pred_check_branch
    %20 = sbr.rel (0) target = $region21
  $region20: #{basic_block_forward.9} parent=0 // pred_region
    _
  $region21: #{basic_block_forward.9} parent=0 // pred_fallthru
    _
  // Predicated region
  $region22: #{basic_block_forward.9} parent=0 // pred_check
    _
  $region23: #{basic_block_forward.9} parent=0 // pred_check_branch
    %22 = sbr.rel (0) target = $region25
  $region24: #{basic_block_forward.9} parent=0 // pred_region
    _
  $region25: #{basic_block_forward.9} parent=0 // pred_fallthru
    _
  %v23 = vld [vmem:[%s0] sm:$0xf]
  %v24 = vld [vmem:[%s0 + $0x4] sm:$0xf]
  %v25 = vld [vmem:[%s0 + $0x8] sm:$0xf]
  %v26 = vld [vmem:[%s0 + $0xc] sm:$0xf]
  %v27 = vld [vmem:[%s0 + $0x10] sm:$0xf]
  %v28 = vld [vmem:[%s0 + $0x14] sm:$0xf]
  %v29 = vld [vmem:[%s0 + $0x18] sm:$0xf]
  %v30 = vld [vmem:[%s0 + $0x1c] sm:$0xf]
  %v31 = vld [vmem:[%s0 + $0x20] sm:$0xf]
  %v32 = vld [vmem:[%s0 + $0x24] sm:$0xf]
  %v33 = vld [vmem:[%s0 + $0x28] sm:$0xf]
  %v34 = vld [vmem:[%s0 + $0x2c] sm:$0xf]
  %v35 = vld [vmem:[%s0 + $0x30] sm:$0xf]
  %v36 = vld [vmem:[%s0 + $0x34] sm:$0xf]
  %v37 = vld [vmem:[%s0 + $0x38] sm:$0xf]
  %v38 = vld [vmem:[%s0 + $0x3c] sm:$0xf]
  %v39 = vunpack.c.l.bf16 %v23
  %v40 = vunpack.c.l.bf16 %v24
  %v41 = vunpack.c.l.bf16 %v25
  %v42 = vunpack.c.l.bf16 %v26
  %v43 = vunpack.c.l.bf16 %v27
  %v44 = vunpack.c.l.bf16 %v28
  %v45 = vunpack.c.l.bf16 %v29
  %v46 = vunpack.c.l.bf16 %v30
  %v47 = vunpack.c.l.bf16 %v31
  %v48 = vunpack.c.l.bf16 %v32
  %v49 = vunpack.c.l.bf16 %v33
  %v50 = vunpack.c.l.bf16 %v34
  %v51 = vunpack.c.l.bf16 %v35
  %v52 = vunpack.c.l.bf16 %v36
  %v53 = vunpack.c.l.bf16 %v37
  %v54 = vunpack.c.l.bf16 %v38
  %v55 = vld [vmem:[%s1] sm:$0x1]
  %v57 = vperm.slane %v55, 0
  %v59 = vmul.f32 %v39, %v57
  %v60 = vmul.f32 %v40, %v57
  %v61 = vmul.f32 %v41, %v57
  %v62 = vmul.f32 %v42, %v57
  %v63 = vmul.f32 %v43, %v57
  %v64 = vmul.f32 %v44, %v57
  %v65 = vmul.f32 %v45, %v57
  %v66 = vmul.f32 %v46, %v57
  %v67 = vmul.f32 %v47, %v57
  %v68 = vmul.f32 %v48, %v57
  %v69 = vmul.f32 %v49, %v57
  %v70 = vmul.f32 %v50, %v57
  %v71 = vmul.f32 %v51, %v57
  %v72 = vmul.f32 %v52, %v57
  %v73 = vmul.f32 %v53, %v57
  %v74 = vmul.f32 %v54, %v57
  %v75 = vld [vmem:[%s2] sm:$0x1]
  %v77 = vperm.slane %v75, 0
  %v79 = vadd.f32 %v59, %v77
  %v80 = vadd.f32 %v60, %v77
  %v81 = vadd.f32 %v61, %v77
  %v82 = vadd.f32 %v62, %v77
  %v83 = vadd.f32 %v63, %v77
  %v84 = vadd.f32 %v64, %v77
  %v85 = vadd.f32 %v65, %v77
  %v86 = vadd.f32 %v66, %v77
  %v87 = vadd.f32 %v67, %v77
  %v88 = vadd.f32 %v68, %v77
  %v89 = vadd.f32 %v69, %v77
  %v90 = vadd.f32 %v70, %v77
  %v91 = vadd.f32 %v71, %v77
  %v92 = vadd.f32 %v72, %v77
  %v93 = vadd.f32 %v73, %v77
  %v94 = vadd.f32 %v74, %v77
  %v95 = vld [vmem:[%s3] sm:$0xf]
  %v96 = vld [vmem:[%s3 + $0x4] sm:$0xf]
  %v97 = vld [vmem:[%s3 + $0x8] sm:$0xf]
  %v98 = vld [vmem:[%s3 + $0xc] sm:$0xf]
  %v99 = vld [vmem:[%s3 + $0x10] sm:$0xf]
  %v100 = vld [vmem:[%s3 + $0x14] sm:$0xf]
  %v101 = vld [vmem:[%s3 + $0x18] sm:$0xf]
  %v102 = vld [vmem:[%s3 + $0x1c] sm:$0xf]
  %v103 = vld [vmem:[%s3 + $0x20] sm:$0xf]
  %v104 = vld [vmem:[%s3 + $0x24] sm:$0xf]
  %v105 = vld [vmem:[%s3 + $0x28] sm:$0xf]
  %v106 = vld [vmem:[%s3 + $0x2c] sm:$0xf]
  %v107 = vld [vmem:[%s3 + $0x30] sm:$0xf]
  %v108 = vld [vmem:[%s3 + $0x34] sm:$0xf]
  %v109 = vld [vmem:[%s3 + $0x38] sm:$0xf]
  %v110 = vld [vmem:[%s3 + $0x3c] sm:$0xf]
  %v111 = vunpack.c.l.bf16 %v95
  %v112 = vunpack.c.l.bf16 %v96
  %v113 = vunpack.c.l.bf16 %v97
  %v114 = vunpack.c.l.bf16 %v98
  %v115 = vunpack.c.l.bf16 %v99
  %v116 = vunpack.c.l.bf16 %v100
  %v117 = vunpack.c.l.bf16 %v101
  %v118 = vunpack.c.l.bf16 %v102
  %v119 = vunpack.c.l.bf16 %v103
  %v120 = vunpack.c.l.bf16 %v104
  %v121 = vunpack.c.l.bf16 %v105
  %v122 = vunpack.c.l.bf16 %v106
  %v123 = vunpack.c.l.bf16 %v107
  %v124 = vunpack.c.l.bf16 %v108
  %v125 = vunpack.c.l.bf16 %v109
  %v126 = vunpack.c.l.bf16 %v110
  %v127 = vld [vmem:[%s4] sm:$0x1]
  %v129 = vperm.slane %v127, 0
  %v131 = vmul.f32 %v111, %v129
  %v132 = vmul.f32 %v112, %v129
  %v133 = vmul.f32 %v113, %v129
  %v134 = vmul.f32 %v114, %v129
  %v135 = vmul.f32 %v115, %v129
  %v136 = vmul.f32 %v116, %v129
  %v137 = vmul.f32 %v117, %v129
  %v138 = vmul.f32 %v118, %v129
  %v139 = vmul.f32 %v119, %v129
  %v140 = vmul.f32 %v120, %v129
  %v141 = vmul.f32 %v121, %v129
  %v142 = vmul.f32 %v122, %v129
  %v143 = vmul.f32 %v123, %v129
  %v144 = vmul.f32 %v124, %v129
  %v145 = vmul.f32 %v125, %v129
  %v146 = vmul.f32 %v126, %v129
  %v147 = vadd.f32 %v79, %v131
  %v148 = vadd.f32 %v80, %v132
  %v149 = vadd.f32 %v81, %v133
  %v150 = vadd.f32 %v82, %v134
  %v151 = vadd.f32 %v83, %v135
  %v152 = vadd.f32 %v84, %v136
  %v153 = vadd.f32 %v85, %v137
  %v154 = vadd.f32 %v86, %v138
  %v155 = vadd.f32 %v87, %v139
  %v156 = vadd.f32 %v88, %v140
  %v157 = vadd.f32 %v89, %v141
  %v158 = vadd.f32 %v90, %v142
  %v159 = vadd.f32 %v91, %v143
  %v160 = vadd.f32 %v92, %v144
  %v161 = vadd.f32 %v93, %v145
  %v162 = vadd.f32 %v94, %v146
  %v163 = vld [vmem:[%s5] sm:$0x1]
  %v165 = vperm.slane %v163, 0
  %v167 = vadd.f32 %v147, %v165
  %v168 = vadd.f32 %v148, %v165
  %v169 = vadd.f32 %v149, %v165
  %v170 = vadd.f32 %v150, %v165
  %v171 = vadd.f32 %v151, %v165
  %v172 = vadd.f32 %v152, %v165
  %v173 = vadd.f32 %v153, %v165
  %v174 = vadd.f32 %v154, %v165
  %v175 = vadd.f32 %v155, %v165
  %v176 = vadd.f32 %v156, %v165
  %v177 = vadd.f32 %v157, %v165
  %v178 = vadd.f32 %v158, %v165
  %v179 = vadd.f32 %v159, %v165
  %v180 = vadd.f32 %v160, %v165
  %v181 = vadd.f32 %v161, %v165
  %v182 = vadd.f32 %v162, %v165
  %v183 = vmax.f32 %v167, 0.0
  %v184 = vmax.f32 %v168, 0.0
  %v185 = vmax.f32 %v169, 0.0
  %v186 = vmax.f32 %v170, 0.0
  %v187 = vmax.f32 %v171, 0.0
  %v188 = vmax.f32 %v172, 0.0
  %v189 = vmax.f32 %v173, 0.0
  %v190 = vmax.f32 %v174, 0.0
  %v191 = vmax.f32 %v175, 0.0
  %v192 = vmax.f32 %v176, 0.0
  %v193 = vmax.f32 %v177, 0.0
  %v194 = vmax.f32 %v178, 0.0
  %v195 = vmax.f32 %v179, 0.0
  %v196 = vmax.f32 %v180, 0.0
  %v197 = vmax.f32 %v181, 0.0
  %v198 = vmax.f32 %v182, 0.0
  %199 = vst [vmem:[%s6] sm:$0xff] %v183
  %200 = vst [vmem:[%s6 + $0x8] sm:$0xff] %v184
  %201 = vst [vmem:[%s6 + $0x10] sm:$0xff] %v185
  %202 = vst [vmem:[%s6 + $0x18] sm:$0xff] %v186
  %203 = vst [vmem:[%s6 + $0x20] sm:$0xff] %v187
  %204 = vst [vmem:[%s6 + $0x28] sm:$0xff] %v188
  %205 = vst [vmem:[%s6 + $0x30] sm:$0xff] %v189
  %206 = vst [vmem:[%s6 + $0x38] sm:$0xff] %v190
  %207 = vst [vmem:[%s6 + $0x40] sm:$0xff] %v191
  %208 = vst [vmem:[%s6 + $0x48] sm:$0xff] %v192
  %209 = vst [vmem:[%s6 + $0x50] sm:$0xff] %v193
  %210 = vst [vmem:[%s6 + $0x58] sm:$0xff] %v194
  %211 = vst [vmem:[%s6 + $0x60] sm:$0xff] %v195
  %212 = vst [vmem:[%s6 + $0x68] sm:$0xff] %v196
  %213 = vst [vmem:[%s6 + $0x70] sm:$0xff] %v197
  %214 = vst [vmem:[%s6 + $0x78] sm:$0xff] %v198
  // Predicated region
  $region26: #{basic_block_forward.9} parent=0 // pred_check
    _
  $region27: #{basic_block_forward.9} parent=0 // pred_check_branch
    %216 = sbr.rel (0) target = $region29
  $region28: #{basic_block_forward.9} parent=0 // pred_region
    _
  $region29: #{basic_block_forward.9} parent=0 // pred_fallthru
    _
  // Predicated region
  $region30: #{basic_block_forward.9} parent=0 // pred_check
    _
  $region31: #{basic_block_forward.9} parent=0 // pred_check_branch
    %218 = sbr.rel (0) target = $region33
  $region32: #{basic_block_forward.9} parent=0 // pred_region
    _
  $region33: #{basic_block_forward.9} parent=0 // pred_fallthru
    _

// kernel: basic_block_forward.7
$region0: #{basic_block_forward.7}
  #allocation0 [shape = 'u32[]', space=smem, size = 0x4, offset = 0x4, fixed_abs, tag = 'smem constant byte address 0x4 - core index']
  #allocation1 [shape = 'u32[72,128]{1,0:T(1,128)}', space=vmem, size = 0x9000, scoped, tag = 'internal scratch']
  %s0 = inlined_call_operand.vmem [shape: bf16[1,2,10,10,128], index: 0, kind: input, shape index: {}]
  %s1 = inlined_call_operand.vmem [shape: bf16[1152,128], index: 1, kind: input, shape index: {}]
  %s2 = inlined_call_operand.vmem [shape: bf16[2,64,128], index: 2, kind: output, shape index: {0}]
  %s3 = inlined_call_operand.vmem [shape: f32[2,2,128], index: 3, kind: output, shape index: {1}]
  %4 = xla_tuple %s2, %s3
  %s5 = sld [smem:[#allocation0]]
  $region49: #{basic_block_forward.7} parent=0
    _
  %s7 = ssub.s32 1, %s5
  %s8 = scalar_select 0, %s7, %s5
  loop: start=0, step=1, limit=4
  $region2: #{basic_block_forward.7} parent=0 // loop_pre_header
    _
  $region3: #{basic_block_forward.7} parent=0 // loop_header
    %s10 = sphi 0, %s14
    %p11 = scmp.ge.s32.totalorder %s10, 4
    %s17 = sphi 0, %s29
    %s18 = sphi 0, %s25
    %s19 = sphi 0, %s17
    %s20 = sphi 0, %s18
    %s21 = sphi 0, %s19
    %s22 = sphi 0, %s20
    %s32 = sphi 0, %s34
    %s35 = sphi 0, %s32
    %s36 = sphi 0, %s35
    %s52 = sphi 0, %s36
    %s56 = sphi 0, %s56
    %s58 = sphi 0, %s56
    %s59 = sphi 0, %s58
    %s73 = sphi 0, %s59
    %s81 = sphi 0, %s83
    %s84 = sphi 0, %s81
    %s85 = sphi 0, %s84
    %s101 = sphi 0, %s85
    %s109 = sphi 0, %s111
    %s112 = sphi 0, %s109
    %s113 = sphi 0, %s112
    %s129 = sphi 0, %s113
  $region4: #{basic_block_forward.7} parent=0 // loop_header_branch
    %13 = sbr.rel (%p11) target = $region8
  $region5: #{basic_block_forward.7} parent=0 // loop_body
    %s15 = ssub.s32 %s10, 1
    %s16 = ssub.s32 %s10, 2
    %s23 = sadd.s32 1, %s18
    %p24 = scmp.ge.s32.totalorder %s23, 1
    %s25 = scalar_select %p24, 0, %s23
    %s26 = sadd.s32 1, %s17
    %s27 = scalar_select %p24, %s26, %s17
    %p28 = scmp.ge.s32.totalorder %s27, 2
    %s29 = scalar_select %p28, 0, %s27
    %s30 = ssub.s32 %s17, %s29
    %p31 = scmp.eq.s32.totalorder %s30, 0
    %s33 = sadd.s32 %s32, 1
    %s34 = scalar_select %p31, %s32, %s33
    %p37 = pneg %p31
    %p38 = scmp.eq.s32.totalorder %s10, 1
    %p39 = por %p37, %p38
    %p40 = scmp.ne.s32.totalorder %s32, %s35
    %p41 = scmp.eq.s32.totalorder %s10, 0
    %p42 = por %p40, %p41
    %p43 = scmp.ne.s32.totalorder %s32, %s35
    %p44 = scmp.eq.s32.totalorder %s15, 1
    %p45 = por %p43, %p44
    %p46 = scmp.ne.s32.totalorder %s35, %s36
    %p47 = scmp.eq.s32.totalorder %s15, 0
    %p48 = por %p46, %p47
    %p49 = scmp.ne.s32.totalorder %s35, %s36
    %p50 = scmp.eq.s32.totalorder %s16, 1
    %p51 = por %p49, %p50
    %p53 = scmp.ne.s32.totalorder %s36, %s52
    %p54 = scmp.eq.s32.totalorder %s16, 0
    %p55 = por %p53, %p54
    %s57 = sadd.s32 %s56, 1
    %p60 = scmp.eq.s32.totalorder %s10, 1
    %p61 = scmp.ne.s32.totalorder %s56, %s58
    %p62 = scmp.eq.s32.totalorder %s10, 0
    %p63 = por %p61, %p62
    %p64 = scmp.ne.s32.totalorder %s56, %s58
    %p65 = scmp.eq.s32.totalorder %s15, 1
    %p66 = por %p64, %p65
    %p67 = scmp.ne.s32.totalorder %s58, %s59
    %p68 = scmp.eq.s32.totalorder %s15, 0
    %p69 = por %p67, %p68
    %p70 = scmp.ne.s32.totalorder %s58, %s59
    %p71 = scmp.eq.s32.totalorder %s16, 1
    %p72 = por %p70, %p71
    %p74 = scmp.ne.s32.totalorder %s59, %s73
    %p75 = scmp.eq.s32.totalorder %s16, 0
    %p76 = por %p74, %p75
    %s77 = sadd.s32 %s17, %s18
    %s78 = sadd.s32 %s29, %s25
    %s79 = ssub.s32 %s77, %s78
    %p80 = scmp.eq.s32.totalorder %s79, 0
    %s82 = sadd.s32 %s81, 1
    %s83 = scalar_select %p80, %s81, %s82
    %p86 = pneg %p80
    %p87 = scmp.eq.s32.totalorder %s10, 1
    %p88 = por %p86, %p87
    %p89 = scmp.ne.s32.totalorder %s81, %s84
    %p90 = scmp.eq.s32.totalorder %s10, 0
    %p91 = por %p89, %p90
    %p92 = scmp.ne.s32.totalorder %s81, %s84
    %p93 = scmp.eq.s32.totalorder %s15, 1
    %p94 = por %p92, %p93
    %p95 = scmp.ne.s32.totalorder %s84, %s85
    %p96 = scmp.eq.s32.totalorder %s15, 0
    %p97 = por %p95, %p96
    %p98 = scmp.ne.s32.totalorder %s84, %s85
    %p99 = scmp.eq.s32.totalorder %s16, 1
    %p100 = por %p98, %p99
    %p102 = scmp.ne.s32.totalorder %s85, %s101
    %p103 = scmp.eq.s32.totalorder %s16, 0
    %p104 = por %p102, %p103
    %s105 = sadd.s32 %s17, %s18
    %s106 = sadd.s32 %s29, %s25
    %s107 = ssub.s32 %s105, %s106
    %p108 = scmp.eq.s32.totalorder %s107, 0
    %s110 = sadd.s32 %s109, 1
    %s111 = scalar_select %p108, %s109, %s110
    %p114 = pneg %p108
    %p115 = scmp.eq.s32.totalorder %s10, 1
    %p116 = por %p114, %p115
    %p117 = scmp.ne.s32.totalorder %s109, %s112
    %p118 = scmp.eq.s32.totalorder %s10, 0
    %p119 = por %p117, %p118
    %p120 = scmp.ne.s32.totalorder %s109, %s112
    %p121 = scmp.eq.s32.totalorder %s15, 1
    %p122 = por %p120, %p121
    %p123 = scmp.ne.s32.totalorder %s112, %s113
    %p124 = scmp.eq.s32.totalorder %s15, 0
    %p125 = por %p123, %p124
    %p126 = scmp.ne.s32.totalorder %s112, %s113
    %p127 = scmp.eq.s32.totalorder %s16, 1
    %p128 = por %p126, %p127
    %p130 = scmp.ne.s32.totalorder %s113, %s129
    %p131 = scmp.eq.s32.totalorder %s16, 0
    %p132 = por %p130, %p131
    %p133 = scmp.le.s32.totalorder 1, %s10
    %p134 = scmp.lt.s32.totalorder %s10, 3
    %p135 = pnand %p133, %p134
    %p136 = pneg %p135
    // Predicated region
    $region9: #{basic_block_forward.7} parent=5 // pred_check
      _
    $region10: #{basic_block_forward.7} parent=5 // pred_check_branch
      %138 = sbr.rel (%p135) target = $region12
    $region11: #{basic_block_forward.7} parent=5 // pred_region
      %s139 = ssub.s32 %s10, 1
      // Predicated region
      $region13: #{basic_block_forward.7} parent=11 // pred_check
        %p140 = pneg %p69
      $region14: #{basic_block_forward.7} parent=11 // pred_check_branch
        %142 = sbr.rel (%p140) target = $region16
      $region15: #{basic_block_forward.7} parent=11 // pred_region
        _
      $region16: #{basic_block_forward.7} parent=11 // pred_fallthru
        _
    $region12: #{basic_block_forward.7} parent=5 // pred_fallthru
      _
    %p143 = scmp.lt.s32.totalorder %s10, 2
    // Predicated region
    $region17: #{basic_block_forward.7} parent=5 // pred_check
      %p144 = pneg %p143
    $region18: #{basic_block_forward.7} parent=5 // pred_check_branch
      %146 = sbr.rel (%p144) target = $region20
    $region19: #{basic_block_forward.7} parent=5 // pred_region
      // Predicated region
      $region21: #{basic_block_forward.7} parent=19 // pred_check
        %p147 = pneg %p42
      $region22: #{basic_block_forward.7} parent=19 // pred_check_branch
        %149 = sbr.rel (%p147) target = $region24
      $region23: #{basic_block_forward.7} parent=19 // pred_region
        %p150 = scmp.lt.s32.totalorder %s17, 1
        %s151 = scalar_select %p150, %s17, 1
        %s152 = smul.addr %s151, 20
        %s153 = smul.addr %s152, 4
        %s154 = scalar_lea.vmem %s0, %s153
      $region24: #{basic_block_forward.7} parent=19 // pred_fallthru
        _
    $region20: #{basic_block_forward.7} parent=5 // pred_fallthru
      _
    %p155 = scmp.le.s32.totalorder 1, %s10
    %p156 = scmp.lt.s32.totalorder %s10, 3
    %p157 = pnand %p155, %p156
    %p158 = pneg %p157
    // Predicated region
    $region25: #{basic_block_forward.7} parent=5 // pred_check
      _
    $region26: #{basic_block_forward.7} parent=5 // pred_check_branch
      %160 = sbr.rel (%p157) target = $region28
    $region27: #{basic_block_forward.7} parent=5 // pred_region
      %s161 = ssub.s32 %s10, 1
      %p162 = scmp.lt.s32.totalorder %s19, 1
      %s163 = scalar_select %p162, %s19, 1
      %s164 = smul.addr %s163, 20
      %s165 = smul.addr %s164, 4
      %s166 = scalar_lea.vmem %s0, %s165
      %p167 = pneg %p48
      %p168 = pneg %p45
      %p169 = pneg %p69
      %p170 = pneg %p66
      %p171 = pneg %p97
      %p172 = pneg %p94
      %s173 = sadd.s32 %s19, %s20
      %p174 = scmp.lt.s32.totalorder %s173, 1
      %s175 = scalar_select %p174, %s173, 1
      %s176 = smul.addr %s175, 8
      %s177 = smul.addr %s176, 4
      %s178 = scalar_lea.vmem %s2, %s177
      %p179 = pneg %p125
      %p180 = pneg %p122
      %s181 = sadd.s32 %s19, %s20
      %p182 = scmp.lt.s32.totalorder %s181, 1
      %s183 = scalar_select %p182, %s181, 1
      %s184 = smul.addr %s183, 2
      %s185 = scalar_lea.vmem %s3, %s184
      %p186 = scmp.lt.s32.totalorder %s19, 1
      %s187 = scalar_select %p186, %s19, 1
      %s188 = smul.addr %s187, 20
      %s189 = smul.addr %s188, 4
      %s190 = scalar_lea.vmem %s0, %s189
      %s191 = sadd.s32 %s19, %s20
      %p192 = scmp.lt.s32.totalorder %s191, 1
      %s193 = scalar_select %p192, %s191, 1
      %s194 = smul.addr %s193, 8
      %s195 = smul.addr %s194, 4
      %s196 = scalar_lea.vmem %s2, %s195
      %s197 = sadd.s32 %s19, %s20
      %s198 = sadd.s32 %s19, %s20
      %p199 = scmp.lt.s32.totalorder %s198, 1
      %s200 = scalar_select %p199, %s198, 1
      %s201 = smul.addr %s200, 2
      %s202 = scalar_lea.vmem %s3, %s201
      %s203 = sadd.s32 %s19, %s20
      %s204 = smul.u32 %s20, 8
      %s205 = smul.u32 %s204, 2
      %s206 = smul.addr %s205, 4
      %s207 = scalar_lea.vmem %s190, %s206
      %v208 = vld [vmem:[%s207] sm:$0xf]
      %v209 = vld [vmem:[%s207 + $0x8] sm:$0xf]
      %v210 = vld [vmem:[%s207 + $0x10] sm:$0xf]
      %v211 = vld [vmem:[%s207 + $0x18] sm:$0xf]
      %v212 = vld [vmem:[%s207 + $0x20] sm:$0xf]
      %v213 = vld [vmem:[%s207 + $0x28] sm:$0xf]
      %v214 = vld [vmem:[%s207 + $0x30] sm:$0xf]
      %v215 = vld [vmem:[%s207 + $0x38] sm:$0xf]
      %v216 = vld [vmem:[%s207 + $0x4] sm:$0x1]
      %v217 = vld [vmem:[%s207 + $0xc] sm:$0x1]
      %v218 = vld [vmem:[%s207 + $0x14] sm:$0x1]
      %v219 = vld [vmem:[%s207 + $0x1c] sm:$0x1]
      %v220 = vld [vmem:[%s207 + $0x24] sm:$0x1]
      %v221 = vld [vmem:[%s207 + $0x2c] sm:$0x1]
      %v222 = vld [vmem:[%s207 + $0x34] sm:$0x1]
      %v223 = vld [vmem:[%s207 + $0x3c] sm:$0x1]
      %v224 = vld [vmem:[%s207] sm:$0xe]
      %v225 = vld [vmem:[%s207 + $0x8] sm:$0xe]
      %v226 = vld [vmem:[%s207 + $0x10] sm:$0xe]
      %v227 = vld [vmem:[%s207 + $0x18] sm:$0xe]
      %v228 = vld [vmem:[%s207 + $0x20] sm:$0xe]
      %v229 = vld [vmem:[%s207 + $0x28] sm:$0xe]
      %v230 = vld [vmem:[%s207 + $0x30] sm:$0xe]
      %v231 = vld [vmem:[%s207 + $0x38] sm:$0xe]
      %s232 = sadd.s32 %s204, 1
      %s233 = smul.u32 %s232, 2
      %s234 = smul.addr %s233, 4
      %s235 = scalar_lea.vmem %s190, %s234
      %v236 = vld [vmem:[%s235] sm:$0xf]
      %v237 = vld [vmem:[%s235 + $0x8] sm:$0xf]
      %v238 = vld [vmem:[%s235 + $0x10] sm:$0xf]
      %v239 = vld [vmem:[%s235 + $0x18] sm:$0xf]
      %v240 = vld [vmem:[%s235 + $0x20] sm:$0xf]
      %v241 = vld [vmem:[%s235 + $0x28] sm:$0xf]
      %v242 = vld [vmem:[%s235 + $0x30] sm:$0xf]
      %v243 = vld [vmem:[%s235 + $0x38] sm:$0xf]
      %v244 = vld [vmem:[%s235 + $0x4] sm:$0x1]
      %v245 = vld [vmem:[%s235 + $0xc] sm:$0x1]
      %v246 = vld [vmem:[%s235 + $0x14] sm:$0x1]
      %v247 = vld [vmem:[%s235 + $0x1c] sm:$0x1]
      %v248 = vld [vmem:[%s235 + $0x24] sm:$0x1]
      %v249 = vld [vmem:[%s235 + $0x2c] sm:$0x1]
      %v250 = vld [vmem:[%s235 + $0x34] sm:$0x1]
      %v251 = vld [vmem:[%s235 + $0x3c] sm:$0x1]
      %v252 = vld [vmem:[%s235] sm:$0xe]
      %v253 = vld [vmem:[%s235 + $0x8] sm:$0xe]
      %v254 = vld [vmem:[%s235 + $0x10] sm:$0xe]
      %v255 = vld [vmem:[%s235 + $0x18] sm:$0xe]
      %v256 = vld [vmem:[%s235 + $0x20] sm:$0xe]
      %v257 = vld [vmem:[%s235 + $0x28] sm:$0xe]
      %v258 = vld [vmem:[%s235 + $0x30] sm:$0xe]
      %v259 = vld [vmem:[%s235 + $0x38] sm:$0xe]
      %s260 = sadd.s32 %s204, 2
      %s261 = smul.u32 %s260, 2
      %s262 = smul.addr %s261, 4
      %s263 = scalar_lea.vmem %s190, %s262
      %v264 = vld [vmem:[%s263] sm:$0xf]
      %v265 = vld [vmem:[%s263 + $0x8] sm:$0xf]
      %v266 = vld [vmem:[%s263 + $0x10] sm:$0xf]
      %v267 = vld [vmem:[%s263 + $0x18] sm:$0xf]
      %v268 = vld [vmem:[%s263 + $0x20] sm:$0xf]
      %v269 = vld [vmem:[%s263 + $0x28] sm:$0xf]
      %v270 = vld [vmem:[%s263 + $0x30] sm:$0xf]
      %v271 = vld [vmem:[%s263 + $0x38] sm:$0xf]
      %v272 = vld [vmem:[%s263 + $0x4] sm:$0x1]
      %v273 = vld [vmem:[%s263 + $0xc] sm:$0x1]
      %v274 = vld [vmem:[%s263 + $0x14] sm:$0x1]
      %v275 = vld [vmem:[%s263 + $0x1c] sm:$0x1]
      %v276 = vld [vmem:[%s263 + $0x24] sm:$0x1]
      %v277 = vld [vmem:[%s263 + $0x2c] sm:$0x1]
      %v278 = vld [vmem:[%s263 + $0x34] sm:$0x1]
      %v279 = vld [vmem:[%s263 + $0x3c] sm:$0x1]
      %v280 = vld [vmem:[%s263] sm:$0xe]
      %v281 = vld [vmem:[%s263 + $0x8] sm:$0xe]
      %v282 = vld [vmem:[%s263 + $0x10] sm:$0xe]
      %v283 = vld [vmem:[%s263 + $0x18] sm:$0xe]
      %v284 = vld [vmem:[%s263 + $0x20] sm:$0xe]
      %v285 = vld [vmem:[%s263 + $0x28] sm:$0xe]
      %v286 = vld [vmem:[%s263 + $0x30] sm:$0xe]
      %v287 = vld [vmem:[%s263 + $0x38] sm:$0xe]
      %v304 = vunpack.c.l.b16 %v208
      %v305 = vunpack.c.l.b16 %v216
      %v306 = vunpack.c.l.b16 %v209
      %v307 = vunpack.c.l.b16 %v217
      %v308 = vunpack.c.l.b16 %v210
      %v309 = vunpack.c.l.b16 %v218
      %v310 = vunpack.c.l.b16 %v211
      %v311 = vunpack.c.l.b16 %v219
      %v312 = vunpack.c.l.b16 %v212
      %v313 = vunpack.c.l.b16 %v220
      %v314 = vunpack.c.l.b16 %v213
      %v315 = vunpack.c.l.b16 %v221
      %v316 = vunpack.c.l.b16 %v214
      %v317 = vunpack.c.l.b16 %v222
      %v318 = vunpack.c.l.b16 %v215
      %v319 = vunpack.c.l.b16 %v223
      %v320 = vpack.c.b16 %v305, %v304
      %v321 = vpack.c.b16 %v307, %v306
      %v322 = vpack.c.b16 %v309, %v308
      %v323 = vpack.c.b16 %v311, %v310
      %v324 = vpack.c.b16 %v313, %v312
      %v325 = vpack.c.b16 %v315, %v314
      %v326 = vpack.c.b16 %v317, %v316
      %v327 = vpack.c.b16 %v319, %v318
      %v329 = vshrl.u32 %v320, 16
      %v331 = vshll.u32 %v320, 16
      %v333 = vrot.slane %v331, 1
      %v334 = vor.u32 %v329, %v333
      %v336 = vshrl.u32 %v321, 16
      %v338 = vshll.u32 %v321, 16
      %v340 = vrot.slane %v338, 1
      %v341 = vor.u32 %v336, %v340
      %v343 = vshrl.u32 %v322, 16
      %v345 = vshll.u32 %v322, 16
      %v347 = vrot.slane %v345, 1
      %v348 = vor.u32 %v343, %v347
      %v350 = vshrl.u32 %v323, 16
      %v352 = vshll.u32 %v323, 16
      %v354 = vrot.slane %v352, 1
      %v355 = vor.u32 %v350, %v354
      %v357 = vshrl.u32 %v324, 16
      %v359 = vshll.u32 %v324, 16
      %v361 = vrot.slane %v359, 1
      %v362 = vor.u32 %v357, %v361
      %v364 = vshrl.u32 %v325, 16
      %v366 = vshll.u32 %v325, 16
      %v368 = vrot.slane %v366, 1
      %v369 = vor.u32 %v364, %v368
      %v371 = vshrl.u32 %v326, 16
      %v373 = vshll.u32 %v326, 16
      %v375 = vrot.slane %v373, 1
      %v376 = vor.u32 %v371, %v375
      %v378 = vshrl.u32 %v327, 16
      %v380 = vshll.u32 %v327, 16
      %v382 = vrot.slane %v380, 1
      %v383 = vor.u32 %v378, %v382
      %v392 = vunpack.c.l.b16 %v224
      %v393 = vunpack.c.l.b16 %v225
      %v394 = vunpack.c.l.b16 %v226
      %v395 = vunpack.c.l.b16 %v227
      %v396 = vunpack.c.l.b16 %v228
      %v397 = vunpack.c.l.b16 %v229
      %v398 = vunpack.c.l.b16 %v230
      %v399 = vunpack.c.l.b16 %v231
      %v400 = vpack.c.b16 %v305, %v392
      %v401 = vpack.c.b16 %v307, %v393
      %v402 = vpack.c.b16 %v309, %v394
      %v403 = vpack.c.b16 %v311, %v395
      %v404 = vpack.c.b16 %v313, %v396
      %v405 = vpack.c.b16 %v315, %v397
      %v406 = vpack.c.b16 %v317, %v398
      %v407 = vpack.c.b16 %v319, %v399
      %v408 = vrot.slane %v400, 1
      %v409 = vrot.slane %v401, 1
      %v410 = vrot.slane %v402, 1
      %v411 = vrot.slane %v403, 1
      %v412 = vrot.slane %v404, 1
      %v413 = vrot.slane %v405, 1
      %v414 = vrot.slane %v406, 1
      %v415 = vrot.slane %v407, 1
      %v432 = vunpack.c.l.b16 %v236
      %v433 = vunpack.c.l.b16 %v244
      %v434 = vunpack.c.l.b16 %v237
      %v435 = vunpack.c.l.b16 %v245
      %v436 = vunpack.c.l.b16 %v238
      %v437 = vunpack.c.l.b16 %v246
      %v438 = vunpack.c.l.b16 %v239
      %v439 = vunpack.c.l.b16 %v247
      %v440 = vunpack.c.l.b16 %v240
      %v441 = vunpack.c.l.b16 %v248
      %v442 = vunpack.c.l.b16 %v241
      %v443 = vunpack.c.l.b16 %v249
      %v444 = vunpack.c.l.b16 %v242
      %v445 = vunpack.c.l.b16 %v250
      %v446 = vunpack.c.l.b16 %v243
      %v447 = vunpack.c.l.b16 %v251
      %v448 = vpack.c.b16 %v433, %v432
      %v449 = vpack.c.b16 %v435, %v434
      %v450 = vpack.c.b16 %v437, %v436
      %v451 = vpack.c.b16 %v439, %v438
      %v452 = vpack.c.b16 %v441, %v440
      %v453 = vpack.c.b16 %v443, %v442
      %v454 = vpack.c.b16 %v445, %v444
      %v455 = vpack.c.b16 %v447, %v446
      %v457 = vshrl.u32 %v448, 16
      %v459 = vshll.u32 %v448, 16
      %v461 = vrot.slane %v459, 1
      %v462 = vor.u32 %v457, %v461
      %v464 = vshrl.u32 %v449, 16
      %v466 = vshll.u32 %v449, 16
      %v468 = vrot.slane %v466, 1
      %v469 = vor.u32 %v464, %v468
      %v471 = vshrl.u32 %v450, 16
      %v473 = vshll.u32 %v450, 16
      %v475 = vrot.slane %v473, 1
      %v476 = vor.u32 %v471, %v475
      %v478 = vshrl.u32 %v451, 16
      %v480 = vshll.u32 %v451, 16
      %v482 = vrot.slane %v480, 1
      %v483 = vor.u32 %v478, %v482
      %v485 = vshrl.u32 %v452, 16
      %v487 = vshll.u32 %v452, 16
      %v489 = vrot.slane %v487, 1
      %v490 = vor.u32 %v485, %v489
      %v492 = vshrl.u32 %v453, 16
      %v494 = vshll.u32 %v453, 16
      %v496 = vrot.slane %v494, 1
      %v497 = vor.u32 %v492, %v496
      %v499 = vshrl.u32 %v454, 16
      %v501 = vshll.u32 %v454, 16
      %v503 = vrot.slane %v501, 1
      %v504 = vor.u32 %v499, %v503
      %v506 = vshrl.u32 %v455, 16
      %v508 = vshll.u32 %v455, 16
      %v510 = vrot.slane %v508, 1
      %v511 = vor.u32 %v506, %v510
      %v520 = vunpack.c.l.b16 %v252
      %v521 = vunpack.c.l.b16 %v253
      %v522 = vunpack.c.l.b16 %v254
      %v523 = vunpack.c.l.b16 %v255
      %v524 = vunpack.c.l.b16 %v256
      %v525 = vunpack.c.l.b16 %v257
      %v526 = vunpack.c.l.b16 %v258
      %v527 = vunpack.c.l.b16 %v259
      %v528 = vpack.c.b16 %v433, %v520
      %v529 = vpack.c.b16 %v435, %v521
      %v530 = vpack.c.b16 %v437, %v522
      %v531 = vpack.c.b16 %v439, %v523
      %v532 = vpack.c.b16 %v441, %v524
      %v533 = vpack.c.b16 %v443, %v525
      %v534 = vpack.c.b16 %v445, %v526
      %v535 = vpack.c.b16 %v447, %v527
      %v536 = vrot.slane %v528, 1
      %v537 = vrot.slane %v529, 1
      %v538 = vrot.slane %v530, 1
      %v539 = vrot.slane %v531, 1
      %v540 = vrot.slane %v532, 1
      %v541 = vrot.slane %v533, 1
      %v542 = vrot.slane %v534, 1
      %v543 = vrot.slane %v535, 1
      %v560 = vunpack.c.l.b16 %v264
      %v561 = vunpack.c.l.b16 %v272
      %v562 = vunpack.c.l.b16 %v265
      %v563 = vunpack.c.l.b16 %v273
      %v564 = vunpack.c.l.b16 %v266
      %v565 = vunpack.c.l.b16 %v274
      %v566 = vunpack.c.l.b16 %v267
      %v567 = vunpack.c.l.b16 %v275
      %v568 = vunpack.c.l.b16 %v268
      %v569 = vunpack.c.l.b16 %v276
      %v570 = vunpack.c.l.b16 %v269
      %v571 = vunpack.c.l.b16 %v277
      %v572 = vunpack.c.l.b16 %v270
      %v573 = vunpack.c.l.b16 %v278
      %v574 = vunpack.c.l.b16 %v271
      %v575 = vunpack.c.l.b16 %v279
      %v576 = vpack.c.b16 %v561, %v560
      %v577 = vpack.c.b16 %v563, %v562
      %v578 = vpack.c.b16 %v565, %v564
      %v579 = vpack.c.b16 %v567, %v566
      %v580 = vpack.c.b16 %v569, %v568
      %v581 = vpack.c.b16 %v571, %v570
      %v582 = vpack.c.b16 %v573, %v572
      %v583 = vpack.c.b16 %v575, %v574
      %v585 = vshrl.u32 %v576, 16
      %v587 = vshll.u32 %v576, 16
      %v589 = vrot.slane %v587, 1
      %v590 = vor.u32 %v585, %v589
      %v592 = vshrl.u32 %v577, 16
      %v594 = vshll.u32 %v577, 16
      %v596 = vrot.slane %v594, 1
      %v597 = vor.u32 %v592, %v596
      %v599 = vshrl.u32 %v578, 16
      %v601 = vshll.u32 %v578, 16
      %v603 = vrot.slane %v601, 1
      %v604 = vor.u32 %v599, %v603
      %v606 = vshrl.u32 %v579, 16
      %v608 = vshll.u32 %v579, 16
      %v610 = vrot.slane %v608, 1
      %v611 = vor.u32 %v606, %v610
      %v613 = vshrl.u32 %v580, 16
      %v615 = vshll.u32 %v580, 16
      %v617 = vrot.slane %v615, 1
      %v618 = vor.u32 %v613, %v617
      %v620 = vshrl.u32 %v581, 16
      %v622 = vshll.u32 %v581, 16
      %v624 = vrot.slane %v622, 1
      %v625 = vor.u32 %v620, %v624
      %v627 = vshrl.u32 %v582, 16
      %v629 = vshll.u32 %v582, 16
      %v631 = vrot.slane %v629, 1
      %v632 = vor.u32 %v627, %v631
      %v634 = vshrl.u32 %v583, 16
      %v636 = vshll.u32 %v583, 16
      %v638 = vrot.slane %v636, 1
      %v639 = vor.u32 %v634, %v638
      %v648 = vunpack.c.l.b16 %v280
      %v649 = vunpack.c.l.b16 %v281
      %v650 = vunpack.c.l.b16 %v282
      %v651 = vunpack.c.l.b16 %v283
      %v652 = vunpack.c.l.b16 %v284
      %v653 = vunpack.c.l.b16 %v285
      %v654 = vunpack.c.l.b16 %v286
      %v655 = vunpack.c.l.b16 %v287
      %v656 = vpack.c.b16 %v561, %v648
      %v657 = vpack.c.b16 %v563, %v649
      %v658 = vpack.c.b16 %v565, %v650
      %v659 = vpack.c.b16 %v567, %v651
      %v660 = vpack.c.b16 %v569, %v652
      %v661 = vpack.c.b16 %v571, %v653
      %v662 = vpack.c.b16 %v573, %v654
      %v663 = vpack.c.b16 %v575, %v655
      %v664 = vrot.slane %v656, 1
      %v665 = vrot.slane %v657, 1
      %v666 = vrot.slane %v658, 1
      %v667 = vrot.slane %v659, 1
      %v668 = vrot.slane %v660, 1
      %v669 = vrot.slane %v661, 1
      %v670 = vrot.slane %v662, 1
      %v671 = vrot.slane %v663, 1
      %v672 = vunpack.c.l.b16 %v334
      %v673 = vunpack.c.l.b16 %v408
      %v674 = vunpack.c.l.b16 %v462
      %v675 = vunpack.c.l.b16 %v536
      %v676 = vunpack.c.l.b16 %v590
      %v677 = vunpack.c.l.b16 %v664
      %v678 = vunpack.c.l.b16 %v341
      %v679 = vunpack.c.l.b16 %v409
      %v680 = vunpack.c.l.b16 %v469
      %v681 = vunpack.c.l.b16 %v537
      %v682 = vunpack.c.l.b16 %v597
      %v683 = vunpack.c.l.b16 %v665
      %v684 = vunpack.c.l.b16 %v348
      %v685 = vunpack.c.l.b16 %v410
      %v686 = vunpack.c.l.b16 %v476
      %v687 = vunpack.c.l.b16 %v538
      %v688 = vunpack.c.l.b16 %v604
      %v689 = vunpack.c.l.b16 %v666
      %v690 = vunpack.c.l.b16 %v355
      %v691 = vunpack.c.l.b16 %v411
      %v692 = vunpack.c.l.b16 %v483
      %v693 = vunpack.c.l.b16 %v539
      %v694 = vunpack.c.l.b16 %v611
      %v695 = vunpack.c.l.b16 %v667
      %v696 = vunpack.c.l.b16 %v362
      %v697 = vunpack.c.l.b16 %v412
      %v698 = vunpack.c.l.b16 %v490
      %v699 = vunpack.c.l.b16 %v540
      %v700 = vunpack.c.l.b16 %v618
      %v701 = vunpack.c.l.b16 %v668
      %v702 = vunpack.c.l.b16 %v369
      %v703 = vunpack.c.l.b16 %v413
      %v704 = vunpack.c.l.b16 %v497
      %v705 = vunpack.c.l.b16 %v541
      %v706 = vunpack.c.l.b16 %v625
      %v707 = vunpack.c.l.b16 %v669
      %v708 = vunpack.c.l.b16 %v376
      %v709 = vunpack.c.l.b16 %v414
      %v710 = vunpack.c.l.b16 %v504
      %v711 = vunpack.c.l.b16 %v542
      %v712 = vunpack.c.l.b16 %v632
      %v713 = vunpack.c.l.b16 %v670
      %v714 = vunpack.c.l.b16 %v383
      %v715 = vunpack.c.l.b16 %v415
      %v716 = vunpack.c.l.b16 %v511
      %v717 = vunpack.c.l.b16 %v543
      %v718 = vunpack.c.l.b16 %v639
      %v719 = vunpack.c.l.b16 %v671
      %v720 = vld [vmem:[%s1] sm:$0xf]
      %v721 = vld [vmem:[%s1 + $0x4] sm:$0xf]
      %v722 = vld [vmem:[%s1 + $0x8] sm:$0xf]
      %v723 = vld [vmem:[%s1 + $0xc] sm:$0xf]
      %v724 = vld [vmem:[%s1 + $0x10] sm:$0xf]
      %v725 = vld [vmem:[%s1 + $0x14] sm:$0xf]
      %v726 = vld [vmem:[%s1 + $0x18] sm:$0xf]
      %v727 = vld [vmem:[%s1 + $0x1c] sm:$0xf]
      %v728 = vld [vmem:[%s1 + $0x20] sm:$0xf]
      %v729 = vld [vmem:[%s1 + $0x24] sm:$0xf]
      %v730 = vld [vmem:[%s1 + $0x28] sm:$0xf]
      %v731 = vld [vmem:[%s1 + $0x2c] sm:$0xf]
      %v732 = vld [vmem:[%s1 + $0x30] sm:$0xf]
      %v733 = vld [vmem:[%s1 + $0x34] sm:$0xf]
      %v734 = vld [vmem:[%s1 + $0x38] sm:$0xf]
      %v735 = vld [vmem:[%s1 + $0x3c] sm:$0xf]
      %v736 = vld [vmem:[%s1 + $0x40] sm:$0xf]
      %v737 = vld [vmem:[%s1 + $0x44] sm:$0xf]
      %v738 = vld [vmem:[%s1 + $0x48] sm:$0xf]
      %v739 = vld [vmem:[%s1 + $0x4c] sm:$0xf]
      %v740 = vld [vmem:[%s1 + $0x50] sm:$0xf]
      %v741 = vld [vmem:[%s1 + $0x54] sm:$0xf]
      %v742 = vld [vmem:[%s1 + $0x58] sm:$0xf]
      %v743 = vld [vmem:[%s1 + $0x5c] sm:$0xf]
      %v744 = vld [vmem:[%s1 + $0x60] sm:$0xf]
      %v745 = vld [vmem:[%s1 + $0x64] sm:$0xf]
      %v746 = vld [vmem:[%s1 + $0x68] sm:$0xf]
      %v747 = vld [vmem:[%s1 + $0x6c] sm:$0xf]
      %v748 = vld [vmem:[%s1 + $0x70] sm:$0xf]
      %v749 = vld [vmem:[%s1 + $0x74] sm:$0xf]
      %v750 = vld [vmem:[%s1 + $0x78] sm:$0xf]
      %v751 = vld [vmem:[%s1 + $0x7c] sm:$0xf]
      %v752 = vld [vmem:[%s1 + $0x80] sm:$0xf]
      %v753 = vld [vmem:[%s1 + $0x84] sm:$0xf]
      %v754 = vld [vmem:[%s1 + $0x88] sm:$0xf]
      %v755 = vld [vmem:[%s1 + $0x8c] sm:$0xf]
      %v756 = vld [vmem:[%s1 + $0x90] sm:$0xf]
      %v757 = vld [vmem:[%s1 + $0x94] sm:$0xf]
      %v758 = vld [vmem:[%s1 + $0x98] sm:$0xf]
      %v759 = vld [vmem:[%s1 + $0x9c] sm:$0xf]
      %v760 = vld [vmem:[%s1 + $0xa0] sm:$0xf]
      %v761 = vld [vmem:[%s1 + $0xa4] sm:$0xf]
      %v762 = vld [vmem:[%s1 + $0xa8] sm:$0xf]
      %v763 = vld [vmem:[%s1 + $0xac] sm:$0xf]
      %v764 = vld [vmem:[%s1 + $0xb0] sm:$0xf]
      %v765 = vld [vmem:[%s1 + $0xb4] sm:$0xf]
      %v766 = vld [vmem:[%s1 + $0xb8] sm:$0xf]
      %v767 = vld [vmem:[%s1 + $0xbc] sm:$0xf]
      %v768 = vld [vmem:[%s1 + $0xc0] sm:$0xf]
      %v769 = vld [vmem:[%s1 + $0xc4] sm:$0xf]
      %v770 = vld [vmem:[%s1 + $0xc8] sm:$0xf]
      %v771 = vld [vmem:[%s1 + $0xcc] sm:$0xf]
      %v772 = vld [vmem:[%s1 + $0xd0] sm:$0xf]
      %v773 = vld [vmem:[%s1 + $0xd4] sm:$0xf]
      %v774 = vld [vmem:[%s1 + $0xd8] sm:$0xf]
      %v775 = vld [vmem:[%s1 + $0xdc] sm:$0xf]
      %v776 = vld [vmem:[%s1 + $0xe0] sm:$0xf]
      %v777 = vld [vmem:[%s1 + $0xe4] sm:$0xf]
      %v778 = vld [vmem:[%s1 + $0xe8] sm:$0xf]
      %v779 = vld [vmem:[%s1 + $0xec] sm:$0xf]
      %v780 = vld [vmem:[%s1 + $0xf0] sm:$0xf]
      %v781 = vld [vmem:[%s1 + $0xf4] sm:$0xf]
      %v782 = vld [vmem:[%s1 + $0xf8] sm:$0xf]
      %v783 = vld [vmem:[%s1 + $0xfc] sm:$0xf]
      %v784 = vld [vmem:[%s1 + $0x100] sm:$0xf]
      %v785 = vld [vmem:[%s1 + $0x104] sm:$0xf]
      %v786 = vld [vmem:[%s1 + $0x108] sm:$0xf]
      %v787 = vld [vmem:[%s1 + $0x10c] sm:$0xf]
      %v788 = vld [vmem:[%s1 + $0x110] sm:$0xf]
      %v789 = vld [vmem:[%s1 + $0x114] sm:$0xf]
      %v790 = vld [vmem:[%s1 + $0x118] sm:$0xf]
      %v791 = vld [vmem:[%s1 + $0x11c] sm:$0xf]
      %v792 = vld [vmem:[%s1 + $0x120] sm:$0xf]
      %v793 = vld [vmem:[%s1 + $0x124] sm:$0xf]
      %v794 = vld [vmem:[%s1 + $0x128] sm:$0xf]
      %v795 = vld [vmem:[%s1 + $0x12c] sm:$0xf]
      %v796 = vld [vmem:[%s1 + $0x130] sm:$0xf]
      %v797 = vld [vmem:[%s1 + $0x134] sm:$0xf]
      %v798 = vld [vmem:[%s1 + $0x138] sm:$0xf]
      %v799 = vld [vmem:[%s1 + $0x13c] sm:$0xf]
      %v800 = vld [vmem:[%s1 + $0x140] sm:$0xf]
      %v801 = vld [vmem:[%s1 + $0x144] sm:$0xf]
      %v802 = vld [vmem:[%s1 + $0x148] sm:$0xf]
      %v803 = vld [vmem:[%s1 + $0x14c] sm:$0xf]
      %v804 = vld [vmem:[%s1 + $0x150] sm:$0xf]
      %v805 = vld [vmem:[%s1 + $0x154] sm:$0xf]
      %v806 = vld [vmem:[%s1 + $0x158] sm:$0xf]
      %v807 = vld [vmem:[%s1 + $0x15c] sm:$0xf]
      %v808 = vld [vmem:[%s1 + $0x160] sm:$0xf]
      %v809 = vld [vmem:[%s1 + $0x164] sm:$0xf]
      %v810 = vld [vmem:[%s1 + $0x168] sm:$0xf]
      %v811 = vld [vmem:[%s1 + $0x16c] sm:$0xf]
      %v812 = vld [vmem:[%s1 + $0x170] sm:$0xf]
      %v813 = vld [vmem:[%s1 + $0x174] sm:$0xf]
      %v814 = vld [vmem:[%s1 + $0x178] sm:$0xf]
      %v815 = vld [vmem:[%s1 + $0x17c] sm:$0xf]
      %v816 = vld [vmem:[%s1 + $0x180] sm:$0xf]
      %v817 = vld [vmem:[%s1 + $0x184] sm:$0xf]
      %v818 = vld [vmem:[%s1 + $0x188] sm:$0xf]
      %v819 = vld [vmem:[%s1 + $0x18c] sm:$0xf]
      %v820 = vld [vmem:[%s1 + $0x190] sm:$0xf]
      %v821 = vld [vmem:[%s1 + $0x194] sm:$0xf]
      %v822 = vld [vmem:[%s1 + $0x198] sm:$0xf]
      %v823 = vld [vmem:[%s1 + $0x19c] sm:$0xf]
      %v824 = vld [vmem:[%s1 + $0x1a0] sm:$0xf]
      %v825 = vld [vmem:[%s1 + $0x1a4] sm:$0xf]
      %v826 = vld [vmem:[%s1 + $0x1a8] sm:$0xf]
      %v827 = vld [vmem:[%s1 + $0x1ac] sm:$0xf]
      %v828 = vld [vmem:[%s1 + $0x1b0] sm:$0xf]
      %v829 = vld [vmem:[%s1 + $0x1b4] sm:$0xf]
      %v830 = vld [vmem:[%s1 + $0x1b8] sm:$0xf]
      %v831 = vld [vmem:[%s1 + $0x1bc] sm:$0xf]
      %v832 = vld [vmem:[%s1 + $0x1c0] sm:$0xf]
      %v833 = vld [vmem:[%s1 + $0x1c4] sm:$0xf]
      %v834 = vld [vmem:[%s1 + $0x1c8] sm:$0xf]
      %v835 = vld [vmem:[%s1 + $0x1cc] sm:$0xf]
      %v836 = vld [vmem:[%s1 + $0x1d0] sm:$0xf]
      %v837 = vld [vmem:[%s1 + $0x1d4] sm:$0xf]
      %v838 = vld [vmem:[%s1 + $0x1d8] sm:$0xf]
      %v839 = vld [vmem:[%s1 + $0x1dc] sm:$0xf]
      %v840 = vld [vmem:[%s1 + $0x1e0] sm:$0xf]
      %v841 = vld [vmem:[%s1 + $0x1e4] sm:$0xf]
      %v842 = vld [vmem:[%s1 + $0x1e8] sm:$0xf]
      %v843 = vld [vmem:[%s1 + $0x1ec] sm:$0xf]
      %v844 = vld [vmem:[%s1 + $0x1f0] sm:$0xf]
      %v845 = vld [vmem:[%s1 + $0x1f4] sm:$0xf]
      %v846 = vld [vmem:[%s1 + $0x1f8] sm:$0xf]
      %v847 = vld [vmem:[%s1 + $0x1fc] sm:$0xf]
      %v848 = vld [vmem:[%s1 + $0x200] sm:$0xf]
      %v849 = vld [vmem:[%s1 + $0x204] sm:$0xf]
      %v850 = vld [vmem:[%s1 + $0x208] sm:$0xf]
      %v851 = vld [vmem:[%s1 + $0x20c] sm:$0xf]
      %v852 = vld [vmem:[%s1 + $0x210] sm:$0xf]
      %v853 = vld [vmem:[%s1 + $0x214] sm:$0xf]
      %v854 = vld [vmem:[%s1 + $0x218] sm:$0xf]
      %v855 = vld [vmem:[%s1 + $0x21c] sm:$0xf]
      %v856 = vld [vmem:[%s1 + $0x220] sm:$0xf]
      %v857 = vld [vmem:[%s1 + $0x224] sm:$0xf]
      %v858 = vld [vmem:[%s1 + $0x228] sm:$0xf]
      %v859 = vld [vmem:[%s1 + $0x22c] sm:$0xf]
      %v860 = vld [vmem:[%s1 + $0x230] sm:$0xf]
      %v861 = vld [vmem:[%s1 + $0x234] sm:$0xf]
      %v862 = vld [vmem:[%s1 + $0x238] sm:$0xf]
      %v863 = vld [vmem:[%s1 + $0x23c] sm:$0xf]
      %v864 = vpack.c.b16 %v306, %v304
      %v865 = vpack.c.b16 %v678, %v672
      %v866 = vpack.c.b16 %v679, %v673
      %v867 = vpack.c.b16 %v434, %v432
      %v868 = vpack.c.b16 %v680, %v674
      %v869 = vpack.c.b16 %v681, %v675
      %v870 = vpack.c.b16 %v562, %v560
      %v871 = vpack.c.b16 %v682, %v676
      %v872 = vpack.c.b16 %v683, %v677
      %v873 = vpack.c.b16 %v310, %v308
      %v874 = vpack.c.b16 %v690, %v684
      %v875 = vpack.c.b16 %v691, %v685
      %v876 = vpack.c.b16 %v438, %v436
      %v877 = vpack.c.b16 %v692, %v686
      %v878 = vpack.c.b16 %v693, %v687
      %v879 = vpack.c.b16 %v566, %v564
      %v880 = vpack.c.b16 %v694, %v688
      %v881 = vpack.c.b16 %v695, %v689
      %v882 = vpack.c.b16 %v314, %v312
      %v883 = vpack.c.b16 %v702, %v696
      %v884 = vpack.c.b16 %v703, %v697
      %v885 = vpack.c.b16 %v442, %v440
      %v886 = vpack.c.b16 %v704, %v698
      %v887 = vpack.c.b16 %v705, %v699
      %v888 = vpack.c.b16 %v570, %v568
      %v889 = vpack.c.b16 %v706, %v700
      %v890 = vpack.c.b16 %v707, %v701
      %v891 = vpack.c.b16 %v318, %v316
      %v892 = vpack.c.b16 %v714, %v708
      %v893 = vpack.c.b16 %v715, %v709
      %v894 = vpack.c.b16 %v446, %v444
      %v895 = vpack.c.b16 %v716, %v710
      %v896 = vpack.c.b16 %v717, %v711
      %v897 = vpack.c.b16 %v574, %v572
      %v898 = vpack.c.b16 %v718, %v712
      %v899 = vpack.c.b16 %v719, %v713
      %v1080 = vunpack.c.l.b16 %v720
      %v1081 = vunpack.c.l.b16 %v721
      %v1082 = vunpack.c.l.b16 %v722
      %v1083 = vunpack.c.l.b16 %v723
      %v1084 = vunpack.c.l.b16 %v724
      %v1085 = vunpack.c.l.b16 %v725
      %v1086 = vunpack.c.l.b16 %v726
      %v1087 = vunpack.c.l.b16 %v727
      %v1088 = vunpack.c.l.b16 %v728
      %v1089 = vunpack.c.l.b16 %v729
      %v1090 = vunpack.c.l.b16 %v730
      %v1091 = vunpack.c.l.b16 %v731
      %v1092 = vunpack.c.l.b16 %v732
      %v1093 = vunpack.c.l.b16 %v733
      %v1094 = vunpack.c.l.b16 %v734
      %v1095 = vunpack.c.l.b16 %v735
      %v1096 = vunpack.c.l.b16 %v736
      %v1097 = vunpack.c.l.b16 %v737
      %v1098 = vunpack.c.l.b16 %v738
      %v1099 = vunpack.c.l.b16 %v739
      %v1100 = vunpack.c.l.b16 %v740
      %v1101 = vunpack.c.l.b16 %v741
      %v1102 = vunpack.c.l.b16 %v742
      %v1103 = vunpack.c.l.b16 %v743
      %v1104 = vunpack.c.l.b16 %v744
      %v1105 = vunpack.c.l.b16 %v745
      %v1106 = vunpack.c.l.b16 %v746
      %v1107 = vunpack.c.l.b16 %v747
      %v1108 = vunpack.c.l.b16 %v748
      %v1109 = vunpack.c.l.b16 %v749
      %v1110 = vunpack.c.l.b16 %v750
      %v1111 = vunpack.c.l.b16 %v751
      %v1112 = vunpack.c.l.b16 %v752
      %v1113 = vunpack.c.l.b16 %v753
      %v1114 = vunpack.c.l.b16 %v754
      %v1115 = vunpack.c.l.b16 %v755
      %v1116 = vunpack.c.l.b16 %v756
      %v1117 = vunpack.c.l.b16 %v757
      %v1118 = vunpack.c.l.b16 %v758
      %v1119 = vunpack.c.l.b16 %v759
      %v1120 = vunpack.c.l.b16 %v760
      %v1121 = vunpack.c.l.b16 %v761
      %v1122 = vunpack.c.l.b16 %v762
      %v1123 = vunpack.c.l.b16 %v763
      %v1124 = vunpack.c.l.b16 %v764
      %v1125 = vunpack.c.l.b16 %v765
      %v1126 = vunpack.c.l.b16 %v766
      %v1127 = vunpack.c.l.b16 %v767
      %v1128 = vunpack.c.l.b16 %v768
      %v1129 = vunpack.c.l.b16 %v769
      %v1130 = vunpack.c.l.b16 %v770
      %v1131 = vunpack.c.l.b16 %v771
      %v1132 = vunpack.c.l.b16 %v772
      %v1133 = vunpack.c.l.b16 %v773
      %v1134 = vunpack.c.l.b16 %v774
      %v1135 = vunpack.c.l.b16 %v775
      %v1136 = vunpack.c.l.b16 %v776
      %v1137 = vunpack.c.l.b16 %v777
      %v1138 = vunpack.c.l.b16 %v778
      %v1139 = vunpack.c.l.b16 %v779
      %v1140 = vunpack.c.l.b16 %v780
      %v1141 = vunpack.c.l.b16 %v781
      %v1142 = vunpack.c.l.b16 %v782
      %v1143 = vunpack.c.l.b16 %v783
      %v1144 = vunpack.c.l.b16 %v784
      %v1145 = vunpack.c.l.b16 %v785
      %v1146 = vunpack.c.l.b16 %v786
      %v1147 = vunpack.c.l.b16 %v787
      %v1148 = vunpack.c.l.b16 %v788
      %v1149 = vunpack.c.l.b16 %v789
      %v1150 = vunpack.c.l.b16 %v790
      %v1151 = vunpack.c.l.b16 %v791
      %v1152 = vunpack.c.l.b16 %v792
      %v1153 = vunpack.c.l.b16 %v793
      %v1154 = vunpack.c.l.b16 %v794
      %v1155 = vunpack.c.l.b16 %v795
      %v1156 = vunpack.c.l.b16 %v796
      %v1157 = vunpack.c.l.b16 %v797
      %v1158 = vunpack.c.l.b16 %v798
      %v1159 = vunpack.c.l.b16 %v799
      %v1160 = vunpack.c.l.b16 %v800
      %v1161 = vunpack.c.l.b16 %v801
      %v1162 = vunpack.c.l.b16 %v802
      %v1163 = vunpack.c.l.b16 %v803
      %v1164 = vunpack.c.l.b16 %v804
      %v1165 = vunpack.c.l.b16 %v805
      %v1166 = vunpack.c.l.b16 %v806
      %v1167 = vunpack.c.l.b16 %v807
      %v1168 = vunpack.c.l.b16 %v808
      %v1169 = vunpack.c.l.b16 %v809
      %v1170 = vunpack.c.l.b16 %v810
      %v1171 = vunpack.c.l.b16 %v811
      %v1172 = vunpack.c.l.b16 %v812
      %v1173 = vunpack.c.l.b16 %v813
      %v1174 = vunpack.c.l.b16 %v814
      %v1175 = vunpack.c.l.b16 %v815
      %v1176 = vunpack.c.l.b16 %v816
      %v1177 = vunpack.c.l.b16 %v817
      %v1178 = vunpack.c.l.b16 %v818
      %v1179 = vunpack.c.l.b16 %v819
      %v1180 = vunpack.c.l.b16 %v820
      %v1181 = vunpack.c.l.b16 %v821
      %v1182 = vunpack.c.l.b16 %v822
      %v1183 = vunpack.c.l.b16 %v823
      %v1184 = vunpack.c.l.b16 %v824
      %v1185 = vunpack.c.l.b16 %v825
      %v1186 = vunpack.c.l.b16 %v826
      %v1187 = vunpack.c.l.b16 %v827
      %v1188 = vunpack.c.l.b16 %v828
      %v1189 = vunpack.c.l.b16 %v829
      %v1190 = vunpack.c.l.b16 %v830
      %v1191 = vunpack.c.l.b16 %v831
      %v1192 = vunpack.c.l.b16 %v832
      %v1193 = vunpack.c.l.b16 %v833
      %v1194 = vunpack.c.l.b16 %v834
      %v1195 = vunpack.c.l.b16 %v835
      %v1196 = vunpack.c.l.b16 %v836
      %v1197 = vunpack.c.l.b16 %v837
      %v1198 = vunpack.c.l.b16 %v838
      %v1199 = vunpack.c.l.b16 %v839
      %v1200 = vunpack.c.l.b16 %v840
      %v1201 = vunpack.c.l.b16 %v841
      %v1202 = vunpack.c.l.b16 %v842
      %v1203 = vunpack.c.l.b16 %v843
      %v1204 = vunpack.c.l.b16 %v844
      %v1205 = vunpack.c.l.b16 %v845
      %v1206 = vunpack.c.l.b16 %v846
      %v1207 = vunpack.c.l.b16 %v847
      %v1208 = vunpack.c.l.b16 %v848
      %v1209 = vunpack.c.l.b16 %v849
      %v1210 = vunpack.c.l.b16 %v850
      %v1211 = vunpack.c.l.b16 %v851
      %v1212 = vunpack.c.l.b16 %v852
      %v1213 = vunpack.c.l.b16 %v853
      %v1214 = vunpack.c.l.b16 %v854
      %v1215 = vunpack.c.l.b16 %v855
      %v1216 = vunpack.c.l.b16 %v856
      %v1217 = vunpack.c.l.b16 %v857
      %v1218 = vunpack.c.l.b16 %v858
      %v1219 = vunpack.c.l.b16 %v859
      %v1220 = vunpack.c.l.b16 %v860
      %v1221 = vunpack.c.l.b16 %v861
      %v1222 = vunpack.c.l.b16 %v862
      %v1223 = vunpack.c.l.b16 %v863
      %v1224 = vpack.c.b16 %v1081, %v1080
      %v1225 = vpack.c.b16 %v1083, %v1082
      %v1226 = vpack.c.b16 %v1085, %v1084
      %v1227 = vpack.c.b16 %v1087, %v1086
      %v1228 = vpack.c.b16 %v1089, %v1088
      %v1229 = vpack.c.b16 %v1091, %v1090
      %v1230 = vpack.c.b16 %v1093, %v1092
      %v1231 = vpack.c.b16 %v1095, %v1094
      %v1232 = vpack.c.b16 %v1097, %v1096
      %v1233 = vpack.c.b16 %v1099, %v1098
      %v1234 = vpack.c.b16 %v1101, %v1100
      %v1235 = vpack.c.b16 %v1103, %v1102
      %v1236 = vpack.c.b16 %v1105, %v1104
      %v1237 = vpack.c.b16 %v1107, %v1106
      %v1238 = vpack.c.b16 %v1109, %v1108
      %v1239 = vpack.c.b16 %v1111, %v1110
      %v1240 = vpack.c.b16 %v1113, %v1112
      %v1241 = vpack.c.b16 %v1115, %v1114
      %v1242 = vpack.c.b16 %v1117, %v1116
      %v1243 = vpack.c.b16 %v1119, %v1118
      %v1244 = vpack.c.b16 %v1121, %v1120
      %v1245 = vpack.c.b16 %v1123, %v1122
      %v1246 = vpack.c.b16 %v1125, %v1124
      %v1247 = vpack.c.b16 %v1127, %v1126
      %v1248 = vpack.c.b16 %v1129, %v1128
      %v1249 = vpack.c.b16 %v1131, %v1130
      %v1250 = vpack.c.b16 %v1133, %v1132
      %v1251 = vpack.c.b16 %v1135, %v1134
      %v1252 = vpack.c.b16 %v1137, %v1136
      %v1253 = vpack.c.b16 %v1139, %v1138
      %v1254 = vpack.c.b16 %v1141, %v1140
      %v1255 = vpack.c.b16 %v1143, %v1142
      %v1256 = vpack.c.b16 %v1145, %v1144
      %v1257 = vpack.c.b16 %v1147, %v1146
      %v1258 = vpack.c.b16 %v1149, %v1148
      %v1259 = vpack.c.b16 %v1151, %v1150
      %v1260 = vpack.c.b16 %v1153, %v1152
      %v1261 = vpack.c.b16 %v1155, %v1154
      %v1262 = vpack.c.b16 %v1157, %v1156
      %v1263 = vpack.c.b16 %v1159, %v1158
      %v1264 = vpack.c.b16 %v1161, %v1160
      %v1265 = vpack.c.b16 %v1163, %v1162
      %v1266 = vpack.c.b16 %v1165, %v1164
      %v1267 = vpack.c.b16 %v1167, %v1166
      %v1268 = vpack.c.b16 %v1169, %v1168
      %v1269 = vpack.c.b16 %v1171, %v1170
      %v1270 = vpack.c.b16 %v1173, %v1172
      %v1271 = vpack.c.b16 %v1175, %v1174
      %v1272 = vpack.c.b16 %v1177, %v1176
      %v1273 = vpack.c.b16 %v1179, %v1178
      %v1274 = vpack.c.b16 %v1181, %v1180
      %v1275 = vpack.c.b16 %v1183, %v1182
      %v1276 = vpack.c.b16 %v1185, %v1184
      %v1277 = vpack.c.b16 %v1187, %v1186
      %v1278 = vpack.c.b16 %v1189, %v1188
      %v1279 = vpack.c.b16 %v1191, %v1190
      %v1280 = vpack.c.b16 %v1193, %v1192
      %v1281 = vpack.c.b16 %v1195, %v1194
      %v1282 = vpack.c.b16 %v1197, %v1196
      %v1283 = vpack.c.b16 %v1199, %v1198
      %v1284 = vpack.c.b16 %v1201, %v1200
      %v1285 = vpack.c.b16 %v1203, %v1202
      %v1286 = vpack.c.b16 %v1205, %v1204
      %v1287 = vpack.c.b16 %v1207, %v1206
      %v1288 = vpack.c.b16 %v1209, %v1208
      %v1289 = vpack.c.b16 %v1211, %v1210
      %v1290 = vpack.c.b16 %v1213, %v1212
      %v1291 = vpack.c.b16 %v1215, %v1214
      %v1292 = vpack.c.b16 %v1217, %v1216
      %v1293 = vpack.c.b16 %v1219, %v1218
      %v1294 = vpack.c.b16 %v1221, %v1220
      %v1295 = vpack.c.b16 %v1223, %v1222
      %1368 = vmatpush.bf16.msra.mxu0 %v1231
      %1369 = vmatpush.bf16.msra.mxu0 %v1230
      %1370 = vmatpush.bf16.msra.mxu0 %v1229
      %1371 = vmatpush.bf16.msra.mxu0 %v1228
      %1372 = vmatpush.bf16.msra.mxu0 %v1227
      %1373 = vmatpush.bf16.msra.mxu0 %v1226
      %1374 = vmatpush.bf16.msra.mxu0 %v1225
      %1375 = vmatpush.bf16.msra.mxu0 %v1224
      %1376 = vmatmul.bf16.gmra.mxu0 %v864
      %v1377 = vpop.f32.mrf.mxu0
      %v1378 = vadd.f32 0.0, %v1377
      %v1379 = vpop.f32.mrf.mxu0
      %v1380 = vadd.f32 0.0, %v1379
      %1381 = vmatmul.bf16.gmra.mxu0 %v873
      %v1382 = vpop.f32.mrf.mxu0
      %v1383 = vadd.f32 0.0, %v1382
      %v1384 = vpop.f32.mrf.mxu0
      %v1385 = vadd.f32 0.0, %v1384
      %1386 = vmatmul.bf16.gmra.mxu0 %v882
      %v1387 = vpop.f32.mrf.mxu0
      %v1388 = vadd.f32 0.0, %v1387
      %v1389 = vpop.f32.mrf.mxu0
      %v1390 = vadd.f32 0.0, %v1389
      %1391 = vmatmul.bf16.gmra.mxu0 %v891
      %v1392 = vpop.f32.mrf.mxu0
      %v1393 = vadd.f32 0.0, %v1392
      %v1394 = vpop.f32.mrf.mxu0
      %v1395 = vadd.f32 0.0, %v1394
      %1396 = vdwg.mxu0
      %1397 = vmatpush.bf16.msra.mxu0 %v1239
      %1398 = vmatpush.bf16.msra.mxu0 %v1238
      %1399 = vmatpush.bf16.msra.mxu0 %v1237
      %1400 = vmatpush.bf16.msra.mxu0 %v1236
      %1401 = vmatpush.bf16.msra.mxu0 %v1235
      %1402 = vmatpush.bf16.msra.mxu0 %v1234
      %1403 = vmatpush.bf16.msra.mxu0 %v1233
      %1404 = vmatpush.bf16.msra.mxu0 %v1232
      %1405 = vmatmul.bf16.gmra.mxu0 %v865
      %v1406 = vpop.f32.mrf.mxu0
      %v1407 = vadd.f32 %v1378, %v1406
      %v1408 = vpop.f32.mrf.mxu0
      %v1409 = vadd.f32 %v1380, %v1408
      %1410 = vmatmul.bf16.gmra.mxu0 %v874
      %v1411 = vpop.f32.mrf.mxu0
      %v1412 = vadd.f32 %v1383, %v1411
      %v1413 = vpop.f32.mrf.mxu0
      %v1414 = vadd.f32 %v1385, %v1413
      %1415 = vmatmul.bf16.gmra.mxu0 %v883
      %v1416 = vpop.f32.mrf.mxu0
      %v1417 = vadd.f32 %v1388, %v1416
      %v1418 = vpop.f32.mrf.mxu0
      %v1419 = vadd.f32 %v1390, %v1418
      %1420 = vmatmul.bf16.gmra.mxu0 %v892
      %v1421 = vpop.f32.mrf.mxu0
      %v1422 = vadd.f32 %v1393, %v1421
      %v1423 = vpop.f32.mrf.mxu0
      %v1424 = vadd.f32 %v1395, %v1423
      %1425 = vdwg.mxu0
      %1426 = vmatpush.bf16.msra.mxu0 %v1247
      %1427 = vmatpush.bf16.msra.mxu0 %v1246
      %1428 = vmatpush.bf16.msra.mxu0 %v1245
      %1429 = vmatpush.bf16.msra.mxu0 %v1244
      %1430 = vmatpush.bf16.msra.mxu0 %v1243
      %1431 = vmatpush.bf16.msra.mxu0 %v1242
      %1432 = vmatpush.bf16.msra.mxu0 %v1241
      %1433 = vmatpush.bf16.msra.mxu0 %v1240
      %1434 = vmatmul.bf16.gmra.mxu0 %v866
      %v1435 = vpop.f32.mrf.mxu0
      %v1436 = vadd.f32 %v1407, %v1435
      %v1437 = vpop.f32.mrf.mxu0
      %v1438 = vadd.f32 %v1409, %v1437
      %1439 = vmatmul.bf16.gmra.mxu0 %v875
      %v1440 = vpop.f32.mrf.mxu0
      %v1441 = vadd.f32 %v1412, %v1440
      %v1442 = vpop.f32.mrf.mxu0
      %v1443 = vadd.f32 %v1414, %v1442
      %1444 = vmatmul.bf16.gmra.mxu0 %v884
      %v1445 = vpop.f32.mrf.mxu0
      %v1446 = vadd.f32 %v1417, %v1445
      %v1447 = vpop.f32.mrf.mxu0
      %v1448 = vadd.f32 %v1419, %v1447
      %1449 = vmatmul.bf16.gmra.mxu0 %v893
      %v1450 = vpop.f32.mrf.mxu0
      %v1451 = vadd.f32 %v1422, %v1450
      %v1452 = vpop.f32.mrf.mxu0
      %v1453 = vadd.f32 %v1424, %v1452
      %1454 = vdwg.mxu0
      %1455 = vmatpush.bf16.msra.mxu0 %v1255
      %1456 = vmatpush.bf16.msra.mxu0 %v1254
      %1457 = vmatpush.bf16.msra.mxu0 %v1253
      %1458 = vmatpush.bf16.msra.mxu0 %v1252
      %1459 = vmatpush.bf16.msra.mxu0 %v1251
      %1460 = vmatpush.bf16.msra.mxu0 %v1250
      %1461 = vmatpush.bf16.msra.mxu0 %v1249
      %1462 = vmatpush.bf16.msra.mxu0 %v1248
      %1463 = vmatmul.bf16.gmra.mxu0 %v867
      %v1464 = vpop.f32.mrf.mxu0
      %v1465 = vadd.f32 %v1436, %v1464
      %v1466 = vpop.f32.mrf.mxu0
      %v1467 = vadd.f32 %v1438, %v1466
      %1468 = vmatmul.bf16.gmra.mxu0 %v876
      %v1469 = vpop.f32.mrf.mxu0
      %v1470 = vadd.f32 %v1441, %v1469
      %v1471 = vpop.f32.mrf.mxu0
      %v1472 = vadd.f32 %v1443, %v1471
      %1473 = vmatmul.bf16.gmra.mxu0 %v885
      %v1474 = vpop.f32.mrf.mxu0
      %v1475 = vadd.f32 %v1446, %v1474
      %v1476 = vpop.f32.mrf.mxu0
      %v1477 = vadd.f32 %v1448, %v1476
      %1478 = vmatmul.bf16.gmra.mxu0 %v894
      %v1479 = vpop.f32.mrf.mxu0
      %v1480 = vadd.f32 %v1451, %v1479
      %v1481 = vpop.f32.mrf.mxu0
      %v1482 = vadd.f32 %v1453, %v1481
      %1483 = vdwg.mxu0
      %1484 = vmatpush.bf16.msra.mxu0 %v1263
      %1485 = vmatpush.bf16.msra.mxu0 %v1262
      %1486 = vmatpush.bf16.msra.mxu0 %v1261
      %1487 = vmatpush.bf16.msra.mxu0 %v1260
      %1488 = vmatpush.bf16.msra.mxu0 %v1259
      %1489 = vmatpush.bf16.msra.mxu0 %v1258
      %1490 = vmatpush.bf16.msra.mxu0 %v1257
      %1491 = vmatpush.bf16.msra.mxu0 %v1256
      %1492 = vmatmul.bf16.gmra.mxu0 %v868
      %v1493 = vpop.f32.mrf.mxu0
      %v1494 = vadd.f32 %v1465, %v1493
      %v1495 = vpop.f32.mrf.mxu0
      %v1496 = vadd.f32 %v1467, %v1495
      %1497 = vmatmul.bf16.gmra.mxu0 %v877
      %v1498 = vpop.f32.mrf.mxu0
      %v1499 = vadd.f32 %v1470, %v1498
      %v1500 = vpop.f32.mrf.mxu0
      %v1501 = vadd.f32 %v1472, %v1500
      %1502 = vmatmul.bf16.gmra.mxu0 %v886
      %v1503 = vpop.f32.mrf.mxu0
      %v1504 = vadd.f32 %v1475, %v1503
      %v1505 = vpop.f32.mrf.mxu0
      %v1506 = vadd.f32 %v1477, %v1505
      %1507 = vmatmul.bf16.gmra.mxu0 %v895
      %v1508 = vpop.f32.mrf.mxu0
      %v1509 = vadd.f32 %v1480, %v1508
      %v1510 = vpop.f32.mrf.mxu0
      %v1511 = vadd.f32 %v1482, %v1510
      %1512 = vdwg.mxu0
      %1513 = vmatpush.bf16.msra.mxu0 %v1271
      %1514 = vmatpush.bf16.msra.mxu0 %v1270
      %1515 = vmatpush.bf16.msra.mxu0 %v1269
      %1516 = vmatpush.bf16.msra.mxu0 %v1268
      %1517 = vmatpush.bf16.msra.mxu0 %v1267
      %1518 = vmatpush.bf16.msra.mxu0 %v1266
      %1519 = vmatpush.bf16.msra.mxu0 %v1265
      %1520 = vmatpush.bf16.msra.mxu0 %v1264
      %1521 = vmatmul.bf16.gmra.mxu0 %v869
      %v1522 = vpop.f32.mrf.mxu0
      %v1523 = vadd.f32 %v1494, %v1522
      %v1524 = vpop.f32.mrf.mxu0
      %v1525 = vadd.f32 %v1496, %v1524
      %1526 = vmatmul.bf16.gmra.mxu0 %v878
      %v1527 = vpop.f32.mrf.mxu0
      %v1528 = vadd.f32 %v1499, %v1527
      %v1529 = vpop.f32.mrf.mxu0
      %v1530 = vadd.f32 %v1501, %v1529
      %1531 = vmatmul.bf16.gmra.mxu0 %v887
      %v1532 = vpop.f32.mrf.mxu0
      %v1533 = vadd.f32 %v1504, %v1532
      %v1534 = vpop.f32.mrf.mxu0
      %v1535 = vadd.f32 %v1506, %v1534
      %1536 = vmatmul.bf16.gmra.mxu0 %v896
      %v1537 = vpop.f32.mrf.mxu0
      %v1538 = vadd.f32 %v1509, %v1537
      %v1539 = vpop.f32.mrf.mxu0
      %v1540 = vadd.f32 %v1511, %v1539
      %1541 = vdwg.mxu0
      %1542 = vmatpush.bf16.msra.mxu0 %v1279
      %1543 = vmatpush.bf16.msra.mxu0 %v1278
      %1544 = vmatpush.bf16.msra.mxu0 %v1277
      %1545 = vmatpush.bf16.msra.mxu0 %v1276
      %1546 = vmatpush.bf16.msra.mxu0 %v1275
      %1547 = vmatpush.bf16.msra.mxu0 %v1274
      %1548 = vmatpush.bf16.msra.mxu0 %v1273
      %1549 = vmatpush.bf16.msra.mxu0 %v1272
      %1550 = vmatmul.bf16.gmra.mxu0 %v870
      %v1551 = vpop.f32.mrf.mxu0
      %v1552 = vadd.f32 %v1523, %v1551
      %v1553 = vpop.f32.mrf.mxu0
      %v1554 = vadd.f32 %v1525, %v1553
      %1555 = vmatmul.bf16.gmra.mxu0 %v879
      %v1556 = vpop.f32.mrf.mxu0
      %v1557 = vadd.f32 %v1528, %v1556
      %v1558 = vpop.f32.mrf.mxu0
      %v1559 = vadd.f32 %v1530, %v1558
      %1560 = vmatmul.bf16.gmra.mxu0 %v888
      %v1561 = vpop.f32.mrf.mxu0
      %v1562 = vadd.f32 %v1533, %v1561
      %v1563 = vpop.f32.mrf.mxu0
      %v1564 = vadd.f32 %v1535, %v1563
      %1565 = vmatmul.bf16.gmra.mxu0 %v897
      %v1566 = vpop.f32.mrf.mxu0
      %v1567 = vadd.f32 %v1538, %v1566
      %v1568 = vpop.f32.mrf.mxu0
      %v1569 = vadd.f32 %v1540, %v1568
      %1570 = vdwg.mxu0
      %1571 = vmatpush.bf16.msra.mxu0 %v1287
      %1572 = vmatpush.bf16.msra.mxu0 %v1286
      %1573 = vmatpush.bf16.msra.mxu0 %v1285
      %1574 = vmatpush.bf16.msra.mxu0 %v1284
      %1575 = vmatpush.bf16.msra.mxu0 %v1283
      %1576 = vmatpush.bf16.msra.mxu0 %v1282
      %1577 = vmatpush.bf16.msra.mxu0 %v1281
      %1578 = vmatpush.bf16.msra.mxu0 %v1280
      %1579 = vmatmul.bf16.gmra.mxu0 %v871
      %v1580 = vpop.f32.mrf.mxu0
      %v1581 = vadd.f32 %v1552, %v1580
      %v1582 = vpop.f32.mrf.mxu0
      %v1583 = vadd.f32 %v1554, %v1582
      %1584 = vmatmul.bf16.gmra.mxu0 %v880
      %v1585 = vpop.f32.mrf.mxu0
      %v1586 = vadd.f32 %v1557, %v1585
      %v1587 = vpop.f32.mrf.mxu0
      %v1588 = vadd.f32 %v1559, %v1587
      %1589 = vmatmul.bf16.gmra.mxu0 %v889
      %v1590 = vpop.f32.mrf.mxu0
      %v1591 = vadd.f32 %v1562, %v1590
      %v1592 = vpop.f32.mrf.mxu0
      %v1593 = vadd.f32 %v1564, %v1592
      %1594 = vmatmul.bf16.gmra.mxu0 %v898
      %v1595 = vpop.f32.mrf.mxu0
      %v1596 = vadd.f32 %v1567, %v1595
      %v1597 = vpop.f32.mrf.mxu0
      %v1598 = vadd.f32 %v1569, %v1597
      %1599 = vdwg.mxu0
      %1600 = vmatpush.bf16.msra.mxu0 %v1295
      %1601 = vmatpush.bf16.msra.mxu0 %v1294
      %1602 = vmatpush.bf16.msra.mxu0 %v1293
      %1603 = vmatpush.bf16.msra.mxu0 %v1292
      %1604 = vmatpush.bf16.msra.mxu0 %v1291
      %1605 = vmatpush.bf16.msra.mxu0 %v1290
      %1606 = vmatpush.bf16.msra.mxu0 %v1289
      %1607 = vmatpush.bf16.msra.mxu0 %v1288
      %1608 = vmatmul.bf16.gmra.mxu0 %v872
      %v1609 = vpop.f32.mrf.mxu0
      %v1610 = vadd.f32 %v1581, %v1609
      %v1611 = vpop.f32.mrf.mxu0
      %v1612 = vadd.f32 %v1583, %v1611
      %1613 = vmatmul.bf16.gmra.mxu0 %v881
      %v1614 = vpop.f32.mrf.mxu0
      %v1615 = vadd.f32 %v1586, %v1614
      %v1616 = vpop.f32.mrf.mxu0
      %v1617 = vadd.f32 %v1588, %v1616
      %1618 = vmatmul.bf16.gmra.mxu0 %v890
      %v1619 = vpop.f32.mrf.mxu0
      %v1620 = vadd.f32 %v1591, %v1619
      %v1621 = vpop.f32.mrf.mxu0
      %v1622 = vadd.f32 %v1593, %v1621
      %1623 = vmatmul.bf16.gmra.mxu0 %v899
      %v1624 = vpop.f32.mrf.mxu0
      %v1625 = vadd.f32 %v1596, %v1624
      %v1626 = vpop.f32.mrf.mxu0
      %v1627 = vadd.f32 %v1598, %v1626
      %1628 = vdwg.mxu0
      %v1629 = vpack.c.bf16 %v1610, %v1610
      %v1630 = vpack.c.bf16 %v1612, %v1612
      %v1631 = vpack.c.bf16 %v1615, %v1615
      %v1632 = vpack.c.bf16 %v1617, %v1617
      %v1633 = vpack.c.bf16 %v1620, %v1620
      %v1634 = vpack.c.bf16 %v1622, %v1622
      %v1635 = vpack.c.bf16 %v1625, %v1625
      %v1636 = vpack.c.bf16 %v1627, %v1627
      %1637 = vst [vmem:[%s196] sm:$0xf] %v1629
      %1638 = vst [vmem:[%s196 + $0x4] sm:$0xf] %v1630
      %1639 = vst [vmem:[%s196 + $0x8] sm:$0xf] %v1631
      %1640 = vst [vmem:[%s196 + $0xc] sm:$0xf] %v1632
      %1641 = vst [vmem:[%s196 + $0x10] sm:$0xf] %v1633
      %1642 = vst [vmem:[%s196 + $0x14] sm:$0xf] %v1634
      %1643 = vst [vmem:[%s196 + $0x18] sm:$0xf] %v1635
      %1644 = vst [vmem:[%s196 + $0x1c] sm:$0xf] %v1636
      %v1645 = vadd.f32 %v1610, %v1612
      %v1646 = vadd.f32 %v1645, %v1615
      %v1647 = vadd.f32 %v1646, %v1617
      %v1648 = vadd.f32 %v1647, %v1620
      %v1649 = vadd.f32 %v1648, %v1622
      %v1650 = vadd.f32 %v1649, %v1625
      %v1651 = vadd.f32 %v1650, %v1627
      %v1652 = vrot.slane %v1651, 4
      %v1653 = vadd.f32 %v1651, %v1652
      %v1654 = vrot.slane %v1653, 2
      %v1655 = vadd.f32 %v1653, %v1654
      %v1656 = vrot.slane %v1655, 1
      %v1657 = vadd.f32 %v1655, %v1656
      %v1658 = vmul.f32 %v1610, %v1610
      %v1659 = vmul.f32 %v1612, %v1612
      %v1660 = vmul.f32 %v1615, %v1615
      %v1661 = vmul.f32 %v1617, %v1617
      %v1662 = vmul.f32 %v1620, %v1620
      %v1663 = vmul.f32 %v1622, %v1622
      %v1664 = vmul.f32 %v1625, %v1625
      %v1665 = vmul.f32 %v1627, %v1627
      %v1666 = vadd.f32 %v1658, %v1659
      %v1667 = vadd.f32 %v1666, %v1660
      %v1668 = vadd.f32 %v1667, %v1661
      %v1669 = vadd.f32 %v1668, %v1662
      %v1670 = vadd.f32 %v1669, %v1663
      %v1671 = vadd.f32 %v1670, %v1664
      %v1672 = vadd.f32 %v1671, %v1665
      %v1673 = vrot.slane %v1672, 4
      %v1674 = vadd.f32 %v1672, %v1673
      %v1675 = vrot.slane %v1674, 2
      %v1676 = vadd.f32 %v1674, %v1675
      %v1677 = vrot.slane %v1676, 1
      %v1678 = vadd.f32 %v1676, %v1677
      %vm1679 = vcmask 1040384
      %v1680 = vsel %vm1679, %v1657, %v1678
      %1681 = vst [vmem:[%s202] sm:$0x3] %v1680
      %s1682 = sadd.s32 %s19, %s20
      %p1683 = scmp.lt.s32.totalorder %s1682, 1
      %s1684 = scalar_select %p1683, %s1682, 1
      %s1685 = smul.addr %s1684, 8
      %s1686 = smul.addr %s1685, 4
      %s1687 = scalar_lea.vmem %s2, %s1686
      %s1688 = sadd.s32 %s19, %s20
      %p1689 = scmp.lt.s32.totalorder %s1688, 1
      %s1690 = scalar_select %p1689, %s1688, 1
      %s1691 = smul.addr %s1690, 2
      %s1692 = scalar_lea.vmem %s3, %s1691
      // Predicated region
      $region29: #{basic_block_forward.7} parent=27 // pred_check
        %p1693 = pneg %p94
      $region30: #{basic_block_forward.7} parent=27 // pred_check_branch
        %1695 = sbr.rel (%p1693) target = $region32
      $region31: #{basic_block_forward.7} parent=27 // pred_region
        %s1696 = sadd.s32 %s19, %s20
      $region32: #{basic_block_forward.7} parent=27 // pred_fallthru
        _
      // Predicated region
      $region33: #{basic_block_forward.7} parent=27 // pred_check
        %p1697 = pneg %p122
      $region34: #{basic_block_forward.7} parent=27 // pred_check_branch
        %1699 = sbr.rel (%p1697) target = $region36
      $region35: #{basic_block_forward.7} parent=27 // pred_region
        %s1700 = sadd.s32 %s19, %s20
      $region36: #{basic_block_forward.7} parent=27 // pred_fallthru
        _
    $region28: #{basic_block_forward.7} parent=5 // pred_fallthru
      _
    %p1701 = scmp.le.s32.totalorder 2, %s10
    // Predicated region
    $region37: #{basic_block_forward.7} parent=5 // pred_check
      %p1702 = pneg %p1701
    $region38: #{basic_block_forward.7} parent=5 // pred_check_branch
      %1704 = sbr.rel (%p1702) target = $region40
    $region39: #{basic_block_forward.7} parent=5 // pred_region
      %s1705 = ssub.s32 %s10, 2
      // Predicated region
      $region41: #{basic_block_forward.7} parent=39 // pred_check
        %p1706 = pneg %p100
      $region42: #{basic_block_forward.7} parent=39 // pred_check_branch
        %1708 = sbr.rel (%p1706) target = $region44
      $region43: #{basic_block_forward.7} parent=39 // pred_region
        %s1709 = sadd.s32 %s21, %s22
        %p1710 = scmp.lt.s32.totalorder %s1709, 1
        %s1711 = scalar_select %p1710, %s1709, 1
        %s1712 = smul.addr %s1711, 8
        %s1713 = smul.addr %s1712, 4
        %s1714 = scalar_lea.vmem %s2, %s1713
      $region44: #{basic_block_forward.7} parent=39 // pred_fallthru
        _
      // Predicated region
      $region45: #{basic_block_forward.7} parent=39 // pred_check
        %p1715 = pneg %p128
      $region46: #{basic_block_forward.7} parent=39 // pred_check_branch
        %1717 = sbr.rel (%p1715) target = $region48
      $region47: #{basic_block_forward.7} parent=39 // pred_region
        %s1718 = sadd.s32 %s21, %s22
        %p1719 = scmp.lt.s32.totalorder %s1718, 1
        %s1720 = scalar_select %p1719, %s1718, 1
        %s1721 = smul.addr %s1720, 2
        %s1722 = scalar_lea.vmem %s3, %s1721
      $region48: #{basic_block_forward.7} parent=39 // pred_fallthru
        _
    $region40: #{basic_block_forward.7} parent=5 // pred_fallthru
      _
  $region6: #{basic_block_forward.7} parent=0 // loop_footer
    %s14 = sadd.s32 1, %s10
  $region7: #{basic_block_forward.7} parent=0 // loop_footer_branch
    %9 = sbr.rel target = $region3
  $region8: #{basic_block_forward.7} parent=0 // loop_exit
    _

</llo_original>
